<compile_context>
chip_gen: v7x
topology: tpu7x:2x2x1
jax: 0.10.0
libtpu: 0.0.40
codegen_flags: <defaults>
</compile_context>

<pallas_src>
import functools

import jax
import jax.numpy as jnp
from jax.experimental import pallas as pl
from jax.experimental.pallas import tpu as pltpu

LANES = 128
MAX_SUB = 32  # sublane rows per grid step -> up to 32*128 = 4096 boxes/step


def _box_corners(xc, yc, w, h, ang):
    """4 CCW corners of a rotated box; each coordinate is a (SUB, 128) array."""
    c = jnp.cos(ang)
    s = jnp.sin(ang)
    hw = 0.5 * w
    hh = 0.5 * h
    corners = []
    for sx, sy in ((-1.0, -1.0), (1.0, -1.0), (1.0, 1.0), (-1.0, 1.0)):
        lx = sx * hw
        ly = sy * hh
        corners.append((xc + lx * c - ly * s, yc + lx * s + ly * c))
    return corners


def _clip_edges(poly):
    """Precompute (ex, ey, cross) per CCW edge of a quad (hoisted constants)."""
    edges = []
    for i in range(4):
        qx, qy = poly[i]
        rx, ry = poly[(i + 1) % 4]
        ex = rx - qx
        ey = ry - qy
        cr = ex * qy - ey * qx  # constant cross term of the half-plane test
        edges.append((ex, ey, cr))
    return edges


def _edge_contrib(A, B, clip_edges, shrink):
    """Green's-theorem contribution of segment A->B clipped to convex CCW poly.

    clip_edges: precomputed (ex, ey, cross) per edge of the clip polygon.
    """
    ax, ay = A
    bx, by = B
    dx = bx - ax
    dy = by - ay
    t_lo = jnp.zeros_like(ax)
    t_hi = jnp.ones_like(ax)
    valid = jnp.ones_like(ax, dtype=jnp.bool_)
    tiny = 1e-12
    for ex, ey, cr in clip_edges:
        # half-plane: cross(edge, X - q) >= shrink ; f(t) = c0 + t * d
        c0 = ex * ay - ey * ax - cr - shrink
        d = ex * dy - ey * dx
        denom = jnp.where(jnp.abs(d) < tiny, tiny, d)
        # divide -> EUP approx reciprocal (keeps the VALU slot free)
        t_cross = -c0 * pl.reciprocal(denom, approx=True)
        t_lo = jnp.where(d > tiny, jnp.maximum(t_lo, t_cross), t_lo)
        t_hi = jnp.where(d < -tiny, jnp.minimum(t_hi, t_cross), t_hi)
        valid = jnp.logical_and(valid, jnp.logical_or(jnp.abs(d) > tiny, c0 >= 0.0))
    has = jnp.logical_and(valid, t_hi > t_lo)
    x1 = ax + t_lo * dx
    y1 = ay + t_lo * dy
    x2 = ax + t_hi * dx
    y2 = ay + t_hi * dy
    contrib = 0.5 * (x1 * y2 - x2 * y1)
    return jnp.where(has, contrib, jnp.zeros_like(contrib))


def _intersect_area(poly_p, poly_q):
    # TODO(synk): tiny/shrink thresholds are absolute; extreme box scales may
    # need per-box normalization (kept identical to the validated reference).
    edges_q = _clip_edges(poly_q)
    edges_p = _clip_edges(poly_p)
    acc = jnp.zeros_like(poly_p[0][0])
    # edges of P clipped to Q (no shrink)
    for i in range(4):
        acc = acc + _edge_contrib(poly_p[i], poly_p[(i + 1) % 4], edges_q, 0.0)
    # edges of Q clipped to P (tiny shrink so coincident edges aren't double-counted)
    for i in range(4):
        acc = acc + _edge_contrib(poly_q[i], poly_q[(i + 1) % 4], edges_p, 1e-6)
    return jnp.maximum(acc, 0.0)


def _rotated_iou_loss_kernel(pred_ref, target_ref, out_ref, *, linear, eps):
    # pred_ref / target_ref: (5, SUB, 128) VMEM blocks; out_ref: (SUB, 128)
    xp = pred_ref[0]
    yp = pred_ref[1]
    wp = pred_ref[2]
    hp = pred_ref[3]
    ap = pred_ref[4]
    xt = target_ref[0]
    yt = target_ref[1]
    wt = target_ref[2]
    ht = target_ref[3]
    at = target_ref[4]

    poly_p = _box_corners(xp, yp, wp, hp, ap)
    poly_t = _box_corners(xt, yt, wt, ht, at)

    inter = _intersect_area(poly_p, poly_t)
    area_p = wp * hp
    area_t = wt * ht
    union = jnp.maximum(area_p + area_t - inter, 1e-12)
    ious = jnp.maximum(inter * pl.reciprocal(union, approx=True), eps)  # .clamp(min=eps)

    if linear:
        loss = 1.0 - ious
    else:
        loss = -jnp.log(ious)
    out_ref[...] = loss


def _iou_loss_pallas(pred, target, linear, eps):
    """Per-box rotated-IoU loss; pred/target (n, 5) float32 -> (n,) float32."""
    n = pred.shape[0]
    m = max(1, (n + LANES - 1) // LANES)          # 128-lane rows needed
    if m <= MAX_SUB:
        sub = m                                   # block == full sublane extent
        m_pad = m
    else:
        sub = MAX_SUB                             # multiple of 8 -> dense tiles
        m_pad = ((m + sub - 1) // sub) * sub
    n_pad = m_pad * LANES

    def prep(x):
        x = jnp.pad(x, ((0, n_pad - n), (0, 0)))
        x = jnp.transpose(x)                      # (5, n_pad)
        return x.reshape(5, m_pad, LANES)         # boxes dense along (sublane, lane)

    pred_t = prep(pred)
    target_t = prep(target)

    kernel = functools.partial(_rotated_iou_loss_kernel, linear=linear, eps=eps)
    out = pl.pallas_call(
        kernel,
        out_shape=jax.ShapeDtypeStruct((m_pad, LANES), jnp.float32),
        grid=(m_pad // sub,),
        in_specs=[
            pl.BlockSpec((5, sub, LANES), lambda i: (0, i, 0)),
            pl.BlockSpec((5, sub, LANES), lambda i: (0, i, 0)),
        ],
        out_specs=pl.BlockSpec((sub, LANES), lambda i: (i, 0)),
        compiler_params=pltpu.CompilerParams(dimension_semantics=("parallel",)),
    )(pred_t, target_t)
    return out.reshape(-1)[:n]


class RotatedIoULoss:
    """JAX/Pallas port of mmdet's RotatedIoULoss forward (iou='piou')."""

    def __init__(self, linear=False, eps=1e-6, reduction="mean",
                 loss_weight=1.0, iou="piou"):
        self.linear = linear
        self.eps = eps
        self.reduction = reduction
        self.loss_weight = loss_weight
        self.iou = iou

    def __call__(self, pred, target, weight=None, avg_factor=None,
                 reduction_override=None):
        pred = jnp.asarray(pred, jnp.float32)
        target = jnp.asarray(target, jnp.float32)
        assert reduction_override in (None, "none", "mean", "sum")
        reduction = reduction_override if reduction_override else self.reduction

        if self.iou != "piou":
            # TODO(synk): iou='iou'/'giou' branches call external per-box Python
            # routines; only the default 'piou' path is implemented in Pallas.
            raise NotImplementedError

        w = w_red = None
        if weight is not None:
            w = jnp.asarray(weight, jnp.float32)
            if w.ndim > 1:
                assert w.shape == pred.shape
                w_red = w.mean(-1)
            else:
                w_red = w

        loss = _iou_loss_pallas(pred, target, self.linear, self.eps)

        if w_red is not None:
            loss = loss * w_red

        if reduction == "mean":
            if avg_factor is not None:
                out = loss.sum() / avg_factor
            else:
                out = loss.mean()
        elif reduction == "sum":
            out = loss.sum()
        else:  # 'none'
            out = loss
        out = self.loss_weight * out

        if w is not None:
            # torch early return: if not any(weight > 0): return (pred*weight).sum()
            w_full = w if w.shape == pred.shape else w[:, None]
            fallback = (pred * w_full).sum()
            any_pos = jnp.any(w > 0)
            if reduction != "none":
                # traced select (jit-compatible, no host sync)
                out = jnp.where(any_pos, out, fallback)
            else:
                # TODO(synk): shape-changing early return not expressible under
                # jit when reduction='none'; use concrete check when available.
                try:
                    if not bool(any_pos):
                        return fallback
                except Exception:
                    pass
        return out


if __name__ == "__main__":
    key = jax.random.PRNGKey(0)
    k1, k2, k3, k4, k5, k6 = jax.random.split(key, 6)
    n = 8
    # predicted boxes (x, y, w, h, angle)
    ctr_p = jax.random.uniform(k1, (n, 2), minval=0.0, maxval=10.0)
    wh_p = jax.random.uniform(k2, (n, 2), minval=1.0, maxval=5.0)
    ang_p = jax.random.uniform(k3, (n, 1), minval=-1.5, maxval=1.5)
    pred = jnp.concatenate([ctr_p, wh_p, ang_p], axis=-1)
    # target boxes = perturbed predictions (so IoUs are non-trivial)
    ctr_t = ctr_p + jax.random.uniform(k4, (n, 2), minval=-0.5, maxval=0.5)
    wh_t = wh_p * jax.random.uniform(k5, (n, 2), minval=0.8, maxval=1.2)
    ang_t = ang_p + jax.random.uniform(k6, (n, 1), minval=-0.2, maxval=0.2)
    target = jnp.concatenate([ctr_t, wh_t, ang_t], axis=-1)

    loss_mod = RotatedIoULoss(linear=False, eps=1e-6, reduction="mean",
                              loss_weight=1.0, iou="piou")
    loss = loss_mod(pred, target)
    jax.block_until_ready(loss)
    print("KERNEL_OK")
</pallas_src>

<mosaic_0001>
module attributes {stable_mosaic.version = 11 : i64} {
  func.func @_rotated_iou_loss_kernel(%arg0: i32, %arg1: memref<5x1x128xf32, #tpu.memory_space<vmem>>, %arg2: memref<5x1x128xf32, #tpu.memory_space<vmem>>, %arg3: memref<1x128xf32, #tpu.memory_space<vmem>>) attributes {dimension_semantics = [#tpu.dimension_semantics<parallel>], iteration_bounds = array<i64: 1>, scalar_prefetch = 0 : i64, scratch_operands = 0 : i64, tpu.core_type = #tpu.core_type<tc>, window_params = [{transform_indices = @transform_0, window_bounds = array<i64: 5, 1, 128>}, {transform_indices = @transform_1, window_bounds = array<i64: 5, 1, 128>}, {transform_indices = @transform_2, window_bounds = array<i64: 1, 128>}]} {
    %c0 = arith.constant 0 : index
    %c0_0 = arith.constant 0 : index
    %c0_1 = arith.constant 0 : index
    %0 = vector.load %arg1[%c0, %c0_0, %c0_1] : memref<5x1x128xf32, #tpu.memory_space<vmem>>, vector<1x1x128xf32>
    %1 = vector.shape_cast %0 : vector<1x1x128xf32> to vector<1x128xf32>
    %c1 = arith.constant 1 : index
    %c0_2 = arith.constant 0 : index
    %c0_3 = arith.constant 0 : index
    %2 = vector.load %arg1[%c1, %c0_2, %c0_3] : memref<5x1x128xf32, #tpu.memory_space<vmem>>, vector<1x1x128xf32>
    %3 = vector.shape_cast %2 : vector<1x1x128xf32> to vector<1x128xf32>
    %c2 = arith.constant 2 : index
    %c0_4 = arith.constant 0 : index
    %c0_5 = arith.constant 0 : index
    %4 = vector.load %arg1[%c2, %c0_4, %c0_5] : memref<5x1x128xf32, #tpu.memory_space<vmem>>, vector<1x1x128xf32>
    %5 = vector.shape_cast %4 : vector<1x1x128xf32> to vector<1x128xf32>
    %c3 = arith.constant 3 : index
    %c0_6 = arith.constant 0 : index
    %c0_7 = arith.constant 0 : index
    %6 = vector.load %arg1[%c3, %c0_6, %c0_7] : memref<5x1x128xf32, #tpu.memory_space<vmem>>, vector<1x1x128xf32>
    %7 = vector.shape_cast %6 : vector<1x1x128xf32> to vector<1x128xf32>
    %c4 = arith.constant 4 : index
    %c0_8 = arith.constant 0 : index
    %c0_9 = arith.constant 0 : index
    %8 = vector.load %arg1[%c4, %c0_8, %c0_9] : memref<5x1x128xf32, #tpu.memory_space<vmem>>, vector<1x1x128xf32>
    %9 = vector.shape_cast %8 : vector<1x1x128xf32> to vector<1x128xf32>
    %c0_10 = arith.constant 0 : index
    %c0_11 = arith.constant 0 : index
    %c0_12 = arith.constant 0 : index
    %10 = vector.load %arg2[%c0_10, %c0_11, %c0_12] : memref<5x1x128xf32, #tpu.memory_space<vmem>>, vector<1x1x128xf32>
    %11 = vector.shape_cast %10 : vector<1x1x128xf32> to vector<1x128xf32>
    %c1_13 = arith.constant 1 : index
    %c0_14 = arith.constant 0 : index
    %c0_15 = arith.constant 0 : index
    %12 = vector.load %arg2[%c1_13, %c0_14, %c0_15] : memref<5x1x128xf32, #tpu.memory_space<vmem>>, vector<1x1x128xf32>
    %13 = vector.shape_cast %12 : vector<1x1x128xf32> to vector<1x128xf32>
    %c2_16 = arith.constant 2 : index
    %c0_17 = arith.constant 0 : index
    %c0_18 = arith.constant 0 : index
    %14 = vector.load %arg2[%c2_16, %c0_17, %c0_18] : memref<5x1x128xf32, #tpu.memory_space<vmem>>, vector<1x1x128xf32>
    %15 = vector.shape_cast %14 : vector<1x1x128xf32> to vector<1x128xf32>
    %c3_19 = arith.constant 3 : index
    %c0_20 = arith.constant 0 : index
    %c0_21 = arith.constant 0 : index
    %16 = vector.load %arg2[%c3_19, %c0_20, %c0_21] : memref<5x1x128xf32, #tpu.memory_space<vmem>>, vector<1x1x128xf32>
    %17 = vector.shape_cast %16 : vector<1x1x128xf32> to vector<1x128xf32>
    %c4_22 = arith.constant 4 : index
    %c0_23 = arith.constant 0 : index
    %c0_24 = arith.constant 0 : index
    %18 = vector.load %arg2[%c4_22, %c0_23, %c0_24] : memref<5x1x128xf32, #tpu.memory_space<vmem>>, vector<1x1x128xf32>
    %19 = vector.shape_cast %18 : vector<1x1x128xf32> to vector<1x128xf32>
    %20 = math.cos %9 : vector<1x128xf32>
    %21 = math.sin %9 : vector<1x128xf32>
    %cst = arith.constant 5.000000e-01 : f32
    %22 = vector.broadcast %cst : f32 to vector<1x128xf32>
    %23 = arith.mulf %22, %5 : vector<1x128xf32>
    %cst_25 = arith.constant 5.000000e-01 : f32
    %24 = vector.broadcast %cst_25 : f32 to vector<1x128xf32>
    %25 = arith.mulf %24, %7 : vector<1x128xf32>
    %cst_26 = arith.constant -1.000000e+00 : f32
    %26 = vector.broadcast %cst_26 : f32 to vector<1x128xf32>
    %27 = arith.mulf %26, %23 : vector<1x128xf32>
    %cst_27 = arith.constant -1.000000e+00 : f32
    %28 = vector.broadcast %cst_27 : f32 to vector<1x128xf32>
    %29 = arith.mulf %28, %25 : vector<1x128xf32>
    %30 = arith.mulf %27, %20 : vector<1x128xf32>
    %31 = arith.addf %1, %30 : vector<1x128xf32>
    %32 = arith.mulf %29, %21 : vector<1x128xf32>
    %33 = arith.subf %31, %32 : vector<1x128xf32>
    %34 = arith.mulf %27, %21 : vector<1x128xf32>
    %35 = arith.addf %3, %34 : vector<1x128xf32>
    %36 = arith.mulf %29, %20 : vector<1x128xf32>
    %37 = arith.addf %35, %36 : vector<1x128xf32>
    %cst_28 = arith.constant 1.000000e+00 : f32
    %38 = vector.broadcast %cst_28 : f32 to vector<1x128xf32>
    %39 = arith.mulf %38, %23 : vector<1x128xf32>
    %cst_29 = arith.constant -1.000000e+00 : f32
    %40 = vector.broadcast %cst_29 : f32 to vector<1x128xf32>
    %41 = arith.mulf %40, %25 : vector<1x128xf32>
    %42 = arith.mulf %39, %20 : vector<1x128xf32>
    %43 = arith.addf %1, %42 : vector<1x128xf32>
    %44 = arith.mulf %41, %21 : vector<1x128xf32>
    %45 = arith.subf %43, %44 : vector<1x128xf32>
    %46 = arith.mulf %39, %21 : vector<1x128xf32>
    %47 = arith.addf %3, %46 : vector<1x128xf32>
    %48 = arith.mulf %41, %20 : vector<1x128xf32>
    %49 = arith.addf %47, %48 : vector<1x128xf32>
    %cst_30 = arith.constant 1.000000e+00 : f32
    %50 = vector.broadcast %cst_30 : f32 to vector<1x128xf32>
    %51 = arith.mulf %50, %23 : vector<1x128xf32>
    %cst_31 = arith.constant 1.000000e+00 : f32
    %52 = vector.broadcast %cst_31 : f32 to vector<1x128xf32>
    %53 = arith.mulf %52, %25 : vector<1x128xf32>
    %54 = arith.mulf %51, %20 : vector<1x128xf32>
    %55 = arith.addf %1, %54 : vector<1x128xf32>
    %56 = arith.mulf %53, %21 : vector<1x128xf32>
    %57 = arith.subf %55, %56 : vector<1x128xf32>
    %58 = arith.mulf %51, %21 : vector<1x128xf32>
    %59 = arith.addf %3, %58 : vector<1x128xf32>
    %60 = arith.mulf %53, %20 : vector<1x128xf32>
    %61 = arith.addf %59, %60 : vector<1x128xf32>
    %cst_32 = arith.constant -1.000000e+00 : f32
    %62 = vector.broadcast %cst_32 : f32 to vector<1x128xf32>
    %63 = arith.mulf %62, %23 : vector<1x128xf32>
    %cst_33 = arith.constant 1.000000e+00 : f32
    %64 = vector.broadcast %cst_33 : f32 to vector<1x128xf32>
    %65 = arith.mulf %64, %25 : vector<1x128xf32>
    %66 = arith.mulf %63, %20 : vector<1x128xf32>
    %67 = arith.addf %1, %66 : vector<1x128xf32>
    %68 = arith.mulf %65, %21 : vector<1x128xf32>
    %69 = arith.subf %67, %68 : vector<1x128xf32>
    %70 = arith.mulf %63, %21 : vector<1x128xf32>
    %71 = arith.addf %3, %70 : vector<1x128xf32>
    %72 = arith.mulf %65, %20 : vector<1x128xf32>
    %73 = arith.addf %71, %72 : vector<1x128xf32>
    %74 = math.cos %19 : vector<1x128xf32>
    %75 = math.sin %19 : vector<1x128xf32>
    %cst_34 = arith.constant 5.000000e-01 : f32
    %76 = vector.broadcast %cst_34 : f32 to vector<1x128xf32>
    %77 = arith.mulf %76, %15 : vector<1x128xf32>
    %cst_35 = arith.constant 5.000000e-01 : f32
    %78 = vector.broadcast %cst_35 : f32 to vector<1x128xf32>
    %79 = arith.mulf %78, %17 : vector<1x128xf32>
    %cst_36 = arith.constant -1.000000e+00 : f32
    %80 = vector.broadcast %cst_36 : f32 to vector<1x128xf32>
    %81 = arith.mulf %80, %77 : vector<1x128xf32>
    %cst_37 = arith.constant -1.000000e+00 : f32
    %82 = vector.broadcast %cst_37 : f32 to vector<1x128xf32>
    %83 = arith.mulf %82, %79 : vector<1x128xf32>
    %84 = arith.mulf %81, %74 : vector<1x128xf32>
    %85 = arith.addf %11, %84 : vector<1x128xf32>
    %86 = arith.mulf %83, %75 : vector<1x128xf32>
    %87 = arith.subf %85, %86 : vector<1x128xf32>
    %88 = arith.mulf %81, %75 : vector<1x128xf32>
    %89 = arith.addf %13, %88 : vector<1x128xf32>
    %90 = arith.mulf %83, %74 : vector<1x128xf32>
    %91 = arith.addf %89, %90 : vector<1x128xf32>
    %cst_38 = arith.constant 1.000000e+00 : f32
    %92 = vector.broadcast %cst_38 : f32 to vector<1x128xf32>
    %93 = arith.mulf %92, %77 : vector<1x128xf32>
    %cst_39 = arith.constant -1.000000e+00 : f32
    %94 = vector.broadcast %cst_39 : f32 to vector<1x128xf32>
    %95 = arith.mulf %94, %79 : vector<1x128xf32>
    %96 = arith.mulf %93, %74 : vector<1x128xf32>
    %97 = arith.addf %11, %96 : vector<1x128xf32>
    %98 = arith.mulf %95, %75 : vector<1x128xf32>
    %99 = arith.subf %97, %98 : vector<1x128xf32>
    %100 = arith.mulf %93, %75 : vector<1x128xf32>
    %101 = arith.addf %13, %100 : vector<1x128xf32>
    %102 = arith.mulf %95, %74 : vector<1x128xf32>
    %103 = arith.addf %101, %102 : vector<1x128xf32>
    %cst_40 = arith.constant 1.000000e+00 : f32
    %104 = vector.broadcast %cst_40 : f32 to vector<1x128xf32>
    %105 = arith.mulf %104, %77 : vector<1x128xf32>
    %cst_41 = arith.constant 1.000000e+00 : f32
    %106 = vector.broadcast %cst_41 : f32 to vector<1x128xf32>
    %107 = arith.mulf %106, %79 : vector<1x128xf32>
    %108 = arith.mulf %105, %74 : vector<1x128xf32>
    %109 = arith.addf %11, %108 : vector<1x128xf32>
    %110 = arith.mulf %107, %75 : vector<1x128xf32>
    %111 = arith.subf %109, %110 : vector<1x128xf32>
    %112 = arith.mulf %105, %75 : vector<1x128xf32>
    %113 = arith.addf %13, %112 : vector<1x128xf32>
    %114 = arith.mulf %107, %74 : vector<1x128xf32>
    %115 = arith.addf %113, %114 : vector<1x128xf32>
    %cst_42 = arith.constant -1.000000e+00 : f32
    %116 = vector.broadcast %cst_42 : f32 to vector<1x128xf32>
    %117 = arith.mulf %116, %77 : vector<1x128xf32>
    %cst_43 = arith.constant 1.000000e+00 : f32
    %118 = vector.broadcast %cst_43 : f32 to vector<1x128xf32>
    %119 = arith.mulf %118, %79 : vector<1x128xf32>
    %120 = arith.mulf %117, %74 : vector<1x128xf32>
    %121 = arith.addf %11, %120 : vector<1x128xf32>
    %122 = arith.mulf %119, %75 : vector<1x128xf32>
    %123 = arith.subf %121, %122 : vector<1x128xf32>
    %124 = arith.mulf %117, %75 : vector<1x128xf32>
    %125 = arith.addf %13, %124 : vector<1x128xf32>
    %126 = arith.mulf %119, %74 : vector<1x128xf32>
    %127 = arith.addf %125, %126 : vector<1x128xf32>
    %128 = arith.subf %99, %87 : vector<1x128xf32>
    %129 = arith.subf %103, %91 : vector<1x128xf32>
    %130 = arith.mulf %128, %91 : vector<1x128xf32>
    %131 = arith.mulf %129, %87 : vector<1x128xf32>
    %132 = arith.subf %130, %131 : vector<1x128xf32>
    %133 = arith.subf %111, %99 : vector<1x128xf32>
    %134 = arith.subf %115, %103 : vector<1x128xf32>
    %135 = arith.mulf %133, %103 : vector<1x128xf32>
    %136 = arith.mulf %134, %99 : vector<1x128xf32>
    %137 = arith.subf %135, %136 : vector<1x128xf32>
    %138 = arith.subf %123, %111 : vector<1x128xf32>
    %139 = arith.subf %127, %115 : vector<1x128xf32>
    %140 = arith.mulf %138, %115 : vector<1x128xf32>
    %141 = arith.mulf %139, %111 : vector<1x128xf32>
    %142 = arith.subf %140, %141 : vector<1x128xf32>
    %143 = arith.subf %87, %123 : vector<1x128xf32>
    %144 = arith.subf %91, %127 : vector<1x128xf32>
    %145 = arith.mulf %143, %127 : vector<1x128xf32>
    %146 = arith.mulf %144, %123 : vector<1x128xf32>
    %147 = arith.subf %145, %146 : vector<1x128xf32>
    %148 = arith.subf %45, %33 : vector<1x128xf32>
    %149 = arith.subf %49, %37 : vector<1x128xf32>
    %150 = arith.mulf %148, %37 : vector<1x128xf32>
    %151 = arith.mulf %149, %33 : vector<1x128xf32>
    %152 = arith.subf %150, %151 : vector<1x128xf32>
    %153 = arith.subf %57, %45 : vector<1x128xf32>
    %154 = arith.subf %61, %49 : vector<1x128xf32>
    %155 = arith.mulf %153, %49 : vector<1x128xf32>
    %156 = arith.mulf %154, %45 : vector<1x128xf32>
    %157 = arith.subf %155, %156 : vector<1x128xf32>
    %158 = arith.subf %69, %57 : vector<1x128xf32>
    %159 = arith.subf %73, %61 : vector<1x128xf32>
    %160 = arith.mulf %158, %61 : vector<1x128xf32>
    %161 = arith.mulf %159, %57 : vector<1x128xf32>
    %162 = arith.subf %160, %161 : vector<1x128xf32>
    %163 = arith.subf %33, %69 : vector<1x128xf32>
    %164 = arith.subf %37, %73 : vector<1x128xf32>
    %165 = arith.mulf %163, %73 : vector<1x128xf32>
    %166 = arith.mulf %164, %69 : vector<1x128xf32>
    %167 = arith.subf %165, %166 : vector<1x128xf32>
    %cst_44 = arith.constant 0.000000e+00 : f32
    %168 = vector.broadcast %cst_44 : f32 to vector<1x128xf32>
    %169 = arith.subf %45, %33 : vector<1x128xf32>
    %170 = arith.subf %49, %37 : vector<1x128xf32>
    %cst_45 = arith.constant 0.000000e+00 : f32
    %171 = vector.broadcast %cst_45 : f32 to vector<1x128xf32>
    %cst_46 = arith.constant 1.000000e+00 : f32
    %172 = vector.broadcast %cst_46 : f32 to vector<1x128xf32>
    %true = arith.constant true
    %173 = vector.broadcast %true : i1 to vector<1x128xi1>
    %174 = arith.mulf %128, %37 : vector<1x128xf32>
    %175 = arith.mulf %129, %33 : vector<1x128xf32>
    %176 = arith.subf %174, %175 : vector<1x128xf32>
    %177 = arith.subf %176, %132 : vector<1x128xf32>
    %cst_47 = arith.constant 0.000000e+00 : f32
    %178 = vector.broadcast %cst_47 : f32 to vector<1x128xf32>
    %179 = arith.subf %177, %178 : vector<1x128xf32>
    %180 = arith.mulf %128, %170 : vector<1x128xf32>
    %181 = arith.mulf %129, %169 : vector<1x128xf32>
    %182 = arith.subf %180, %181 : vector<1x128xf32>
    %183 = math.absf %182 : vector<1x128xf32>
    %cst_48 = arith.constant 9.99999996E-13 : f32
    %184 = vector.broadcast %cst_48 : f32 to vector<1x128xf32>
    %185 = arith.cmpf olt, %183, %184 : vector<1x128xf32>
    %cst_49 = arith.constant 9.99999996E-13 : f32
    %186 = vector.broadcast %cst_49 : f32 to vector<1x128xf32>
    %187 = arith.select %185, %186, %182 : vector<1x128xi1>, vector<1x128xf32>
    %cst_50 = arith.constant 0.000000e+00 : f32
    %188 = vector.broadcast %cst_50 : f32 to vector<1x128xf32>
    %189 = arith.subf %188, %179 : vector<1x128xf32>
    %190 = tpu.reciprocal %187 {approx = true} : vector<1x128xf32> -> vector<1x128xf32>
    %191 = arith.mulf %189, %190 : vector<1x128xf32>
    %cst_51 = arith.constant 9.99999996E-13 : f32
    %192 = vector.broadcast %cst_51 : f32 to vector<1x128xf32>
    %193 = arith.cmpf ogt, %182, %192 : vector<1x128xf32>
    %194 = arith.maximumf %171, %191 : vector<1x128xf32>
    %195 = arith.select %193, %194, %171 : vector<1x128xi1>, vector<1x128xf32>
    %cst_52 = arith.constant -9.99999996E-13 : f32
    %196 = vector.broadcast %cst_52 : f32 to vector<1x128xf32>
    %197 = arith.cmpf olt, %182, %196 : vector<1x128xf32>
    %198 = arith.minimumf %172, %191 : vector<1x128xf32>
    %199 = arith.select %197, %198, %172 : vector<1x128xi1>, vector<1x128xf32>
    %200 = math.absf %182 : vector<1x128xf32>
    %cst_53 = arith.constant 9.99999996E-13 : f32
    %201 = vector.broadcast %cst_53 : f32 to vector<1x128xf32>
    %202 = arith.cmpf ogt, %200, %201 : vector<1x128xf32>
    %cst_54 = arith.constant 0.000000e+00 : f32
    %203 = vector.broadcast %cst_54 : f32 to vector<1x128xf32>
    %204 = arith.cmpf oge, %179, %203 : vector<1x128xf32>
    %205 = arith.ori %202, %204 : vector<1x128xi1>
    %206 = arith.andi %173, %205 : vector<1x128xi1>
    %207 = arith.mulf %133, %37 : vector<1x128xf32>
    %208 = arith.mulf %134, %33 : vector<1x128xf32>
    %209 = arith.subf %207, %208 : vector<1x128xf32>
    %210 = arith.subf %209, %137 : vector<1x128xf32>
    %cst_55 = arith.constant 0.000000e+00 : f32
    %211 = vector.broadcast %cst_55 : f32 to vector<1x128xf32>
    %212 = arith.subf %210, %211 : vector<1x128xf32>
    %213 = arith.mulf %133, %170 : vector<1x128xf32>
    %214 = arith.mulf %134, %169 : vector<1x128xf32>
    %215 = arith.subf %213, %214 : vector<1x128xf32>
    %216 = math.absf %215 : vector<1x128xf32>
    %cst_56 = arith.constant 9.99999996E-13 : f32
    %217 = vector.broadcast %cst_56 : f32 to vector<1x128xf32>
    %218 = arith.cmpf olt, %216, %217 : vector<1x128xf32>
    %cst_57 = arith.constant 9.99999996E-13 : f32
    %219 = vector.broadcast %cst_57 : f32 to vector<1x128xf32>
    %220 = arith.select %218, %219, %215 : vector<1x128xi1>, vector<1x128xf32>
    %cst_58 = arith.constant 0.000000e+00 : f32
    %221 = vector.broadcast %cst_58 : f32 to vector<1x128xf32>
    %222 = arith.subf %221, %212 : vector<1x128xf32>
    %223 = tpu.reciprocal %220 {approx = true} : vector<1x128xf32> -> vector<1x128xf32>
    %224 = arith.mulf %222, %223 : vector<1x128xf32>
    %cst_59 = arith.constant 9.99999996E-13 : f32
    %225 = vector.broadcast %cst_59 : f32 to vector<1x128xf32>
    %226 = arith.cmpf ogt, %215, %225 : vector<1x128xf32>
    %227 = arith.maximumf %195, %224 : vector<1x128xf32>
    %228 = arith.select %226, %227, %195 : vector<1x128xi1>, vector<1x128xf32>
    %cst_60 = arith.constant -9.99999996E-13 : f32
    %229 = vector.broadcast %cst_60 : f32 to vector<1x128xf32>
    %230 = arith.cmpf olt, %215, %229 : vector<1x128xf32>
    %231 = arith.minimumf %199, %224 : vector<1x128xf32>
    %232 = arith.select %230, %231, %199 : vector<1x128xi1>, vector<1x128xf32>
    %233 = math.absf %215 : vector<1x128xf32>
    %cst_61 = arith.constant 9.99999996E-13 : f32
    %234 = vector.broadcast %cst_61 : f32 to vector<1x128xf32>
    %235 = arith.cmpf ogt, %233, %234 : vector<1x128xf32>
    %cst_62 = arith.constant 0.000000e+00 : f32
    %236 = vector.broadcast %cst_62 : f32 to vector<1x128xf32>
    %237 = arith.cmpf oge, %212, %236 : vector<1x128xf32>
    %238 = arith.ori %235, %237 : vector<1x128xi1>
    %239 = arith.andi %206, %238 : vector<1x128xi1>
    %240 = arith.mulf %138, %37 : vector<1x128xf32>
    %241 = arith.mulf %139, %33 : vector<1x128xf32>
    %242 = arith.subf %240, %241 : vector<1x128xf32>
    %243 = arith.subf %242, %142 : vector<1x128xf32>
    %cst_63 = arith.constant 0.000000e+00 : f32
    %244 = vector.broadcast %cst_63 : f32 to vector<1x128xf32>
    %245 = arith.subf %243, %244 : vector<1x128xf32>
    %246 = arith.mulf %138, %170 : vector<1x128xf32>
    %247 = arith.mulf %139, %169 : vector<1x128xf32>
    %248 = arith.subf %246, %247 : vector<1x128xf32>
    %249 = math.absf %248 : vector<1x128xf32>
    %cst_64 = arith.constant 9.99999996E-13 : f32
    %250 = vector.broadcast %cst_64 : f32 to vector<1x128xf32>
    %251 = arith.cmpf olt, %249, %250 : vector<1x128xf32>
    %cst_65 = arith.constant 9.99999996E-13 : f32
    %252 = vector.broadcast %cst_65 : f32 to vector<1x128xf32>
    %253 = arith.select %251, %252, %248 : vector<1x128xi1>, vector<1x128xf32>
    %cst_66 = arith.constant 0.000000e+00 : f32
    %254 = vector.broadcast %cst_66 : f32 to vector<1x128xf32>
    %255 = arith.subf %254, %245 : vector<1x128xf32>
    %256 = tpu.reciprocal %253 {approx = true} : vector<1x128xf32> -> vector<1x128xf32>
    %257 = arith.mulf %255, %256 : vector<1x128xf32>
    %cst_67 = arith.constant 9.99999996E-13 : f32
    %258 = vector.broadcast %cst_67 : f32 to vector<1x128xf32>
    %259 = arith.cmpf ogt, %248, %258 : vector<1x128xf32>
    %260 = arith.maximumf %228, %257 : vector<1x128xf32>
    %261 = arith.select %259, %260, %228 : vector<1x128xi1>, vector<1x128xf32>
    %cst_68 = arith.constant -9.99999996E-13 : f32
    %262 = vector.broadcast %cst_68 : f32 to vector<1x128xf32>
    %263 = arith.cmpf olt, %248, %262 : vector<1x128xf32>
    %264 = arith.minimumf %232, %257 : vector<1x128xf32>
    %265 = arith.select %263, %264, %232 : vector<1x128xi1>, vector<1x128xf32>
    %266 = math.absf %248 : vector<1x128xf32>
    %cst_69 = arith.constant 9.99999996E-13 : f32
    %267 = vector.broadcast %cst_69 : f32 to vector<1x128xf32>
    %268 = arith.cmpf ogt, %266, %267 : vector<1x128xf32>
    %cst_70 = arith.constant 0.000000e+00 : f32
    %269 = vector.broadcast %cst_70 : f32 to vector<1x128xf32>
    %270 = arith.cmpf oge, %245, %269 : vector<1x128xf32>
    %271 = arith.ori %268, %270 : vector<1x128xi1>
    %272 = arith.andi %239, %271 : vector<1x128xi1>
    %273 = arith.mulf %143, %37 : vector<1x128xf32>
    %274 = arith.mulf %144, %33 : vector<1x128xf32>
    %275 = arith.subf %273, %274 : vector<1x128xf32>
    %276 = arith.subf %275, %147 : vector<1x128xf32>
    %cst_71 = arith.constant 0.000000e+00 : f32
    %277 = vector.broadcast %cst_71 : f32 to vector<1x128xf32>
    %278 = arith.subf %276, %277 : vector<1x128xf32>
    %279 = arith.mulf %143, %170 : vector<1x128xf32>
    %280 = arith.mulf %144, %169 : vector<1x128xf32>
    %281 = arith.subf %279, %280 : vector<1x128xf32>
    %282 = math.absf %281 : vector<1x128xf32>
    %cst_72 = arith.constant 9.99999996E-13 : f32
    %283 = vector.broadcast %cst_72 : f32 to vector<1x128xf32>
    %284 = arith.cmpf olt, %282, %283 : vector<1x128xf32>
    %cst_73 = arith.constant 9.99999996E-13 : f32
    %285 = vector.broadcast %cst_73 : f32 to vector<1x128xf32>
    %286 = arith.select %284, %285, %281 : vector<1x128xi1>, vector<1x128xf32>
    %cst_74 = arith.constant 0.000000e+00 : f32
    %287 = vector.broadcast %cst_74 : f32 to vector<1x128xf32>
    %288 = arith.subf %287, %278 : vector<1x128xf32>
    %289 = tpu.reciprocal %286 {approx = true} : vector<1x128xf32> -> vector<1x128xf32>
    %290 = arith.mulf %288, %289 : vector<1x128xf32>
    %cst_75 = arith.constant 9.99999996E-13 : f32
    %291 = vector.broadcast %cst_75 : f32 to vector<1x128xf32>
    %292 = arith.cmpf ogt, %281, %291 : vector<1x128xf32>
    %293 = arith.maximumf %261, %290 : vector<1x128xf32>
    %294 = arith.select %292, %293, %261 : vector<1x128xi1>, vector<1x128xf32>
    %cst_76 = arith.constant -9.99999996E-13 : f32
    %295 = vector.broadcast %cst_76 : f32 to vector<1x128xf32>
    %296 = arith.cmpf olt, %281, %295 : vector<1x128xf32>
    %297 = arith.minimumf %265, %290 : vector<1x128xf32>
    %298 = arith.select %296, %297, %265 : vector<1x128xi1>, vector<1x128xf32>
    %299 = math.absf %281 : vector<1x128xf32>
    %cst_77 = arith.constant 9.99999996E-13 : f32
    %300 = vector.broadcast %cst_77 : f32 to vector<1x128xf32>
    %301 = arith.cmpf ogt, %299, %300 : vector<1x128xf32>
    %cst_78 = arith.constant 0.000000e+00 : f32
    %302 = vector.broadcast %cst_78 : f32 to vector<1x128xf32>
    %303 = arith.cmpf oge, %278, %302 : vector<1x128xf32>
    %304 = arith.ori %301, %303 : vector<1x128xi1>
    %305 = arith.andi %272, %304 : vector<1x128xi1>
    %306 = arith.cmpf ogt, %298, %294 : vector<1x128xf32>
    %307 = arith.andi %305, %306 : vector<1x128xi1>
    %308 = arith.mulf %294, %169 : vector<1x128xf32>
    %309 = arith.addf %33, %308 : vector<1x128xf32>
    %310 = arith.mulf %294, %170 : vector<1x128xf32>
    %311 = arith.addf %37, %310 : vector<1x128xf32>
    %312 = arith.mulf %298, %169 : vector<1x128xf32>
    %313 = arith.addf %33, %312 : vector<1x128xf32>
    %314 = arith.mulf %298, %170 : vector<1x128xf32>
    %315 = arith.addf %37, %314 : vector<1x128xf32>
    %316 = arith.mulf %309, %315 : vector<1x128xf32>
    %317 = arith.mulf %313, %311 : vector<1x128xf32>
    %318 = arith.subf %316, %317 : vector<1x128xf32>
    %cst_79 = arith.constant 5.000000e-01 : f32
    %319 = vector.broadcast %cst_79 : f32 to vector<1x128xf32>
    %320 = arith.mulf %319, %318 : vector<1x128xf32>
    %cst_80 = arith.constant 0.000000e+00 : f32
    %321 = vector.broadcast %cst_80 : f32 to vector<1x128xf32>
    %322 = arith.select %307, %320, %321 : vector<1x128xi1>, vector<1x128xf32>
    %323 = arith.addf %168, %322 : vector<1x128xf32>
    %324 = arith.subf %57, %45 : vector<1x128xf32>
    %325 = arith.subf %61, %49 : vector<1x128xf32>
    %cst_81 = arith.constant 0.000000e+00 : f32
    %326 = vector.broadcast %cst_81 : f32 to vector<1x128xf32>
    %cst_82 = arith.constant 1.000000e+00 : f32
    %327 = vector.broadcast %cst_82 : f32 to vector<1x128xf32>
    %true_83 = arith.constant true
    %328 = vector.broadcast %true_83 : i1 to vector<1x128xi1>
    %329 = arith.mulf %128, %49 : vector<1x128xf32>
    %330 = arith.mulf %129, %45 : vector<1x128xf32>
    %331 = arith.subf %329, %330 : vector<1x128xf32>
    %332 = arith.subf %331, %132 : vector<1x128xf32>
    %cst_84 = arith.constant 0.000000e+00 : f32
    %333 = vector.broadcast %cst_84 : f32 to vector<1x128xf32>
    %334 = arith.subf %332, %333 : vector<1x128xf32>
    %335 = arith.mulf %128, %325 : vector<1x128xf32>
    %336 = arith.mulf %129, %324 : vector<1x128xf32>
    %337 = arith.subf %335, %336 : vector<1x128xf32>
    %338 = math.absf %337 : vector<1x128xf32>
    %cst_85 = arith.constant 9.99999996E-13 : f32
    %339 = vector.broadcast %cst_85 : f32 to vector<1x128xf32>
    %340 = arith.cmpf olt, %338, %339 : vector<1x128xf32>
    %cst_86 = arith.constant 9.99999996E-13 : f32
    %341 = vector.broadcast %cst_86 : f32 to vector<1x128xf32>
    %342 = arith.select %340, %341, %337 : vector<1x128xi1>, vector<1x128xf32>
    %cst_87 = arith.constant 0.000000e+00 : f32
    %343 = vector.broadcast %cst_87 : f32 to vector<1x128xf32>
    %344 = arith.subf %343, %334 : vector<1x128xf32>
    %345 = tpu.reciprocal %342 {approx = true} : vector<1x128xf32> -> vector<1x128xf32>
    %346 = arith.mulf %344, %345 : vector<1x128xf32>
    %cst_88 = arith.constant 9.99999996E-13 : f32
    %347 = vector.broadcast %cst_88 : f32 to vector<1x128xf32>
    %348 = arith.cmpf ogt, %337, %347 : vector<1x128xf32>
    %349 = arith.maximumf %326, %346 : vector<1x128xf32>
    %350 = arith.select %348, %349, %326 : vector<1x128xi1>, vector<1x128xf32>
    %cst_89 = arith.constant -9.99999996E-13 : f32
    %351 = vector.broadcast %cst_89 : f32 to vector<1x128xf32>
    %352 = arith.cmpf olt, %337, %351 : vector<1x128xf32>
    %353 = arith.minimumf %327, %346 : vector<1x128xf32>
    %354 = arith.select %352, %353, %327 : vector<1x128xi1>, vector<1x128xf32>
    %355 = math.absf %337 : vector<1x128xf32>
    %cst_90 = arith.constant 9.99999996E-13 : f32
    %356 = vector.broadcast %cst_90 : f32 to vector<1x128xf32>
    %357 = arith.cmpf ogt, %355, %356 : vector<1x128xf32>
    %cst_91 = arith.constant 0.000000e+00 : f32
    %358 = vector.broadcast %cst_91 : f32 to vector<1x128xf32>
    %359 = arith.cmpf oge, %334, %358 : vector<1x128xf32>
    %360 = arith.ori %357, %359 : vector<1x128xi1>
    %361 = arith.andi %328, %360 : vector<1x128xi1>
    %362 = arith.mulf %133, %49 : vector<1x128xf32>
    %363 = arith.mulf %134, %45 : vector<1x128xf32>
    %364 = arith.subf %362, %363 : vector<1x128xf32>
    %365 = arith.subf %364, %137 : vector<1x128xf32>
    %cst_92 = arith.constant 0.000000e+00 : f32
    %366 = vector.broadcast %cst_92 : f32 to vector<1x128xf32>
    %367 = arith.subf %365, %366 : vector<1x128xf32>
    %368 = arith.mulf %133, %325 : vector<1x128xf32>
    %369 = arith.mulf %134, %324 : vector<1x128xf32>
    %370 = arith.subf %368, %369 : vector<1x128xf32>
    %371 = math.absf %370 : vector<1x128xf32>
    %cst_93 = arith.constant 9.99999996E-13 : f32
    %372 = vector.broadcast %cst_93 : f32 to vector<1x128xf32>
    %373 = arith.cmpf olt, %371, %372 : vector<1x128xf32>
    %cst_94 = arith.constant 9.99999996E-13 : f32
    %374 = vector.broadcast %cst_94 : f32 to vector<1x128xf32>
    %375 = arith.select %373, %374, %370 : vector<1x128xi1>, vector<1x128xf32>
    %cst_95 = arith.constant 0.000000e+00 : f32
    %376 = vector.broadcast %cst_95 : f32 to vector<1x128xf32>
    %377 = arith.subf %376, %367 : vector<1x128xf32>
    %378 = tpu.reciprocal %375 {approx = true} : vector<1x128xf32> -> vector<1x128xf32>
    %379 = arith.mulf %377, %378 : vector<1x128xf32>
    %cst_96 = arith.constant 9.99999996E-13 : f32
    %380 = vector.broadcast %cst_96 : f32 to vector<1x128xf32>
    %381 = arith.cmpf ogt, %370, %380 : vector<1x128xf32>
    %382 = arith.maximumf %350, %379 : vector<1x128xf32>
    %383 = arith.select %381, %382, %350 : vector<1x128xi1>, vector<1x128xf32>
    %cst_97 = arith.constant -9.99999996E-13 : f32
    %384 = vector.broadcast %cst_97 : f32 to vector<1x128xf32>
    %385 = arith.cmpf olt, %370, %384 : vector<1x128xf32>
    %386 = arith.minimumf %354, %379 : vector<1x128xf32>
    %387 = arith.select %385, %386, %354 : vector<1x128xi1>, vector<1x128xf32>
    %388 = math.absf %370 : vector<1x128xf32>
    %cst_98 = arith.constant 9.99999996E-13 : f32
    %389 = vector.broadcast %cst_98 : f32 to vector<1x128xf32>
    %390 = arith.cmpf ogt, %388, %389 : vector<1x128xf32>
    %cst_99 = arith.constant 0.000000e+00 : f32
    %391 = vector.broadcast %cst_99 : f32 to vector<1x128xf32>
    %392 = arith.cmpf oge, %367, %391 : vector<1x128xf32>
    %393 = arith.ori %390, %392 : vector<1x128xi1>
    %394 = arith.andi %361, %393 : vector<1x128xi1>
    %395 = arith.mulf %138, %49 : vector<1x128xf32>
    %396 = arith.mulf %139, %45 : vector<1x128xf32>
    %397 = arith.subf %395, %396 : vector<1x128xf32>
    %398 = arith.subf %397, %142 : vector<1x128xf32>
    %cst_100 = arith.constant 0.000000e+00 : f32
    %399 = vector.broadcast %cst_100 : f32 to vector<1x128xf32>
    %400 = arith.subf %398, %399 : vector<1x128xf32>
    %401 = arith.mulf %138, %325 : vector<1x128xf32>
    %402 = arith.mulf %139, %324 : vector<1x128xf32>
    %403 = arith.subf %401, %402 : vector<1x128xf32>
    %404 = math.absf %403 : vector<1x128xf32>
    %cst_101 = arith.constant 9.99999996E-13 : f32
    %405 = vector.broadcast %cst_101 : f32 to vector<1x128xf32>
    %406 = arith.cmpf olt, %404, %405 : vector<1x128xf32>
    %cst_102 = arith.constant 9.99999996E-13 : f32
    %407 = vector.broadcast %cst_102 : f32 to vector<1x128xf32>
    %408 = arith.select %406, %407, %403 : vector<1x128xi1>, vector<1x128xf32>
    %cst_103 = arith.constant 0.000000e+00 : f32
    %409 = vector.broadcast %cst_103 : f32 to vector<1x128xf32>
    %410 = arith.subf %409, %400 : vector<1x128xf32>
    %411 = tpu.reciprocal %408 {approx = true} : vector<1x128xf32> -> vector<1x128xf32>
    %412 = arith.mulf %410, %411 : vector<1x128xf32>
    %cst_104 = arith.constant 9.99999996E-13 : f32
    %413 = vector.broadcast %cst_104 : f32 to vector<1x128xf32>
    %414 = arith.cmpf ogt, %403, %413 : vector<1x128xf32>
    %415 = arith.maximumf %383, %412 : vector<1x128xf32>
    %416 = arith.select %414, %415, %383 : vector<1x128xi1>, vector<1x128xf32>
    %cst_105 = arith.constant -9.99999996E-13 : f32
    %417 = vector.broadcast %cst_105 : f32 to vector<1x128xf32>
    %418 = arith.cmpf olt, %403, %417 : vector<1x128xf32>
    %419 = arith.minimumf %387, %412 : vector<1x128xf32>
    %420 = arith.select %418, %419, %387 : vector<1x128xi1>, vector<1x128xf32>
    %421 = math.absf %403 : vector<1x128xf32>
    %cst_106 = arith.constant 9.99999996E-13 : f32
    %422 = vector.broadcast %cst_106 : f32 to vector<1x128xf32>
    %423 = arith.cmpf ogt, %421, %422 : vector<1x128xf32>
    %cst_107 = arith.constant 0.000000e+00 : f32
    %424 = vector.broadcast %cst_107 : f32 to vector<1x128xf32>
    %425 = arith.cmpf oge, %400, %424 : vector<1x128xf32>
    %426 = arith.ori %423, %425 : vector<1x128xi1>
    %427 = arith.andi %394, %426 : vector<1x128xi1>
    %428 = arith.mulf %143, %49 : vector<1x128xf32>
    %429 = arith.mulf %144, %45 : vector<1x128xf32>
    %430 = arith.subf %428, %429 : vector<1x128xf32>
    %431 = arith.subf %430, %147 : vector<1x128xf32>
    %cst_108 = arith.constant 0.000000e+00 : f32
    %432 = vector.broadcast %cst_108 : f32 to vector<1x128xf32>
    %433 = arith.subf %431, %432 : vector<1x128xf32>
    %434 = arith.mulf %143, %325 : vector<1x128xf32>
    %435 = arith.mulf %144, %324 : vector<1x128xf32>
    %436 = arith.subf %434, %435 : vector<1x128xf32>
    %437 = math.absf %436 : vector<1x128xf32>
    %cst_109 = arith.constant 9.99999996E-13 : f32
    %438 = vector.broadcast %cst_109 : f32 to vector<1x128xf32>
    %439 = arith.cmpf olt, %437, %438 : vector<1x128xf32>
    %cst_110 = arith.constant 9.99999996E-13 : f32
    %440 = vector.broadcast %cst_110 : f32 to vector<1x128xf32>
    %441 = arith.select %439, %440, %436 : vector<1x128xi1>, vector<1x128xf32>
    %cst_111 = arith.constant 0.000000e+00 : f32
    %442 = vector.broadcast %cst_111 : f32 to vector<1x128xf32>
    %443 = arith.subf %442, %433 : vector<1x128xf32>
    %444 = tpu.reciprocal %441 {approx = true} : vector<1x128xf32> -> vector<1x128xf32>
    %445 = arith.mulf %443, %444 : vector<1x128xf32>
    %cst_112 = arith.constant 9.99999996E-13 : f32
    %446 = vector.broadcast %cst_112 : f32 to vector<1x128xf32>
    %447 = arith.cmpf ogt, %436, %446 : vector<1x128xf32>
    %448 = arith.maximumf %416, %445 : vector<1x128xf32>
    %449 = arith.select %447, %448, %416 : vector<1x128xi1>, vector<1x128xf32>
    %cst_113 = arith.constant -9.99999996E-13 : f32
    %450 = vector.broadcast %cst_113 : f32 to vector<1x128xf32>
    %451 = arith.cmpf olt, %436, %450 : vector<1x128xf32>
    %452 = arith.minimumf %420, %445 : vector<1x128xf32>
    %453 = arith.select %451, %452, %420 : vector<1x128xi1>, vector<1x128xf32>
    %454 = math.absf %436 : vector<1x128xf32>
    %cst_114 = arith.constant 9.99999996E-13 : f32
    %455 = vector.broadcast %cst_114 : f32 to vector<1x128xf32>
    %456 = arith.cmpf ogt, %454, %455 : vector<1x128xf32>
    %cst_115 = arith.constant 0.000000e+00 : f32
    %457 = vector.broadcast %cst_115 : f32 to vector<1x128xf32>
    %458 = arith.cmpf oge, %433, %457 : vector<1x128xf32>
    %459 = arith.ori %456, %458 : vector<1x128xi1>
    %460 = arith.andi %427, %459 : vector<1x128xi1>
    %461 = arith.cmpf ogt, %453, %449 : vector<1x128xf32>
    %462 = arith.andi %460, %461 : vector<1x128xi1>
    %463 = arith.mulf %449, %324 : vector<1x128xf32>
    %464 = arith.addf %45, %463 : vector<1x128xf32>
    %465 = arith.mulf %449, %325 : vector<1x128xf32>
    %466 = arith.addf %49, %465 : vector<1x128xf32>
    %467 = arith.mulf %453, %324 : vector<1x128xf32>
    %468 = arith.addf %45, %467 : vector<1x128xf32>
    %469 = arith.mulf %453, %325 : vector<1x128xf32>
    %470 = arith.addf %49, %469 : vector<1x128xf32>
    %471 = arith.mulf %464, %470 : vector<1x128xf32>
    %472 = arith.mulf %468, %466 : vector<1x128xf32>
    %473 = arith.subf %471, %472 : vector<1x128xf32>
    %cst_116 = arith.constant 5.000000e-01 : f32
    %474 = vector.broadcast %cst_116 : f32 to vector<1x128xf32>
    %475 = arith.mulf %474, %473 : vector<1x128xf32>
    %cst_117 = arith.constant 0.000000e+00 : f32
    %476 = vector.broadcast %cst_117 : f32 to vector<1x128xf32>
    %477 = arith.select %462, %475, %476 : vector<1x128xi1>, vector<1x128xf32>
    %478 = arith.addf %323, %477 : vector<1x128xf32>
    %479 = arith.subf %69, %57 : vector<1x128xf32>
    %480 = arith.subf %73, %61 : vector<1x128xf32>
    %cst_118 = arith.constant 0.000000e+00 : f32
    %481 = vector.broadcast %cst_118 : f32 to vector<1x128xf32>
    %cst_119 = arith.constant 1.000000e+00 : f32
    %482 = vector.broadcast %cst_119 : f32 to vector<1x128xf32>
    %true_120 = arith.constant true
    %483 = vector.broadcast %true_120 : i1 to vector<1x128xi1>
    %484 = arith.mulf %128, %61 : vector<1x128xf32>
    %485 = arith.mulf %129, %57 : vector<1x128xf32>
    %486 = arith.subf %484, %485 : vector<1x128xf32>
    %487 = arith.subf %486, %132 : vector<1x128xf32>
    %cst_121 = arith.constant 0.000000e+00 : f32
    %488 = vector.broadcast %cst_121 : f32 to vector<1x128xf32>
    %489 = arith.subf %487, %488 : vector<1x128xf32>
    %490 = arith.mulf %128, %480 : vector<1x128xf32>
    %491 = arith.mulf %129, %479 : vector<1x128xf32>
    %492 = arith.subf %490, %491 : vector<1x128xf32>
    %493 = math.absf %492 : vector<1x128xf32>
    %cst_122 = arith.constant 9.99999996E-13 : f32
    %494 = vector.broadcast %cst_122 : f32 to vector<1x128xf32>
    %495 = arith.cmpf olt, %493, %494 : vector<1x128xf32>
    %cst_123 = arith.constant 9.99999996E-13 : f32
    %496 = vector.broadcast %cst_123 : f32 to vector<1x128xf32>
    %497 = arith.select %495, %496, %492 : vector<1x128xi1>, vector<1x128xf32>
    %cst_124 = arith.constant 0.000000e+00 : f32
    %498 = vector.broadcast %cst_124 : f32 to vector<1x128xf32>
    %499 = arith.subf %498, %489 : vector<1x128xf32>
    %500 = tpu.reciprocal %497 {approx = true} : vector<1x128xf32> -> vector<1x128xf32>
    %501 = arith.mulf %499, %500 : vector<1x128xf32>
    %cst_125 = arith.constant 9.99999996E-13 : f32
    %502 = vector.broadcast %cst_125 : f32 to vector<1x128xf32>
    %503 = arith.cmpf ogt, %492, %502 : vector<1x128xf32>
    %504 = arith.maximumf %481, %501 : vector<1x128xf32>
    %505 = arith.select %503, %504, %481 : vector<1x128xi1>, vector<1x128xf32>
    %cst_126 = arith.constant -9.99999996E-13 : f32
    %506 = vector.broadcast %cst_126 : f32 to vector<1x128xf32>
    %507 = arith.cmpf olt, %492, %506 : vector<1x128xf32>
    %508 = arith.minimumf %482, %501 : vector<1x128xf32>
    %509 = arith.select %507, %508, %482 : vector<1x128xi1>, vector<1x128xf32>
    %510 = math.absf %492 : vector<1x128xf32>
    %cst_127 = arith.constant 9.99999996E-13 : f32
    %511 = vector.broadcast %cst_127 : f32 to vector<1x128xf32>
    %512 = arith.cmpf ogt, %510, %511 : vector<1x128xf32>
    %cst_128 = arith.constant 0.000000e+00 : f32
    %513 = vector.broadcast %cst_128 : f32 to vector<1x128xf32>
    %514 = arith.cmpf oge, %489, %513 : vector<1x128xf32>
    %515 = arith.ori %512, %514 : vector<1x128xi1>
    %516 = arith.andi %483, %515 : vector<1x128xi1>
    %517 = arith.mulf %133, %61 : vector<1x128xf32>
    %518 = arith.mulf %134, %57 : vector<1x128xf32>
    %519 = arith.subf %517, %518 : vector<1x128xf32>
    %520 = arith.subf %519, %137 : vector<1x128xf32>
    %cst_129 = arith.constant 0.000000e+00 : f32
    %521 = vector.broadcast %cst_129 : f32 to vector<1x128xf32>
    %522 = arith.subf %520, %521 : vector<1x128xf32>
    %523 = arith.mulf %133, %480 : vector<1x128xf32>
    %524 = arith.mulf %134, %479 : vector<1x128xf32>
    %525 = arith.subf %523, %524 : vector<1x128xf32>
    %526 = math.absf %525 : vector<1x128xf32>
    %cst_130 = arith.constant 9.99999996E-13 : f32
    %527 = vector.broadcast %cst_130 : f32 to vector<1x128xf32>
    %528 = arith.cmpf olt, %526, %527 : vector<1x128xf32>
    %cst_131 = arith.constant 9.99999996E-13 : f32
    %529 = vector.broadcast %cst_131 : f32 to vector<1x128xf32>
    %530 = arith.select %528, %529, %525 : vector<1x128xi1>, vector<1x128xf32>
    %cst_132 = arith.constant 0.000000e+00 : f32
    %531 = vector.broadcast %cst_132 : f32 to vector<1x128xf32>
    %532 = arith.subf %531, %522 : vector<1x128xf32>
    %533 = tpu.reciprocal %530 {approx = true} : vector<1x128xf32> -> vector<1x128xf32>
    %534 = arith.mulf %532, %533 : vector<1x128xf32>
    %cst_133 = arith.constant 9.99999996E-13 : f32
    %535 = vector.broadcast %cst_133 : f32 to vector<1x128xf32>
    %536 = arith.cmpf ogt, %525, %535 : vector<1x128xf32>
    %537 = arith.maximumf %505, %534 : vector<1x128xf32>
    %538 = arith.select %536, %537, %505 : vector<1x128xi1>, vector<1x128xf32>
    %cst_134 = arith.constant -9.99999996E-13 : f32
    %539 = vector.broadcast %cst_134 : f32 to vector<1x128xf32>
    %540 = arith.cmpf olt, %525, %539 : vector<1x128xf32>
    %541 = arith.minimumf %509, %534 : vector<1x128xf32>
    %542 = arith.select %540, %541, %509 : vector<1x128xi1>, vector<1x128xf32>
    %543 = math.absf %525 : vector<1x128xf32>
    %cst_135 = arith.constant 9.99999996E-13 : f32
    %544 = vector.broadcast %cst_135 : f32 to vector<1x128xf32>
    %545 = arith.cmpf ogt, %543, %544 : vector<1x128xf32>
    %cst_136 = arith.constant 0.000000e+00 : f32
    %546 = vector.broadcast %cst_136 : f32 to vector<1x128xf32>
    %547 = arith.cmpf oge, %522, %546 : vector<1x128xf32>
    %548 = arith.ori %545, %547 : vector<1x128xi1>
    %549 = arith.andi %516, %548 : vector<1x128xi1>
    %550 = arith.mulf %138, %61 : vector<1x128xf32>
    %551 = arith.mulf %139, %57 : vector<1x128xf32>
    %552 = arith.subf %550, %551 : vector<1x128xf32>
    %553 = arith.subf %552, %142 : vector<1x128xf32>
    %cst_137 = arith.constant 0.000000e+00 : f32
    %554 = vector.broadcast %cst_137 : f32 to vector<1x128xf32>
    %555 = arith.subf %553, %554 : vector<1x128xf32>
    %556 = arith.mulf %138, %480 : vector<1x128xf32>
    %557 = arith.mulf %139, %479 : vector<1x128xf32>
    %558 = arith.subf %556, %557 : vector<1x128xf32>
    %559 = math.absf %558 : vector<1x128xf32>
    %cst_138 = arith.constant 9.99999996E-13 : f32
    %560 = vector.broadcast %cst_138 : f32 to vector<1x128xf32>
    %561 = arith.cmpf olt, %559, %560 : vector<1x128xf32>
    %cst_139 = arith.constant 9.99999996E-13 : f32
    %562 = vector.broadcast %cst_139 : f32 to vector<1x128xf32>
    %563 = arith.select %561, %562, %558 : vector<1x128xi1>, vector<1x128xf32>
    %cst_140 = arith.constant 0.000000e+00 : f32
    %564 = vector.broadcast %cst_140 : f32 to vector<1x128xf32>
    %565 = arith.subf %564, %555 : vector<1x128xf32>
    %566 = tpu.reciprocal %563 {approx = true} : vector<1x128xf32> -> vector<1x128xf32>
    %567 = arith.mulf %565, %566 : vector<1x128xf32>
    %cst_141 = arith.constant 9.99999996E-13 : f32
    %568 = vector.broadcast %cst_141 : f32 to vector<1x128xf32>
    %569 = arith.cmpf ogt, %558, %568 : vector<1x128xf32>
    %570 = arith.maximumf %538, %567 : vector<1x128xf32>
    %571 = arith.select %569, %570, %538 : vector<1x128xi1>, vector<1x128xf32>
    %cst_142 = arith.constant -9.99999996E-13 : f32
    %572 = vector.broadcast %cst_142 : f32 to vector<1x128xf32>
    %573 = arith.cmpf olt, %558, %572 : vector<1x128xf32>
    %574 = arith.minimumf %542, %567 : vector<1x128xf32>
    %575 = arith.select %573, %574, %542 : vector<1x128xi1>, vector<1x128xf32>
    %576 = math.absf %558 : vector<1x128xf32>
    %cst_143 = arith.constant 9.99999996E-13 : f32
    %577 = vector.broadcast %cst_143 : f32 to vector<1x128xf32>
    %578 = arith.cmpf ogt, %576, %577 : vector<1x128xf32>
    %cst_144 = arith.constant 0.000000e+00 : f32
    %579 = vector.broadcast %cst_144 : f32 to vector<1x128xf32>
    %580 = arith.cmpf oge, %555, %579 : vector<1x128xf32>
    %581 = arith.ori %578, %580 : vector<1x128xi1>
    %582 = arith.andi %549, %581 : vector<1x128xi1>
    %583 = arith.mulf %143, %61 : vector<1x128xf32>
    %584 = arith.mulf %144, %57 : vector<1x128xf32>
    %585 = arith.subf %583, %584 : vector<1x128xf32>
    %586 = arith.subf %585, %147 : vector<1x128xf32>
    %cst_145 = arith.constant 0.000000e+00 : f32
    %587 = vector.broadcast %cst_145 : f32 to vector<1x128xf32>
    %588 = arith.subf %586, %587 : vector<1x128xf32>
    %589 = arith.mulf %143, %480 : vector<1x128xf32>
    %590 = arith.mulf %144, %479 : vector<1x128xf32>
    %591 = arith.subf %589, %590 : vector<1x128xf32>
    %592 = math.absf %591 : vector<1x128xf32>
    %cst_146 = arith.constant 9.99999996E-13 : f32
    %593 = vector.broadcast %cst_146 : f32 to vector<1x128xf32>
    %594 = arith.cmpf olt, %592, %593 : vector<1x128xf32>
    %cst_147 = arith.constant 9.99999996E-13 : f32
    %595 = vector.broadcast %cst_147 : f32 to vector<1x128xf32>
    %596 = arith.select %594, %595, %591 : vector<1x128xi1>, vector<1x128xf32>
    %cst_148 = arith.constant 0.000000e+00 : f32
    %597 = vector.broadcast %cst_148 : f32 to vector<1x128xf32>
    %598 = arith.subf %597, %588 : vector<1x128xf32>
    %599 = tpu.reciprocal %596 {approx = true} : vector<1x128xf32> -> vector<1x128xf32>
    %600 = arith.mulf %598, %599 : vector<1x128xf32>
    %cst_149 = arith.constant 9.99999996E-13 : f32
    %601 = vector.broadcast %cst_149 : f32 to vector<1x128xf32>
    %602 = arith.cmpf ogt, %591, %601 : vector<1x128xf32>
    %603 = arith.maximumf %571, %600 : vector<1x128xf32>
    %604 = arith.select %602, %603, %571 : vector<1x128xi1>, vector<1x128xf32>
    %cst_150 = arith.constant -9.99999996E-13 : f32
    %605 = vector.broadcast %cst_150 : f32 to vector<1x128xf32>
    %606 = arith.cmpf olt, %591, %605 : vector<1x128xf32>
    %607 = arith.minimumf %575, %600 : vector<1x128xf32>
    %608 = arith.select %606, %607, %575 : vector<1x128xi1>, vector<1x128xf32>
    %609 = math.absf %591 : vector<1x128xf32>
    %cst_151 = arith.constant 9.99999996E-13 : f32
    %610 = vector.broadcast %cst_151 : f32 to vector<1x128xf32>
    %611 = arith.cmpf ogt, %609, %610 : vector<1x128xf32>
    %cst_152 = arith.constant 0.000000e+00 : f32
    %612 = vector.broadcast %cst_152 : f32 to vector<1x128xf32>
    %613 = arith.cmpf oge, %588, %612 : vector<1x128xf32>
    %614 = arith.ori %611, %613 : vector<1x128xi1>
    %615 = arith.andi %582, %614 : vector<1x128xi1>
    %616 = arith.cmpf ogt, %608, %604 : vector<1x128xf32>
    %617 = arith.andi %615, %616 : vector<1x128xi1>
    %618 = arith.mulf %604, %479 : vector<1x128xf32>
    %619 = arith.addf %57, %618 : vector<1x128xf32>
    %620 = arith.mulf %604, %480 : vector<1x128xf32>
    %621 = arith.addf %61, %620 : vector<1x128xf32>
    %622 = arith.mulf %608, %479 : vector<1x128xf32>
    %623 = arith.addf %57, %622 : vector<1x128xf32>
    %624 = arith.mulf %608, %480 : vector<1x128xf32>
    %625 = arith.addf %61, %624 : vector<1x128xf32>
    %626 = arith.mulf %619, %625 : vector<1x128xf32>
    %627 = arith.mulf %623, %621 : vector<1x128xf32>
    %628 = arith.subf %626, %627 : vector<1x128xf32>
    %cst_153 = arith.constant 5.000000e-01 : f32
    %629 = vector.broadcast %cst_153 : f32 to vector<1x128xf32>
    %630 = arith.mulf %629, %628 : vector<1x128xf32>
    %cst_154 = arith.constant 0.000000e+00 : f32
    %631 = vector.broadcast %cst_154 : f32 to vector<1x128xf32>
    %632 = arith.select %617, %630, %631 : vector<1x128xi1>, vector<1x128xf32>
    %633 = arith.addf %478, %632 : vector<1x128xf32>
    %634 = arith.subf %33, %69 : vector<1x128xf32>
    %635 = arith.subf %37, %73 : vector<1x128xf32>
    %cst_155 = arith.constant 0.000000e+00 : f32
    %636 = vector.broadcast %cst_155 : f32 to vector<1x128xf32>
    %cst_156 = arith.constant 1.000000e+00 : f32
    %637 = vector.broadcast %cst_156 : f32 to vector<1x128xf32>
    %true_157 = arith.constant true
    %638 = vector.broadcast %true_157 : i1 to vector<1x128xi1>
    %639 = arith.mulf %128, %73 : vector<1x128xf32>
    %640 = arith.mulf %129, %69 : vector<1x128xf32>
    %641 = arith.subf %639, %640 : vector<1x128xf32>
    %642 = arith.subf %641, %132 : vector<1x128xf32>
    %cst_158 = arith.constant 0.000000e+00 : f32
    %643 = vector.broadcast %cst_158 : f32 to vector<1x128xf32>
    %644 = arith.subf %642, %643 : vector<1x128xf32>
    %645 = arith.mulf %128, %635 : vector<1x128xf32>
    %646 = arith.mulf %129, %634 : vector<1x128xf32>
    %647 = arith.subf %645, %646 : vector<1x128xf32>
    %648 = math.absf %647 : vector<1x128xf32>
    %cst_159 = arith.constant 9.99999996E-13 : f32
    %649 = vector.broadcast %cst_159 : f32 to vector<1x128xf32>
    %650 = arith.cmpf olt, %648, %649 : vector<1x128xf32>
    %cst_160 = arith.constant 9.99999996E-13 : f32
    %651 = vector.broadcast %cst_160 : f32 to vector<1x128xf32>
    %652 = arith.select %650, %651, %647 : vector<1x128xi1>, vector<1x128xf32>
    %cst_161 = arith.constant 0.000000e+00 : f32
    %653 = vector.broadcast %cst_161 : f32 to vector<1x128xf32>
    %654 = arith.subf %653, %644 : vector<1x128xf32>
    %655 = tpu.reciprocal %652 {approx = true} : vector<1x128xf32> -> vector<1x128xf32>
    %656 = arith.mulf %654, %655 : vector<1x128xf32>
    %cst_162 = arith.constant 9.99999996E-13 : f32
    %657 = vector.broadcast %cst_162 : f32 to vector<1x128xf32>
    %658 = arith.cmpf ogt, %647, %657 : vector<1x128xf32>
    %659 = arith.maximumf %636, %656 : vector<1x128xf32>
    %660 = arith.select %658, %659, %636 : vector<1x128xi1>, vector<1x128xf32>
    %cst_163 = arith.constant -9.99999996E-13 : f32
    %661 = vector.broadcast %cst_163 : f32 to vector<1x128xf32>
    %662 = arith.cmpf olt, %647, %661 : vector<1x128xf32>
    %663 = arith.minimumf %637, %656 : vector<1x128xf32>
    %664 = arith.select %662, %663, %637 : vector<1x128xi1>, vector<1x128xf32>
    %665 = math.absf %647 : vector<1x128xf32>
    %cst_164 = arith.constant 9.99999996E-13 : f32
    %666 = vector.broadcast %cst_164 : f32 to vector<1x128xf32>
    %667 = arith.cmpf ogt, %665, %666 : vector<1x128xf32>
    %cst_165 = arith.constant 0.000000e+00 : f32
    %668 = vector.broadcast %cst_165 : f32 to vector<1x128xf32>
    %669 = arith.cmpf oge, %644, %668 : vector<1x128xf32>
    %670 = arith.ori %667, %669 : vector<1x128xi1>
    %671 = arith.andi %638, %670 : vector<1x128xi1>
    %672 = arith.mulf %133, %73 : vector<1x128xf32>
    %673 = arith.mulf %134, %69 : vector<1x128xf32>
    %674 = arith.subf %672, %673 : vector<1x128xf32>
    %675 = arith.subf %674, %137 : vector<1x128xf32>
    %cst_166 = arith.constant 0.000000e+00 : f32
    %676 = vector.broadcast %cst_166 : f32 to vector<1x128xf32>
    %677 = arith.subf %675, %676 : vector<1x128xf32>
    %678 = arith.mulf %133, %635 : vector<1x128xf32>
    %679 = arith.mulf %134, %634 : vector<1x128xf32>
    %680 = arith.subf %678, %679 : vector<1x128xf32>
    %681 = math.absf %680 : vector<1x128xf32>
    %cst_167 = arith.constant 9.99999996E-13 : f32
    %682 = vector.broadcast %cst_167 : f32 to vector<1x128xf32>
    %683 = arith.cmpf olt, %681, %682 : vector<1x128xf32>
    %cst_168 = arith.constant 9.99999996E-13 : f32
    %684 = vector.broadcast %cst_168 : f32 to vector<1x128xf32>
    %685 = arith.select %683, %684, %680 : vector<1x128xi1>, vector<1x128xf32>
    %cst_169 = arith.constant 0.000000e+00 : f32
    %686 = vector.broadcast %cst_169 : f32 to vector<1x128xf32>
    %687 = arith.subf %686, %677 : vector<1x128xf32>
    %688 = tpu.reciprocal %685 {approx = true} : vector<1x128xf32> -> vector<1x128xf32>
    %689 = arith.mulf %687, %688 : vector<1x128xf32>
    %cst_170 = arith.constant 9.99999996E-13 : f32
    %690 = vector.broadcast %cst_170 : f32 to vector<1x128xf32>
    %691 = arith.cmpf ogt, %680, %690 : vector<1x128xf32>
    %692 = arith.maximumf %660, %689 : vector<1x128xf32>
    %693 = arith.select %691, %692, %660 : vector<1x128xi1>, vector<1x128xf32>
    %cst_171 = arith.constant -9.99999996E-13 : f32
    %694 = vector.broadcast %cst_171 : f32 to vector<1x128xf32>
    %695 = arith.cmpf olt, %680, %694 : vector<1x128xf32>
    %696 = arith.minimumf %664, %689 : vector<1x128xf32>
    %697 = arith.select %695, %696, %664 : vector<1x128xi1>, vector<1x128xf32>
    %698 = math.absf %680 : vector<1x128xf32>
    %cst_172 = arith.constant 9.99999996E-13 : f32
    %699 = vector.broadcast %cst_172 : f32 to vector<1x128xf32>
    %700 = arith.cmpf ogt, %698, %699 : vector<1x128xf32>
    %cst_173 = arith.constant 0.000000e+00 : f32
    %701 = vector.broadcast %cst_173 : f32 to vector<1x128xf32>
    %702 = arith.cmpf oge, %677, %701 : vector<1x128xf32>
    %703 = arith.ori %700, %702 : vector<1x128xi1>
    %704 = arith.andi %671, %703 : vector<1x128xi1>
    %705 = arith.mulf %138, %73 : vector<1x128xf32>
    %706 = arith.mulf %139, %69 : vector<1x128xf32>
    %707 = arith.subf %705, %706 : vector<1x128xf32>
    %708 = arith.subf %707, %142 : vector<1x128xf32>
    %cst_174 = arith.constant 0.000000e+00 : f32
    %709 = vector.broadcast %cst_174 : f32 to vector<1x128xf32>
    %710 = arith.subf %708, %709 : vector<1x128xf32>
    %711 = arith.mulf %138, %635 : vector<1x128xf32>
    %712 = arith.mulf %139, %634 : vector<1x128xf32>
    %713 = arith.subf %711, %712 : vector<1x128xf32>
    %714 = math.absf %713 : vector<1x128xf32>
    %cst_175 = arith.constant 9.99999996E-13 : f32
    %715 = vector.broadcast %cst_175 : f32 to vector<1x128xf32>
    %716 = arith.cmpf olt, %714, %715 : vector<1x128xf32>
    %cst_176 = arith.constant 9.99999996E-13 : f32
    %717 = vector.broadcast %cst_176 : f32 to vector<1x128xf32>
    %718 = arith.select %716, %717, %713 : vector<1x128xi1>, vector<1x128xf32>
    %cst_177 = arith.constant 0.000000e+00 : f32
    %719 = vector.broadcast %cst_177 : f32 to vector<1x128xf32>
    %720 = arith.subf %719, %710 : vector<1x128xf32>
    %721 = tpu.reciprocal %718 {approx = true} : vector<1x128xf32> -> vector<1x128xf32>
    %722 = arith.mulf %720, %721 : vector<1x128xf32>
    %cst_178 = arith.constant 9.99999996E-13 : f32
    %723 = vector.broadcast %cst_178 : f32 to vector<1x128xf32>
    %724 = arith.cmpf ogt, %713, %723 : vector<1x128xf32>
    %725 = arith.maximumf %693, %722 : vector<1x128xf32>
    %726 = arith.select %724, %725, %693 : vector<1x128xi1>, vector<1x128xf32>
    %cst_179 = arith.constant -9.99999996E-13 : f32
    %727 = vector.broadcast %cst_179 : f32 to vector<1x128xf32>
    %728 = arith.cmpf olt, %713, %727 : vector<1x128xf32>
    %729 = arith.minimumf %697, %722 : vector<1x128xf32>
    %730 = arith.select %728, %729, %697 : vector<1x128xi1>, vector<1x128xf32>
    %731 = math.absf %713 : vector<1x128xf32>
    %cst_180 = arith.constant 9.99999996E-13 : f32
    %732 = vector.broadcast %cst_180 : f32 to vector<1x128xf32>
    %733 = arith.cmpf ogt, %731, %732 : vector<1x128xf32>
    %cst_181 = arith.constant 0.000000e+00 : f32
    %734 = vector.broadcast %cst_181 : f32 to vector<1x128xf32>
    %735 = arith.cmpf oge, %710, %734 : vector<1x128xf32>
    %736 = arith.ori %733, %735 : vector<1x128xi1>
    %737 = arith.andi %704, %736 : vector<1x128xi1>
    %738 = arith.mulf %143, %73 : vector<1x128xf32>
    %739 = arith.mulf %144, %69 : vector<1x128xf32>
    %740 = arith.subf %738, %739 : vector<1x128xf32>
    %741 = arith.subf %740, %147 : vector<1x128xf32>
    %cst_182 = arith.constant 0.000000e+00 : f32
    %742 = vector.broadcast %cst_182 : f32 to vector<1x128xf32>
    %743 = arith.subf %741, %742 : vector<1x128xf32>
    %744 = arith.mulf %143, %635 : vector<1x128xf32>
    %745 = arith.mulf %144, %634 : vector<1x128xf32>
    %746 = arith.subf %744, %745 : vector<1x128xf32>
    %747 = math.absf %746 : vector<1x128xf32>
    %cst_183 = arith.constant 9.99999996E-13 : f32
    %748 = vector.broadcast %cst_183 : f32 to vector<1x128xf32>
    %749 = arith.cmpf olt, %747, %748 : vector<1x128xf32>
    %cst_184 = arith.constant 9.99999996E-13 : f32
    %750 = vector.broadcast %cst_184 : f32 to vector<1x128xf32>
    %751 = arith.select %749, %750, %746 : vector<1x128xi1>, vector<1x128xf32>
    %cst_185 = arith.constant 0.000000e+00 : f32
    %752 = vector.broadcast %cst_185 : f32 to vector<1x128xf32>
    %753 = arith.subf %752, %743 : vector<1x128xf32>
    %754 = tpu.reciprocal %751 {approx = true} : vector<1x128xf32> -> vector<1x128xf32>
    %755 = arith.mulf %753, %754 : vector<1x128xf32>
    %cst_186 = arith.constant 9.99999996E-13 : f32
    %756 = vector.broadcast %cst_186 : f32 to vector<1x128xf32>
    %757 = arith.cmpf ogt, %746, %756 : vector<1x128xf32>
    %758 = arith.maximumf %726, %755 : vector<1x128xf32>
    %759 = arith.select %757, %758, %726 : vector<1x128xi1>, vector<1x128xf32>
    %cst_187 = arith.constant -9.99999996E-13 : f32
    %760 = vector.broadcast %cst_187 : f32 to vector<1x128xf32>
    %761 = arith.cmpf olt, %746, %760 : vector<1x128xf32>
    %762 = arith.minimumf %730, %755 : vector<1x128xf32>
    %763 = arith.select %761, %762, %730 : vector<1x128xi1>, vector<1x128xf32>
    %764 = math.absf %746 : vector<1x128xf32>
    %cst_188 = arith.constant 9.99999996E-13 : f32
    %765 = vector.broadcast %cst_188 : f32 to vector<1x128xf32>
    %766 = arith.cmpf ogt, %764, %765 : vector<1x128xf32>
    %cst_189 = arith.constant 0.000000e+00 : f32
    %767 = vector.broadcast %cst_189 : f32 to vector<1x128xf32>
    %768 = arith.cmpf oge, %743, %767 : vector<1x128xf32>
    %769 = arith.ori %766, %768 : vector<1x128xi1>
    %770 = arith.andi %737, %769 : vector<1x128xi1>
    %771 = arith.cmpf ogt, %763, %759 : vector<1x128xf32>
    %772 = arith.andi %770, %771 : vector<1x128xi1>
    %773 = arith.mulf %759, %634 : vector<1x128xf32>
    %774 = arith.addf %69, %773 : vector<1x128xf32>
    %775 = arith.mulf %759, %635 : vector<1x128xf32>
    %776 = arith.addf %73, %775 : vector<1x128xf32>
    %777 = arith.mulf %763, %634 : vector<1x128xf32>
    %778 = arith.addf %69, %777 : vector<1x128xf32>
    %779 = arith.mulf %763, %635 : vector<1x128xf32>
    %780 = arith.addf %73, %779 : vector<1x128xf32>
    %781 = arith.mulf %774, %780 : vector<1x128xf32>
    %782 = arith.mulf %778, %776 : vector<1x128xf32>
    %783 = arith.subf %781, %782 : vector<1x128xf32>
    %cst_190 = arith.constant 5.000000e-01 : f32
    %784 = vector.broadcast %cst_190 : f32 to vector<1x128xf32>
    %785 = arith.mulf %784, %783 : vector<1x128xf32>
    %cst_191 = arith.constant 0.000000e+00 : f32
    %786 = vector.broadcast %cst_191 : f32 to vector<1x128xf32>
    %787 = arith.select %772, %785, %786 : vector<1x128xi1>, vector<1x128xf32>
    %788 = arith.addf %633, %787 : vector<1x128xf32>
    %789 = arith.subf %99, %87 : vector<1x128xf32>
    %790 = arith.subf %103, %91 : vector<1x128xf32>
    %cst_192 = arith.constant 0.000000e+00 : f32
    %791 = vector.broadcast %cst_192 : f32 to vector<1x128xf32>
    %cst_193 = arith.constant 1.000000e+00 : f32
    %792 = vector.broadcast %cst_193 : f32 to vector<1x128xf32>
    %true_194 = arith.constant true
    %793 = vector.broadcast %true_194 : i1 to vector<1x128xi1>
    %794 = arith.mulf %148, %91 : vector<1x128xf32>
    %795 = arith.mulf %149, %87 : vector<1x128xf32>
    %796 = arith.subf %794, %795 : vector<1x128xf32>
    %797 = arith.subf %796, %152 : vector<1x128xf32>
    %cst_195 = arith.constant 9.99999997E-7 : f32
    %798 = vector.broadcast %cst_195 : f32 to vector<1x128xf32>
    %799 = arith.subf %797, %798 : vector<1x128xf32>
    %800 = arith.mulf %148, %790 : vector<1x128xf32>
    %801 = arith.mulf %149, %789 : vector<1x128xf32>
    %802 = arith.subf %800, %801 : vector<1x128xf32>
    %803 = math.absf %802 : vector<1x128xf32>
    %cst_196 = arith.constant 9.99999996E-13 : f32
    %804 = vector.broadcast %cst_196 : f32 to vector<1x128xf32>
    %805 = arith.cmpf olt, %803, %804 : vector<1x128xf32>
    %cst_197 = arith.constant 9.99999996E-13 : f32
    %806 = vector.broadcast %cst_197 : f32 to vector<1x128xf32>
    %807 = arith.select %805, %806, %802 : vector<1x128xi1>, vector<1x128xf32>
    %cst_198 = arith.constant 0.000000e+00 : f32
    %808 = vector.broadcast %cst_198 : f32 to vector<1x128xf32>
    %809 = arith.subf %808, %799 : vector<1x128xf32>
    %810 = tpu.reciprocal %807 {approx = true} : vector<1x128xf32> -> vector<1x128xf32>
    %811 = arith.mulf %809, %810 : vector<1x128xf32>
    %cst_199 = arith.constant 9.99999996E-13 : f32
    %812 = vector.broadcast %cst_199 : f32 to vector<1x128xf32>
    %813 = arith.cmpf ogt, %802, %812 : vector<1x128xf32>
    %814 = arith.maximumf %791, %811 : vector<1x128xf32>
    %815 = arith.select %813, %814, %791 : vector<1x128xi1>, vector<1x128xf32>
    %cst_200 = arith.constant -9.99999996E-13 : f32
    %816 = vector.broadcast %cst_200 : f32 to vector<1x128xf32>
    %817 = arith.cmpf olt, %802, %816 : vector<1x128xf32>
    %818 = arith.minimumf %792, %811 : vector<1x128xf32>
    %819 = arith.select %817, %818, %792 : vector<1x128xi1>, vector<1x128xf32>
    %820 = math.absf %802 : vector<1x128xf32>
    %cst_201 = arith.constant 9.99999996E-13 : f32
    %821 = vector.broadcast %cst_201 : f32 to vector<1x128xf32>
    %822 = arith.cmpf ogt, %820, %821 : vector<1x128xf32>
    %cst_202 = arith.constant 0.000000e+00 : f32
    %823 = vector.broadcast %cst_202 : f32 to vector<1x128xf32>
    %824 = arith.cmpf oge, %799, %823 : vector<1x128xf32>
    %825 = arith.ori %822, %824 : vector<1x128xi1>
    %826 = arith.andi %793, %825 : vector<1x128xi1>
    %827 = arith.mulf %153, %91 : vector<1x128xf32>
    %828 = arith.mulf %154, %87 : vector<1x128xf32>
    %829 = arith.subf %827, %828 : vector<1x128xf32>
    %830 = arith.subf %829, %157 : vector<1x128xf32>
    %cst_203 = arith.constant 9.99999997E-7 : f32
    %831 = vector.broadcast %cst_203 : f32 to vector<1x128xf32>
    %832 = arith.subf %830, %831 : vector<1x128xf32>
    %833 = arith.mulf %153, %790 : vector<1x128xf32>
    %834 = arith.mulf %154, %789 : vector<1x128xf32>
    %835 = arith.subf %833, %834 : vector<1x128xf32>
    %836 = math.absf %835 : vector<1x128xf32>
    %cst_204 = arith.constant 9.99999996E-13 : f32
    %837 = vector.broadcast %cst_204 : f32 to vector<1x128xf32>
    %838 = arith.cmpf olt, %836, %837 : vector<1x128xf32>
    %cst_205 = arith.constant 9.99999996E-13 : f32
    %839 = vector.broadcast %cst_205 : f32 to vector<1x128xf32>
    %840 = arith.select %838, %839, %835 : vector<1x128xi1>, vector<1x128xf32>
    %cst_206 = arith.constant 0.000000e+00 : f32
    %841 = vector.broadcast %cst_206 : f32 to vector<1x128xf32>
    %842 = arith.subf %841, %832 : vector<1x128xf32>
    %843 = tpu.reciprocal %840 {approx = true} : vector<1x128xf32> -> vector<1x128xf32>
    %844 = arith.mulf %842, %843 : vector<1x128xf32>
    %cst_207 = arith.constant 9.99999996E-13 : f32
    %845 = vector.broadcast %cst_207 : f32 to vector<1x128xf32>
    %846 = arith.cmpf ogt, %835, %845 : vector<1x128xf32>
    %847 = arith.maximumf %815, %844 : vector<1x128xf32>
    %848 = arith.select %846, %847, %815 : vector<1x128xi1>, vector<1x128xf32>
    %cst_208 = arith.constant -9.99999996E-13 : f32
    %849 = vector.broadcast %cst_208 : f32 to vector<1x128xf32>
    %850 = arith.cmpf olt, %835, %849 : vector<1x128xf32>
    %851 = arith.minimumf %819, %844 : vector<1x128xf32>
    %852 = arith.select %850, %851, %819 : vector<1x128xi1>, vector<1x128xf32>
    %853 = math.absf %835 : vector<1x128xf32>
    %cst_209 = arith.constant 9.99999996E-13 : f32
    %854 = vector.broadcast %cst_209 : f32 to vector<1x128xf32>
    %855 = arith.cmpf ogt, %853, %854 : vector<1x128xf32>
    %cst_210 = arith.constant 0.000000e+00 : f32
    %856 = vector.broadcast %cst_210 : f32 to vector<1x128xf32>
    %857 = arith.cmpf oge, %832, %856 : vector<1x128xf32>
    %858 = arith.ori %855, %857 : vector<1x128xi1>
    %859 = arith.andi %826, %858 : vector<1x128xi1>
    %860 = arith.mulf %158, %91 : vector<1x128xf32>
    %861 = arith.mulf %159, %87 : vector<1x128xf32>
    %862 = arith.subf %860, %861 : vector<1x128xf32>
    %863 = arith.subf %862, %162 : vector<1x128xf32>
    %cst_211 = arith.constant 9.99999997E-7 : f32
    %864 = vector.broadcast %cst_211 : f32 to vector<1x128xf32>
    %865 = arith.subf %863, %864 : vector<1x128xf32>
    %866 = arith.mulf %158, %790 : vector<1x128xf32>
    %867 = arith.mulf %159, %789 : vector<1x128xf32>
    %868 = arith.subf %866, %867 : vector<1x128xf32>
    %869 = math.absf %868 : vector<1x128xf32>
    %cst_212 = arith.constant 9.99999996E-13 : f32
    %870 = vector.broadcast %cst_212 : f32 to vector<1x128xf32>
    %871 = arith.cmpf olt, %869, %870 : vector<1x128xf32>
    %cst_213 = arith.constant 9.99999996E-13 : f32
    %872 = vector.broadcast %cst_213 : f32 to vector<1x128xf32>
    %873 = arith.select %871, %872, %868 : vector<1x128xi1>, vector<1x128xf32>
    %cst_214 = arith.constant 0.000000e+00 : f32
    %874 = vector.broadcast %cst_214 : f32 to vector<1x128xf32>
    %875 = arith.subf %874, %865 : vector<1x128xf32>
    %876 = tpu.reciprocal %873 {approx = true} : vector<1x128xf32> -> vector<1x128xf32>
    %877 = arith.mulf %875, %876 : vector<1x128xf32>
    %cst_215 = arith.constant 9.99999996E-13 : f32
    %878 = vector.broadcast %cst_215 : f32 to vector<1x128xf32>
    %879 = arith.cmpf ogt, %868, %878 : vector<1x128xf32>
    %880 = arith.maximumf %848, %877 : vector<1x128xf32>
    %881 = arith.select %879, %880, %848 : vector<1x128xi1>, vector<1x128xf32>
    %cst_216 = arith.constant -9.99999996E-13 : f32
    %882 = vector.broadcast %cst_216 : f32 to vector<1x128xf32>
    %883 = arith.cmpf olt, %868, %882 : vector<1x128xf32>
    %884 = arith.minimumf %852, %877 : vector<1x128xf32>
    %885 = arith.select %883, %884, %852 : vector<1x128xi1>, vector<1x128xf32>
    %886 = math.absf %868 : vector<1x128xf32>
    %cst_217 = arith.constant 9.99999996E-13 : f32
    %887 = vector.broadcast %cst_217 : f32 to vector<1x128xf32>
    %888 = arith.cmpf ogt, %886, %887 : vector<1x128xf32>
    %cst_218 = arith.constant 0.000000e+00 : f32
    %889 = vector.broadcast %cst_218 : f32 to vector<1x128xf32>
    %890 = arith.cmpf oge, %865, %889 : vector<1x128xf32>
    %891 = arith.ori %888, %890 : vector<1x128xi1>
    %892 = arith.andi %859, %891 : vector<1x128xi1>
    %893 = arith.mulf %163, %91 : vector<1x128xf32>
    %894 = arith.mulf %164, %87 : vector<1x128xf32>
    %895 = arith.subf %893, %894 : vector<1x128xf32>
    %896 = arith.subf %895, %167 : vector<1x128xf32>
    %cst_219 = arith.constant 9.99999997E-7 : f32
    %897 = vector.broadcast %cst_219 : f32 to vector<1x128xf32>
    %898 = arith.subf %896, %897 : vector<1x128xf32>
    %899 = arith.mulf %163, %790 : vector<1x128xf32>
    %900 = arith.mulf %164, %789 : vector<1x128xf32>
    %901 = arith.subf %899, %900 : vector<1x128xf32>
    %902 = math.absf %901 : vector<1x128xf32>
    %cst_220 = arith.constant 9.99999996E-13 : f32
    %903 = vector.broadcast %cst_220 : f32 to vector<1x128xf32>
    %904 = arith.cmpf olt, %902, %903 : vector<1x128xf32>
    %cst_221 = arith.constant 9.99999996E-13 : f32
    %905 = vector.broadcast %cst_221 : f32 to vector<1x128xf32>
    %906 = arith.select %904, %905, %901 : vector<1x128xi1>, vector<1x128xf32>
    %cst_222 = arith.constant 0.000000e+00 : f32
    %907 = vector.broadcast %cst_222 : f32 to vector<1x128xf32>
    %908 = arith.subf %907, %898 : vector<1x128xf32>
    %909 = tpu.reciprocal %906 {approx = true} : vector<1x128xf32> -> vector<1x128xf32>
    %910 = arith.mulf %908, %909 : vector<1x128xf32>
    %cst_223 = arith.constant 9.99999996E-13 : f32
    %911 = vector.broadcast %cst_223 : f32 to vector<1x128xf32>
    %912 = arith.cmpf ogt, %901, %911 : vector<1x128xf32>
    %913 = arith.maximumf %881, %910 : vector<1x128xf32>
    %914 = arith.select %912, %913, %881 : vector<1x128xi1>, vector<1x128xf32>
    %cst_224 = arith.constant -9.99999996E-13 : f32
    %915 = vector.broadcast %cst_224 : f32 to vector<1x128xf32>
    %916 = arith.cmpf olt, %901, %915 : vector<1x128xf32>
    %917 = arith.minimumf %885, %910 : vector<1x128xf32>
    %918 = arith.select %916, %917, %885 : vector<1x128xi1>, vector<1x128xf32>
    %919 = math.absf %901 : vector<1x128xf32>
    %cst_225 = arith.constant 9.99999996E-13 : f32
    %920 = vector.broadcast %cst_225 : f32 to vector<1x128xf32>
    %921 = arith.cmpf ogt, %919, %920 : vector<1x128xf32>
    %cst_226 = arith.constant 0.000000e+00 : f32
    %922 = vector.broadcast %cst_226 : f32 to vector<1x128xf32>
    %923 = arith.cmpf oge, %898, %922 : vector<1x128xf32>
    %924 = arith.ori %921, %923 : vector<1x128xi1>
    %925 = arith.andi %892, %924 : vector<1x128xi1>
    %926 = arith.cmpf ogt, %918, %914 : vector<1x128xf32>
    %927 = arith.andi %925, %926 : vector<1x128xi1>
    %928 = arith.mulf %914, %789 : vector<1x128xf32>
    %929 = arith.addf %87, %928 : vector<1x128xf32>
    %930 = arith.mulf %914, %790 : vector<1x128xf32>
    %931 = arith.addf %91, %930 : vector<1x128xf32>
    %932 = arith.mulf %918, %789 : vector<1x128xf32>
    %933 = arith.addf %87, %932 : vector<1x128xf32>
    %934 = arith.mulf %918, %790 : vector<1x128xf32>
    %935 = arith.addf %91, %934 : vector<1x128xf32>
    %936 = arith.mulf %929, %935 : vector<1x128xf32>
    %937 = arith.mulf %933, %931 : vector<1x128xf32>
    %938 = arith.subf %936, %937 : vector<1x128xf32>
    %cst_227 = arith.constant 5.000000e-01 : f32
    %939 = vector.broadcast %cst_227 : f32 to vector<1x128xf32>
    %940 = arith.mulf %939, %938 : vector<1x128xf32>
    %cst_228 = arith.constant 0.000000e+00 : f32
    %941 = vector.broadcast %cst_228 : f32 to vector<1x128xf32>
    %942 = arith.select %927, %940, %941 : vector<1x128xi1>, vector<1x128xf32>
    %943 = arith.addf %788, %942 : vector<1x128xf32>
    %944 = arith.subf %111, %99 : vector<1x128xf32>
    %945 = arith.subf %115, %103 : vector<1x128xf32>
    %cst_229 = arith.constant 0.000000e+00 : f32
    %946 = vector.broadcast %cst_229 : f32 to vector<1x128xf32>
    %cst_230 = arith.constant 1.000000e+00 : f32
    %947 = vector.broadcast %cst_230 : f32 to vector<1x128xf32>
    %true_231 = arith.constant true
    %948 = vector.broadcast %true_231 : i1 to vector<1x128xi1>
    %949 = arith.mulf %148, %103 : vector<1x128xf32>
    %950 = arith.mulf %149, %99 : vector<1x128xf32>
    %951 = arith.subf %949, %950 : vector<1x128xf32>
    %952 = arith.subf %951, %152 : vector<1x128xf32>
    %cst_232 = arith.constant 9.99999997E-7 : f32
    %953 = vector.broadcast %cst_232 : f32 to vector<1x128xf32>
    %954 = arith.subf %952, %953 : vector<1x128xf32>
    %955 = arith.mulf %148, %945 : vector<1x128xf32>
    %956 = arith.mulf %149, %944 : vector<1x128xf32>
    %957 = arith.subf %955, %956 : vector<1x128xf32>
    %958 = math.absf %957 : vector<1x128xf32>
    %cst_233 = arith.constant 9.99999996E-13 : f32
    %959 = vector.broadcast %cst_233 : f32 to vector<1x128xf32>
    %960 = arith.cmpf olt, %958, %959 : vector<1x128xf32>
    %cst_234 = arith.constant 9.99999996E-13 : f32
    %961 = vector.broadcast %cst_234 : f32 to vector<1x128xf32>
    %962 = arith.select %960, %961, %957 : vector<1x128xi1>, vector<1x128xf32>
    %cst_235 = arith.constant 0.000000e+00 : f32
    %963 = vector.broadcast %cst_235 : f32 to vector<1x128xf32>
    %964 = arith.subf %963, %954 : vector<1x128xf32>
    %965 = tpu.reciprocal %962 {approx = true} : vector<1x128xf32> -> vector<1x128xf32>
    %966 = arith.mulf %964, %965 : vector<1x128xf32>
    %cst_236 = arith.constant 9.99999996E-13 : f32
    %967 = vector.broadcast %cst_236 : f32 to vector<1x128xf32>
    %968 = arith.cmpf ogt, %957, %967 : vector<1x128xf32>
    %969 = arith.maximumf %946, %966 : vector<1x128xf32>
    %970 = arith.select %968, %969, %946 : vector<1x128xi1>, vector<1x128xf32>
    %cst_237 = arith.constant -9.99999996E-13 : f32
    %971 = vector.broadcast %cst_237 : f32 to vector<1x128xf32>
    %972 = arith.cmpf olt, %957, %971 : vector<1x128xf32>
    %973 = arith.minimumf %947, %966 : vector<1x128xf32>
    %974 = arith.select %972, %973, %947 : vector<1x128xi1>, vector<1x128xf32>
    %975 = math.absf %957 : vector<1x128xf32>
    %cst_238 = arith.constant 9.99999996E-13 : f32
    %976 = vector.broadcast %cst_238 : f32 to vector<1x128xf32>
    %977 = arith.cmpf ogt, %975, %976 : vector<1x128xf32>
    %cst_239 = arith.constant 0.000000e+00 : f32
    %978 = vector.broadcast %cst_239 : f32 to vector<1x128xf32>
    %979 = arith.cmpf oge, %954, %978 : vector<1x128xf32>
    %980 = arith.ori %977, %979 : vector<1x128xi1>
    %981 = arith.andi %948, %980 : vector<1x128xi1>
    %982 = arith.mulf %153, %103 : vector<1x128xf32>
    %983 = arith.mulf %154, %99 : vector<1x128xf32>
    %984 = arith.subf %982, %983 : vector<1x128xf32>
    %985 = arith.subf %984, %157 : vector<1x128xf32>
    %cst_240 = arith.constant 9.99999997E-7 : f32
    %986 = vector.broadcast %cst_240 : f32 to vector<1x128xf32>
    %987 = arith.subf %985, %986 : vector<1x128xf32>
    %988 = arith.mulf %153, %945 : vector<1x128xf32>
    %989 = arith.mulf %154, %944 : vector<1x128xf32>
    %990 = arith.subf %988, %989 : vector<1x128xf32>
    %991 = math.absf %990 : vector<1x128xf32>
    %cst_241 = arith.constant 9.99999996E-13 : f32
    %992 = vector.broadcast %cst_241 : f32 to vector<1x128xf32>
    %993 = arith.cmpf olt, %991, %992 : vector<1x128xf32>
    %cst_242 = arith.constant 9.99999996E-13 : f32
    %994 = vector.broadcast %cst_242 : f32 to vector<1x128xf32>
    %995 = arith.select %993, %994, %990 : vector<1x128xi1>, vector<1x128xf32>
    %cst_243 = arith.constant 0.000000e+00 : f32
    %996 = vector.broadcast %cst_243 : f32 to vector<1x128xf32>
    %997 = arith.subf %996, %987 : vector<1x128xf32>
    %998 = tpu.reciprocal %995 {approx = true} : vector<1x128xf32> -> vector<1x128xf32>
    %999 = arith.mulf %997, %998 : vector<1x128xf32>
    %cst_244 = arith.constant 9.99999996E-13 : f32
    %1000 = vector.broadcast %cst_244 : f32 to vector<1x128xf32>
    %1001 = arith.cmpf ogt, %990, %1000 : vector<1x128xf32>
    %1002 = arith.maximumf %970, %999 : vector<1x128xf32>
    %1003 = arith.select %1001, %1002, %970 : vector<1x128xi1>, vector<1x128xf32>
    %cst_245 = arith.constant -9.99999996E-13 : f32
    %1004 = vector.broadcast %cst_245 : f32 to vector<1x128xf32>
    %1005 = arith.cmpf olt, %990, %1004 : vector<1x128xf32>
    %1006 = arith.minimumf %974, %999 : vector<1x128xf32>
    %1007 = arith.select %1005, %1006, %974 : vector<1x128xi1>, vector<1x128xf32>
    %1008 = math.absf %990 : vector<1x128xf32>
    %cst_246 = arith.constant 9.99999996E-13 : f32
    %1009 = vector.broadcast %cst_246 : f32 to vector<1x128xf32>
    %1010 = arith.cmpf ogt, %1008, %1009 : vector<1x128xf32>
    %cst_247 = arith.constant 0.000000e+00 : f32
    %1011 = vector.broadcast %cst_247 : f32 to vector<1x128xf32>
    %1012 = arith.cmpf oge, %987, %1011 : vector<1x128xf32>
    %1013 = arith.ori %1010, %1012 : vector<1x128xi1>
    %1014 = arith.andi %981, %1013 : vector<1x128xi1>
    %1015 = arith.mulf %158, %103 : vector<1x128xf32>
    %1016 = arith.mulf %159, %99 : vector<1x128xf32>
    %1017 = arith.subf %1015, %1016 : vector<1x128xf32>
    %1018 = arith.subf %1017, %162 : vector<1x128xf32>
    %cst_248 = arith.constant 9.99999997E-7 : f32
    %1019 = vector.broadcast %cst_248 : f32 to vector<1x128xf32>
    %1020 = arith.subf %1018, %1019 : vector<1x128xf32>
    %1021 = arith.mulf %158, %945 : vector<1x128xf32>
    %1022 = arith.mulf %159, %944 : vector<1x128xf32>
    %1023 = arith.subf %1021, %1022 : vector<1x128xf32>
    %1024 = math.absf %1023 : vector<1x128xf32>
    %cst_249 = arith.constant 9.99999996E-13 : f32
    %1025 = vector.broadcast %cst_249 : f32 to vector<1x128xf32>
    %1026 = arith.cmpf olt, %1024, %1025 : vector<1x128xf32>
    %cst_250 = arith.constant 9.99999996E-13 : f32
    %1027 = vector.broadcast %cst_250 : f32 to vector<1x128xf32>
    %1028 = arith.select %1026, %1027, %1023 : vector<1x128xi1>, vector<1x128xf32>
    %cst_251 = arith.constant 0.000000e+00 : f32
    %1029 = vector.broadcast %cst_251 : f32 to vector<1x128xf32>
    %1030 = arith.subf %1029, %1020 : vector<1x128xf32>
    %1031 = tpu.reciprocal %1028 {approx = true} : vector<1x128xf32> -> vector<1x128xf32>
    %1032 = arith.mulf %1030, %1031 : vector<1x128xf32>
    %cst_252 = arith.constant 9.99999996E-13 : f32
    %1033 = vector.broadcast %cst_252 : f32 to vector<1x128xf32>
    %1034 = arith.cmpf ogt, %1023, %1033 : vector<1x128xf32>
    %1035 = arith.maximumf %1003, %1032 : vector<1x128xf32>
    %1036 = arith.select %1034, %1035, %1003 : vector<1x128xi1>, vector<1x128xf32>
    %cst_253 = arith.constant -9.99999996E-13 : f32
    %1037 = vector.broadcast %cst_253 : f32 to vector<1x128xf32>
    %1038 = arith.cmpf olt, %1023, %1037 : vector<1x128xf32>
    %1039 = arith.minimumf %1007, %1032 : vector<1x128xf32>
    %1040 = arith.select %1038, %1039, %1007 : vector<1x128xi1>, vector<1x128xf32>
    %1041 = math.absf %1023 : vector<1x128xf32>
    %cst_254 = arith.constant 9.99999996E-13 : f32
    %1042 = vector.broadcast %cst_254 : f32 to vector<1x128xf32>
    %1043 = arith.cmpf ogt, %1041, %1042 : vector<1x128xf32>
    %cst_255 = arith.constant 0.000000e+00 : f32
    %1044 = vector.broadcast %cst_255 : f32 to vector<1x128xf32>
    %1045 = arith.cmpf oge, %1020, %1044 : vector<1x128xf32>
    %1046 = arith.ori %1043, %1045 : vector<1x128xi1>
    %1047 = arith.andi %1014, %1046 : vector<1x128xi1>
    %1048 = arith.mulf %163, %103 : vector<1x128xf32>
    %1049 = arith.mulf %164, %99 : vector<1x128xf32>
    %1050 = arith.subf %1048, %1049 : vector<1x128xf32>
    %1051 = arith.subf %1050, %167 : vector<1x128xf32>
    %cst_256 = arith.constant 9.99999997E-7 : f32
    %1052 = vector.broadcast %cst_256 : f32 to vector<1x128xf32>
    %1053 = arith.subf %1051, %1052 : vector<1x128xf32>
    %1054 = arith.mulf %163, %945 : vector<1x128xf32>
    %1055 = arith.mulf %164, %944 : vector<1x128xf32>
    %1056 = arith.subf %1054, %1055 : vector<1x128xf32>
    %1057 = math.absf %1056 : vector<1x128xf32>
    %cst_257 = arith.constant 9.99999996E-13 : f32
    %1058 = vector.broadcast %cst_257 : f32 to vector<1x128xf32>
    %1059 = arith.cmpf olt, %1057, %1058 : vector<1x128xf32>
    %cst_258 = arith.constant 9.99999996E-13 : f32
    %1060 = vector.broadcast %cst_258 : f32 to vector<1x128xf32>
    %1061 = arith.select %1059, %1060, %1056 : vector<1x128xi1>, vector<1x128xf32>
    %cst_259 = arith.constant 0.000000e+00 : f32
    %1062 = vector.broadcast %cst_259 : f32 to vector<1x128xf32>
    %1063 = arith.subf %1062, %1053 : vector<1x128xf32>
    %1064 = tpu.reciprocal %1061 {approx = true} : vector<1x128xf32> -> vector<1x128xf32>
    %1065 = arith.mulf %1063, %1064 : vector<1x128xf32>
    %cst_260 = arith.constant 9.99999996E-13 : f32
    %1066 = vector.broadcast %cst_260 : f32 to vector<1x128xf32>
    %1067 = arith.cmpf ogt, %1056, %1066 : vector<1x128xf32>
    %1068 = arith.maximumf %1036, %1065 : vector<1x128xf32>
    %1069 = arith.select %1067, %1068, %1036 : vector<1x128xi1>, vector<1x128xf32>
    %cst_261 = arith.constant -9.99999996E-13 : f32
    %1070 = vector.broadcast %cst_261 : f32 to vector<1x128xf32>
    %1071 = arith.cmpf olt, %1056, %1070 : vector<1x128xf32>
    %1072 = arith.minimumf %1040, %1065 : vector<1x128xf32>
    %1073 = arith.select %1071, %1072, %1040 : vector<1x128xi1>, vector<1x128xf32>
    %1074 = math.absf %1056 : vector<1x128xf32>
    %cst_262 = arith.constant 9.99999996E-13 : f32
    %1075 = vector.broadcast %cst_262 : f32 to vector<1x128xf32>
    %1076 = arith.cmpf ogt, %1074, %1075 : vector<1x128xf32>
    %cst_263 = arith.constant 0.000000e+00 : f32
    %1077 = vector.broadcast %cst_263 : f32 to vector<1x128xf32>
    %1078 = arith.cmpf oge, %1053, %1077 : vector<1x128xf32>
    %1079 = arith.ori %1076, %1078 : vector<1x128xi1>
    %1080 = arith.andi %1047, %1079 : vector<1x128xi1>
    %1081 = arith.cmpf ogt, %1073, %1069 : vector<1x128xf32>
    %1082 = arith.andi %1080, %1081 : vector<1x128xi1>
    %1083 = arith.mulf %1069, %944 : vector<1x128xf32>
    %1084 = arith.addf %99, %1083 : vector<1x128xf32>
    %1085 = arith.mulf %1069, %945 : vector<1x128xf32>
    %1086 = arith.addf %103, %1085 : vector<1x128xf32>
    %1087 = arith.mulf %1073, %944 : vector<1x128xf32>
    %1088 = arith.addf %99, %1087 : vector<1x128xf32>
    %1089 = arith.mulf %1073, %945 : vector<1x128xf32>
    %1090 = arith.addf %103, %1089 : vector<1x128xf32>
    %1091 = arith.mulf %1084, %1090 : vector<1x128xf32>
    %1092 = arith.mulf %1088, %1086 : vector<1x128xf32>
    %1093 = arith.subf %1091, %1092 : vector<1x128xf32>
    %cst_264 = arith.constant 5.000000e-01 : f32
    %1094 = vector.broadcast %cst_264 : f32 to vector<1x128xf32>
    %1095 = arith.mulf %1094, %1093 : vector<1x128xf32>
    %cst_265 = arith.constant 0.000000e+00 : f32
    %1096 = vector.broadcast %cst_265 : f32 to vector<1x128xf32>
    %1097 = arith.select %1082, %1095, %1096 : vector<1x128xi1>, vector<1x128xf32>
    %1098 = arith.addf %943, %1097 : vector<1x128xf32>
    %1099 = arith.subf %123, %111 : vector<1x128xf32>
    %1100 = arith.subf %127, %115 : vector<1x128xf32>
    %cst_266 = arith.constant 0.000000e+00 : f32
    %1101 = vector.broadcast %cst_266 : f32 to vector<1x128xf32>
    %cst_267 = arith.constant 1.000000e+00 : f32
    %1102 = vector.broadcast %cst_267 : f32 to vector<1x128xf32>
    %true_268 = arith.constant true
    %1103 = vector.broadcast %true_268 : i1 to vector<1x128xi1>
    %1104 = arith.mulf %148, %115 : vector<1x128xf32>
    %1105 = arith.mulf %149, %111 : vector<1x128xf32>
    %1106 = arith.subf %1104, %1105 : vector<1x128xf32>
    %1107 = arith.subf %1106, %152 : vector<1x128xf32>
    %cst_269 = arith.constant 9.99999997E-7 : f32
    %1108 = vector.broadcast %cst_269 : f32 to vector<1x128xf32>
    %1109 = arith.subf %1107, %1108 : vector<1x128xf32>
    %1110 = arith.mulf %148, %1100 : vector<1x128xf32>
    %1111 = arith.mulf %149, %1099 : vector<1x128xf32>
    %1112 = arith.subf %1110, %1111 : vector<1x128xf32>
    %1113 = math.absf %1112 : vector<1x128xf32>
    %cst_270 = arith.constant 9.99999996E-13 : f32
    %1114 = vector.broadcast %cst_270 : f32 to vector<1x128xf32>
    %1115 = arith.cmpf olt, %1113, %1114 : vector<1x128xf32>
    %cst_271 = arith.constant 9.99999996E-13 : f32
    %1116 = vector.broadcast %cst_271 : f32 to vector<1x128xf32>
    %1117 = arith.select %1115, %1116, %1112 : vector<1x128xi1>, vector<1x128xf32>
    %cst_272 = arith.constant 0.000000e+00 : f32
    %1118 = vector.broadcast %cst_272 : f32 to vector<1x128xf32>
    %1119 = arith.subf %1118, %1109 : vector<1x128xf32>
    %1120 = tpu.reciprocal %1117 {approx = true} : vector<1x128xf32> -> vector<1x128xf32>
    %1121 = arith.mulf %1119, %1120 : vector<1x128xf32>
    %cst_273 = arith.constant 9.99999996E-13 : f32
    %1122 = vector.broadcast %cst_273 : f32 to vector<1x128xf32>
    %1123 = arith.cmpf ogt, %1112, %1122 : vector<1x128xf32>
    %1124 = arith.maximumf %1101, %1121 : vector<1x128xf32>
    %1125 = arith.select %1123, %1124, %1101 : vector<1x128xi1>, vector<1x128xf32>
    %cst_274 = arith.constant -9.99999996E-13 : f32
    %1126 = vector.broadcast %cst_274 : f32 to vector<1x128xf32>
    %1127 = arith.cmpf olt, %1112, %1126 : vector<1x128xf32>
    %1128 = arith.minimumf %1102, %1121 : vector<1x128xf32>
    %1129 = arith.select %1127, %1128, %1102 : vector<1x128xi1>, vector<1x128xf32>
    %1130 = math.absf %1112 : vector<1x128xf32>
    %cst_275 = arith.constant 9.99999996E-13 : f32
    %1131 = vector.broadcast %cst_275 : f32 to vector<1x128xf32>
    %1132 = arith.cmpf ogt, %1130, %1131 : vector<1x128xf32>
    %cst_276 = arith.constant 0.000000e+00 : f32
    %1133 = vector.broadcast %cst_276 : f32 to vector<1x128xf32>
    %1134 = arith.cmpf oge, %1109, %1133 : vector<1x128xf32>
    %1135 = arith.ori %1132, %1134 : vector<1x128xi1>
    %1136 = arith.andi %1103, %1135 : vector<1x128xi1>
    %1137 = arith.mulf %153, %115 : vector<1x128xf32>
    %1138 = arith.mulf %154, %111 : vector<1x128xf32>
    %1139 = arith.subf %1137, %1138 : vector<1x128xf32>
    %1140 = arith.subf %1139, %157 : vector<1x128xf32>
    %cst_277 = arith.constant 9.99999997E-7 : f32
    %1141 = vector.broadcast %cst_277 : f32 to vector<1x128xf32>
    %1142 = arith.subf %1140, %1141 : vector<1x128xf32>
    %1143 = arith.mulf %153, %1100 : vector<1x128xf32>
    %1144 = arith.mulf %154, %1099 : vector<1x128xf32>
    %1145 = arith.subf %1143, %1144 : vector<1x128xf32>
    %1146 = math.absf %1145 : vector<1x128xf32>
    %cst_278 = arith.constant 9.99999996E-13 : f32
    %1147 = vector.broadcast %cst_278 : f32 to vector<1x128xf32>
    %1148 = arith.cmpf olt, %1146, %1147 : vector<1x128xf32>
    %cst_279 = arith.constant 9.99999996E-13 : f32
    %1149 = vector.broadcast %cst_279 : f32 to vector<1x128xf32>
    %1150 = arith.select %1148, %1149, %1145 : vector<1x128xi1>, vector<1x128xf32>
    %cst_280 = arith.constant 0.000000e+00 : f32
    %1151 = vector.broadcast %cst_280 : f32 to vector<1x128xf32>
    %1152 = arith.subf %1151, %1142 : vector<1x128xf32>
    %1153 = tpu.reciprocal %1150 {approx = true} : vector<1x128xf32> -> vector<1x128xf32>
    %1154 = arith.mulf %1152, %1153 : vector<1x128xf32>
    %cst_281 = arith.constant 9.99999996E-13 : f32
    %1155 = vector.broadcast %cst_281 : f32 to vector<1x128xf32>
    %1156 = arith.cmpf ogt, %1145, %1155 : vector<1x128xf32>
    %1157 = arith.maximumf %1125, %1154 : vector<1x128xf32>
    %1158 = arith.select %1156, %1157, %1125 : vector<1x128xi1>, vector<1x128xf32>
    %cst_282 = arith.constant -9.99999996E-13 : f32
    %1159 = vector.broadcast %cst_282 : f32 to vector<1x128xf32>
    %1160 = arith.cmpf olt, %1145, %1159 : vector<1x128xf32>
    %1161 = arith.minimumf %1129, %1154 : vector<1x128xf32>
    %1162 = arith.select %1160, %1161, %1129 : vector<1x128xi1>, vector<1x128xf32>
    %1163 = math.absf %1145 : vector<1x128xf32>
    %cst_283 = arith.constant 9.99999996E-13 : f32
    %1164 = vector.broadcast %cst_283 : f32 to vector<1x128xf32>
    %1165 = arith.cmpf ogt, %1163, %1164 : vector<1x128xf32>
    %cst_284 = arith.constant 0.000000e+00 : f32
    %1166 = vector.broadcast %cst_284 : f32 to vector<1x128xf32>
    %1167 = arith.cmpf oge, %1142, %1166 : vector<1x128xf32>
    %1168 = arith.ori %1165, %1167 : vector<1x128xi1>
    %1169 = arith.andi %1136, %1168 : vector<1x128xi1>
    %1170 = arith.mulf %158, %115 : vector<1x128xf32>
    %1171 = arith.mulf %159, %111 : vector<1x128xf32>
    %1172 = arith.subf %1170, %1171 : vector<1x128xf32>
    %1173 = arith.subf %1172, %162 : vector<1x128xf32>
    %cst_285 = arith.constant 9.99999997E-7 : f32
    %1174 = vector.broadcast %cst_285 : f32 to vector<1x128xf32>
    %1175 = arith.subf %1173, %1174 : vector<1x128xf32>
    %1176 = arith.mulf %158, %1100 : vector<1x128xf32>
    %1177 = arith.mulf %159, %1099 : vector<1x128xf32>
    %1178 = arith.subf %1176, %1177 : vector<1x128xf32>
    %1179 = math.absf %1178 : vector<1x128xf32>
    %cst_286 = arith.constant 9.99999996E-13 : f32
    %1180 = vector.broadcast %cst_286 : f32 to vector<1x128xf32>
    %1181 = arith.cmpf olt, %1179, %1180 : vector<1x128xf32>
    %cst_287 = arith.constant 9.99999996E-13 : f32
    %1182 = vector.broadcast %cst_287 : f32 to vector<1x128xf32>
    %1183 = arith.select %1181, %1182, %1178 : vector<1x128xi1>, vector<1x128xf32>
    %cst_288 = arith.constant 0.000000e+00 : f32
    %1184 = vector.broadcast %cst_288 : f32 to vector<1x128xf32>
    %1185 = arith.subf %1184, %1175 : vector<1x128xf32>
    %1186 = tpu.reciprocal %1183 {approx = true} : vector<1x128xf32> -> vector<1x128xf32>
    %1187 = arith.mulf %1185, %1186 : vector<1x128xf32>
    %cst_289 = arith.constant 9.99999996E-13 : f32
    %1188 = vector.broadcast %cst_289 : f32 to vector<1x128xf32>
    %1189 = arith.cmpf ogt, %1178, %1188 : vector<1x128xf32>
    %1190 = arith.maximumf %1158, %1187 : vector<1x128xf32>
    %1191 = arith.select %1189, %1190, %1158 : vector<1x128xi1>, vector<1x128xf32>
    %cst_290 = arith.constant -9.99999996E-13 : f32
    %1192 = vector.broadcast %cst_290 : f32 to vector<1x128xf32>
    %1193 = arith.cmpf olt, %1178, %1192 : vector<1x128xf32>
    %1194 = arith.minimumf %1162, %1187 : vector<1x128xf32>
    %1195 = arith.select %1193, %1194, %1162 : vector<1x128xi1>, vector<1x128xf32>
    %1196 = math.absf %1178 : vector<1x128xf32>
    %cst_291 = arith.constant 9.99999996E-13 : f32
    %1197 = vector.broadcast %cst_291 : f32 to vector<1x128xf32>
    %1198 = arith.cmpf ogt, %1196, %1197 : vector<1x128xf32>
    %cst_292 = arith.constant 0.000000e+00 : f32
    %1199 = vector.broadcast %cst_292 : f32 to vector<1x128xf32>
    %1200 = arith.cmpf oge, %1175, %1199 : vector<1x128xf32>
    %1201 = arith.ori %1198, %1200 : vector<1x128xi1>
    %1202 = arith.andi %1169, %1201 : vector<1x128xi1>
    %1203 = arith.mulf %163, %115 : vector<1x128xf32>
    %1204 = arith.mulf %164, %111 : vector<1x128xf32>
    %1205 = arith.subf %1203, %1204 : vector<1x128xf32>
    %1206 = arith.subf %1205, %167 : vector<1x128xf32>
    %cst_293 = arith.constant 9.99999997E-7 : f32
    %1207 = vector.broadcast %cst_293 : f32 to vector<1x128xf32>
    %1208 = arith.subf %1206, %1207 : vector<1x128xf32>
    %1209 = arith.mulf %163, %1100 : vector<1x128xf32>
    %1210 = arith.mulf %164, %1099 : vector<1x128xf32>
    %1211 = arith.subf %1209, %1210 : vector<1x128xf32>
    %1212 = math.absf %1211 : vector<1x128xf32>
    %cst_294 = arith.constant 9.99999996E-13 : f32
    %1213 = vector.broadcast %cst_294 : f32 to vector<1x128xf32>
    %1214 = arith.cmpf olt, %1212, %1213 : vector<1x128xf32>
    %cst_295 = arith.constant 9.99999996E-13 : f32
    %1215 = vector.broadcast %cst_295 : f32 to vector<1x128xf32>
    %1216 = arith.select %1214, %1215, %1211 : vector<1x128xi1>, vector<1x128xf32>
    %cst_296 = arith.constant 0.000000e+00 : f32
    %1217 = vector.broadcast %cst_296 : f32 to vector<1x128xf32>
    %1218 = arith.subf %1217, %1208 : vector<1x128xf32>
    %1219 = tpu.reciprocal %1216 {approx = true} : vector<1x128xf32> -> vector<1x128xf32>
    %1220 = arith.mulf %1218, %1219 : vector<1x128xf32>
    %cst_297 = arith.constant 9.99999996E-13 : f32
    %1221 = vector.broadcast %cst_297 : f32 to vector<1x128xf32>
    %1222 = arith.cmpf ogt, %1211, %1221 : vector<1x128xf32>
    %1223 = arith.maximumf %1191, %1220 : vector<1x128xf32>
    %1224 = arith.select %1222, %1223, %1191 : vector<1x128xi1>, vector<1x128xf32>
    %cst_298 = arith.constant -9.99999996E-13 : f32
    %1225 = vector.broadcast %cst_298 : f32 to vector<1x128xf32>
    %1226 = arith.cmpf olt, %1211, %1225 : vector<1x128xf32>
    %1227 = arith.minimumf %1195, %1220 : vector<1x128xf32>
    %1228 = arith.select %1226, %1227, %1195 : vector<1x128xi1>, vector<1x128xf32>
    %1229 = math.absf %1211 : vector<1x128xf32>
    %cst_299 = arith.constant 9.99999996E-13 : f32
    %1230 = vector.broadcast %cst_299 : f32 to vector<1x128xf32>
    %1231 = arith.cmpf ogt, %1229, %1230 : vector<1x128xf32>
    %cst_300 = arith.constant 0.000000e+00 : f32
    %1232 = vector.broadcast %cst_300 : f32 to vector<1x128xf32>
    %1233 = arith.cmpf oge, %1208, %1232 : vector<1x128xf32>
    %1234 = arith.ori %1231, %1233 : vector<1x128xi1>
    %1235 = arith.andi %1202, %1234 : vector<1x128xi1>
    %1236 = arith.cmpf ogt, %1228, %1224 : vector<1x128xf32>
    %1237 = arith.andi %1235, %1236 : vector<1x128xi1>
    %1238 = arith.mulf %1224, %1099 : vector<1x128xf32>
    %1239 = arith.addf %111, %1238 : vector<1x128xf32>
    %1240 = arith.mulf %1224, %1100 : vector<1x128xf32>
    %1241 = arith.addf %115, %1240 : vector<1x128xf32>
    %1242 = arith.mulf %1228, %1099 : vector<1x128xf32>
    %1243 = arith.addf %111, %1242 : vector<1x128xf32>
    %1244 = arith.mulf %1228, %1100 : vector<1x128xf32>
    %1245 = arith.addf %115, %1244 : vector<1x128xf32>
    %1246 = arith.mulf %1239, %1245 : vector<1x128xf32>
    %1247 = arith.mulf %1243, %1241 : vector<1x128xf32>
    %1248 = arith.subf %1246, %1247 : vector<1x128xf32>
    %cst_301 = arith.constant 5.000000e-01 : f32
    %1249 = vector.broadcast %cst_301 : f32 to vector<1x128xf32>
    %1250 = arith.mulf %1249, %1248 : vector<1x128xf32>
    %cst_302 = arith.constant 0.000000e+00 : f32
    %1251 = vector.broadcast %cst_302 : f32 to vector<1x128xf32>
    %1252 = arith.select %1237, %1250, %1251 : vector<1x128xi1>, vector<1x128xf32>
    %1253 = arith.addf %1098, %1252 : vector<1x128xf32>
    %1254 = arith.subf %87, %123 : vector<1x128xf32>
    %1255 = arith.subf %91, %127 : vector<1x128xf32>
    %cst_303 = arith.constant 0.000000e+00 : f32
    %1256 = vector.broadcast %cst_303 : f32 to vector<1x128xf32>
    %cst_304 = arith.constant 1.000000e+00 : f32
    %1257 = vector.broadcast %cst_304 : f32 to vector<1x128xf32>
    %true_305 = arith.constant true
    %1258 = vector.broadcast %true_305 : i1 to vector<1x128xi1>
    %1259 = arith.mulf %148, %127 : vector<1x128xf32>
    %1260 = arith.mulf %149, %123 : vector<1x128xf32>
    %1261 = arith.subf %1259, %1260 : vector<1x128xf32>
    %1262 = arith.subf %1261, %152 : vector<1x128xf32>
    %cst_306 = arith.constant 9.99999997E-7 : f32
    %1263 = vector.broadcast %cst_306 : f32 to vector<1x128xf32>
    %1264 = arith.subf %1262, %1263 : vector<1x128xf32>
    %1265 = arith.mulf %148, %1255 : vector<1x128xf32>
    %1266 = arith.mulf %149, %1254 : vector<1x128xf32>
    %1267 = arith.subf %1265, %1266 : vector<1x128xf32>
    %1268 = math.absf %1267 : vector<1x128xf32>
    %cst_307 = arith.constant 9.99999996E-13 : f32
    %1269 = vector.broadcast %cst_307 : f32 to vector<1x128xf32>
    %1270 = arith.cmpf olt, %1268, %1269 : vector<1x128xf32>
    %cst_308 = arith.constant 9.99999996E-13 : f32
    %1271 = vector.broadcast %cst_308 : f32 to vector<1x128xf32>
    %1272 = arith.select %1270, %1271, %1267 : vector<1x128xi1>, vector<1x128xf32>
    %cst_309 = arith.constant 0.000000e+00 : f32
    %1273 = vector.broadcast %cst_309 : f32 to vector<1x128xf32>
    %1274 = arith.subf %1273, %1264 : vector<1x128xf32>
    %1275 = tpu.reciprocal %1272 {approx = true} : vector<1x128xf32> -> vector<1x128xf32>
    %1276 = arith.mulf %1274, %1275 : vector<1x128xf32>
    %cst_310 = arith.constant 9.99999996E-13 : f32
    %1277 = vector.broadcast %cst_310 : f32 to vector<1x128xf32>
    %1278 = arith.cmpf ogt, %1267, %1277 : vector<1x128xf32>
    %1279 = arith.maximumf %1256, %1276 : vector<1x128xf32>
    %1280 = arith.select %1278, %1279, %1256 : vector<1x128xi1>, vector<1x128xf32>
    %cst_311 = arith.constant -9.99999996E-13 : f32
    %1281 = vector.broadcast %cst_311 : f32 to vector<1x128xf32>
    %1282 = arith.cmpf olt, %1267, %1281 : vector<1x128xf32>
    %1283 = arith.minimumf %1257, %1276 : vector<1x128xf32>
    %1284 = arith.select %1282, %1283, %1257 : vector<1x128xi1>, vector<1x128xf32>
    %1285 = math.absf %1267 : vector<1x128xf32>
    %cst_312 = arith.constant 9.99999996E-13 : f32
    %1286 = vector.broadcast %cst_312 : f32 to vector<1x128xf32>
    %1287 = arith.cmpf ogt, %1285, %1286 : vector<1x128xf32>
    %cst_313 = arith.constant 0.000000e+00 : f32
    %1288 = vector.broadcast %cst_313 : f32 to vector<1x128xf32>
    %1289 = arith.cmpf oge, %1264, %1288 : vector<1x128xf32>
    %1290 = arith.ori %1287, %1289 : vector<1x128xi1>
    %1291 = arith.andi %1258, %1290 : vector<1x128xi1>
    %1292 = arith.mulf %153, %127 : vector<1x128xf32>
    %1293 = arith.mulf %154, %123 : vector<1x128xf32>
    %1294 = arith.subf %1292, %1293 : vector<1x128xf32>
    %1295 = arith.subf %1294, %157 : vector<1x128xf32>
    %cst_314 = arith.constant 9.99999997E-7 : f32
    %1296 = vector.broadcast %cst_314 : f32 to vector<1x128xf32>
    %1297 = arith.subf %1295, %1296 : vector<1x128xf32>
    %1298 = arith.mulf %153, %1255 : vector<1x128xf32>
    %1299 = arith.mulf %154, %1254 : vector<1x128xf32>
    %1300 = arith.subf %1298, %1299 : vector<1x128xf32>
    %1301 = math.absf %1300 : vector<1x128xf32>
    %cst_315 = arith.constant 9.99999996E-13 : f32
    %1302 = vector.broadcast %cst_315 : f32 to vector<1x128xf32>
    %1303 = arith.cmpf olt, %1301, %1302 : vector<1x128xf32>
    %cst_316 = arith.constant 9.99999996E-13 : f32
    %1304 = vector.broadcast %cst_316 : f32 to vector<1x128xf32>
    %1305 = arith.select %1303, %1304, %1300 : vector<1x128xi1>, vector<1x128xf32>
    %cst_317 = arith.constant 0.000000e+00 : f32
    %1306 = vector.broadcast %cst_317 : f32 to vector<1x128xf32>
    %1307 = arith.subf %1306, %1297 : vector<1x128xf32>
    %1308 = tpu.reciprocal %1305 {approx = true} : vector<1x128xf32> -> vector<1x128xf32>
    %1309 = arith.mulf %1307, %1308 : vector<1x128xf32>
    %cst_318 = arith.constant 9.99999996E-13 : f32
    %1310 = vector.broadcast %cst_318 : f32 to vector<1x128xf32>
    %1311 = arith.cmpf ogt, %1300, %1310 : vector<1x128xf32>
    %1312 = arith.maximumf %1280, %1309 : vector<1x128xf32>
    %1313 = arith.select %1311, %1312, %1280 : vector<1x128xi1>, vector<1x128xf32>
    %cst_319 = arith.constant -9.99999996E-13 : f32
    %1314 = vector.broadcast %cst_319 : f32 to vector<1x128xf32>
    %1315 = arith.cmpf olt, %1300, %1314 : vector<1x128xf32>
    %1316 = arith.minimumf %1284, %1309 : vector<1x128xf32>
    %1317 = arith.select %1315, %1316, %1284 : vector<1x128xi1>, vector<1x128xf32>
    %1318 = math.absf %1300 : vector<1x128xf32>
    %cst_320 = arith.constant 9.99999996E-13 : f32
    %1319 = vector.broadcast %cst_320 : f32 to vector<1x128xf32>
    %1320 = arith.cmpf ogt, %1318, %1319 : vector<1x128xf32>
    %cst_321 = arith.constant 0.000000e+00 : f32
    %1321 = vector.broadcast %cst_321 : f32 to vector<1x128xf32>
    %1322 = arith.cmpf oge, %1297, %1321 : vector<1x128xf32>
    %1323 = arith.ori %1320, %1322 : vector<1x128xi1>
    %1324 = arith.andi %1291, %1323 : vector<1x128xi1>
    %1325 = arith.mulf %158, %127 : vector<1x128xf32>
    %1326 = arith.mulf %159, %123 : vector<1x128xf32>
    %1327 = arith.subf %1325, %1326 : vector<1x128xf32>
    %1328 = arith.subf %1327, %162 : vector<1x128xf32>
    %cst_322 = arith.constant 9.99999997E-7 : f32
    %1329 = vector.broadcast %cst_322 : f32 to vector<1x128xf32>
    %1330 = arith.subf %1328, %1329 : vector<1x128xf32>
    %1331 = arith.mulf %158, %1255 : vector<1x128xf32>
    %1332 = arith.mulf %159, %1254 : vector<1x128xf32>
    %1333 = arith.subf %1331, %1332 : vector<1x128xf32>
    %1334 = math.absf %1333 : vector<1x128xf32>
    %cst_323 = arith.constant 9.99999996E-13 : f32
    %1335 = vector.broadcast %cst_323 : f32 to vector<1x128xf32>
    %1336 = arith.cmpf olt, %1334, %1335 : vector<1x128xf32>
    %cst_324 = arith.constant 9.99999996E-13 : f32
    %1337 = vector.broadcast %cst_324 : f32 to vector<1x128xf32>
    %1338 = arith.select %1336, %1337, %1333 : vector<1x128xi1>, vector<1x128xf32>
    %cst_325 = arith.constant 0.000000e+00 : f32
    %1339 = vector.broadcast %cst_325 : f32 to vector<1x128xf32>
    %1340 = arith.subf %1339, %1330 : vector<1x128xf32>
    %1341 = tpu.reciprocal %1338 {approx = true} : vector<1x128xf32> -> vector<1x128xf32>
    %1342 = arith.mulf %1340, %1341 : vector<1x128xf32>
    %cst_326 = arith.constant 9.99999996E-13 : f32
    %1343 = vector.broadcast %cst_326 : f32 to vector<1x128xf32>
    %1344 = arith.cmpf ogt, %1333, %1343 : vector<1x128xf32>
    %1345 = arith.maximumf %1313, %1342 : vector<1x128xf32>
    %1346 = arith.select %1344, %1345, %1313 : vector<1x128xi1>, vector<1x128xf32>
    %cst_327 = arith.constant -9.99999996E-13 : f32
    %1347 = vector.broadcast %cst_327 : f32 to vector<1x128xf32>
    %1348 = arith.cmpf olt, %1333, %1347 : vector<1x128xf32>
    %1349 = arith.minimumf %1317, %1342 : vector<1x128xf32>
    %1350 = arith.select %1348, %1349, %1317 : vector<1x128xi1>, vector<1x128xf32>
    %1351 = math.absf %1333 : vector<1x128xf32>
    %cst_328 = arith.constant 9.99999996E-13 : f32
    %1352 = vector.broadcast %cst_328 : f32 to vector<1x128xf32>
    %1353 = arith.cmpf ogt, %1351, %1352 : vector<1x128xf32>
    %cst_329 = arith.constant 0.000000e+00 : f32
    %1354 = vector.broadcast %cst_329 : f32 to vector<1x128xf32>
    %1355 = arith.cmpf oge, %1330, %1354 : vector<1x128xf32>
    %1356 = arith.ori %1353, %1355 : vector<1x128xi1>
    %1357 = arith.andi %1324, %1356 : vector<1x128xi1>
    %1358 = arith.mulf %163, %127 : vector<1x128xf32>
    %1359 = arith.mulf %164, %123 : vector<1x128xf32>
    %1360 = arith.subf %1358, %1359 : vector<1x128xf32>
    %1361 = arith.subf %1360, %167 : vector<1x128xf32>
    %cst_330 = arith.constant 9.99999997E-7 : f32
    %1362 = vector.broadcast %cst_330 : f32 to vector<1x128xf32>
    %1363 = arith.subf %1361, %1362 : vector<1x128xf32>
    %1364 = arith.mulf %163, %1255 : vector<1x128xf32>
    %1365 = arith.mulf %164, %1254 : vector<1x128xf32>
    %1366 = arith.subf %1364, %1365 : vector<1x128xf32>
    %1367 = math.absf %1366 : vector<1x128xf32>
    %cst_331 = arith.constant 9.99999996E-13 : f32
    %1368 = vector.broadcast %cst_331 : f32 to vector<1x128xf32>
    %1369 = arith.cmpf olt, %1367, %1368 : vector<1x128xf32>
    %cst_332 = arith.constant 9.99999996E-13 : f32
    %1370 = vector.broadcast %cst_332 : f32 to vector<1x128xf32>
    %1371 = arith.select %1369, %1370, %1366 : vector<1x128xi1>, vector<1x128xf32>
    %cst_333 = arith.constant 0.000000e+00 : f32
    %1372 = vector.broadcast %cst_333 : f32 to vector<1x128xf32>
    %1373 = arith.subf %1372, %1363 : vector<1x128xf32>
    %1374 = tpu.reciprocal %1371 {approx = true} : vector<1x128xf32> -> vector<1x128xf32>
    %1375 = arith.mulf %1373, %1374 : vector<1x128xf32>
    %cst_334 = arith.constant 9.99999996E-13 : f32
    %1376 = vector.broadcast %cst_334 : f32 to vector<1x128xf32>
    %1377 = arith.cmpf ogt, %1366, %1376 : vector<1x128xf32>
    %1378 = arith.maximumf %1346, %1375 : vector<1x128xf32>
    %1379 = arith.select %1377, %1378, %1346 : vector<1x128xi1>, vector<1x128xf32>
    %cst_335 = arith.constant -9.99999996E-13 : f32
    %1380 = vector.broadcast %cst_335 : f32 to vector<1x128xf32>
    %1381 = arith.cmpf olt, %1366, %1380 : vector<1x128xf32>
    %1382 = arith.minimumf %1350, %1375 : vector<1x128xf32>
    %1383 = arith.select %1381, %1382, %1350 : vector<1x128xi1>, vector<1x128xf32>
    %1384 = math.absf %1366 : vector<1x128xf32>
    %cst_336 = arith.constant 9.99999996E-13 : f32
    %1385 = vector.broadcast %cst_336 : f32 to vector<1x128xf32>
    %1386 = arith.cmpf ogt, %1384, %1385 : vector<1x128xf32>
    %cst_337 = arith.constant 0.000000e+00 : f32
    %1387 = vector.broadcast %cst_337 : f32 to vector<1x128xf32>
    %1388 = arith.cmpf oge, %1363, %1387 : vector<1x128xf32>
    %1389 = arith.ori %1386, %1388 : vector<1x128xi1>
    %1390 = arith.andi %1357, %1389 : vector<1x128xi1>
    %1391 = arith.cmpf ogt, %1383, %1379 : vector<1x128xf32>
    %1392 = arith.andi %1390, %1391 : vector<1x128xi1>
    %1393 = arith.mulf %1379, %1254 : vector<1x128xf32>
    %1394 = arith.addf %123, %1393 : vector<1x128xf32>
    %1395 = arith.mulf %1379, %1255 : vector<1x128xf32>
    %1396 = arith.addf %127, %1395 : vector<1x128xf32>
    %1397 = arith.mulf %1383, %1254 : vector<1x128xf32>
    %1398 = arith.addf %123, %1397 : vector<1x128xf32>
    %1399 = arith.mulf %1383, %1255 : vector<1x128xf32>
    %1400 = arith.addf %127, %1399 : vector<1x128xf32>
    %1401 = arith.mulf %1394, %1400 : vector<1x128xf32>
    %1402 = arith.mulf %1398, %1396 : vector<1x128xf32>
    %1403 = arith.subf %1401, %1402 : vector<1x128xf32>
    %cst_338 = arith.constant 5.000000e-01 : f32
    %1404 = vector.broadcast %cst_338 : f32 to vector<1x128xf32>
    %1405 = arith.mulf %1404, %1403 : vector<1x128xf32>
    %cst_339 = arith.constant 0.000000e+00 : f32
    %1406 = vector.broadcast %cst_339 : f32 to vector<1x128xf32>
    %1407 = arith.select %1392, %1405, %1406 : vector<1x128xi1>, vector<1x128xf32>
    %1408 = arith.addf %1253, %1407 : vector<1x128xf32>
    %cst_340 = arith.constant 0.000000e+00 : f32
    %1409 = vector.broadcast %cst_340 : f32 to vector<1x128xf32>
    %1410 = arith.maximumf %1408, %1409 : vector<1x128xf32>
    %1411 = arith.mulf %5, %7 : vector<1x128xf32>
    %1412 = arith.mulf %15, %17 : vector<1x128xf32>
    %1413 = arith.addf %1411, %1412 : vector<1x128xf32>
    %1414 = arith.subf %1413, %1410 : vector<1x128xf32>
    %cst_341 = arith.constant 9.99999996E-13 : f32
    %1415 = vector.broadcast %cst_341 : f32 to vector<1x128xf32>
    %1416 = arith.maximumf %1414, %1415 : vector<1x128xf32>
    %1417 = tpu.reciprocal %1416 {approx = true} : vector<1x128xf32> -> vector<1x128xf32>
    %1418 = arith.mulf %1410, %1417 : vector<1x128xf32>
    %cst_342 = arith.constant 9.99999997E-7 : f32
    %1419 = vector.broadcast %cst_342 : f32 to vector<1x128xf32>
    %1420 = arith.maximumf %1418, %1419 : vector<1x128xf32>
    %1421 = math.log %1420 : vector<1x128xf32>
    %cst_343 = arith.constant 0.000000e+00 : f32
    %1422 = vector.broadcast %cst_343 : f32 to vector<1x128xf32>
    %1423 = arith.subf %1422, %1421 : vector<1x128xf32>
    %c0_344 = arith.constant 0 : index
    %c0_345 = arith.constant 0 : index
    %1424 = vector.load %arg3[%c0_344, %c0_345] : memref<1x128xf32, #tpu.memory_space<vmem>>, vector<1x128xf32>
    tpu.vector_store %arg3[%c0_344, %c0_345], %1423 {strides = array<i32>} : memref<1x128xf32, #tpu.memory_space<vmem>>, vector<1x128xf32>,
    return
  }
  func.func @transform_0(%arg0: i32) -> (i32, i32, i32) {
    %c0_i32 = arith.constant 0 : i32
    %c0_i32_0 = arith.constant 0 : i32
    %c0_i32_1 = arith.constant 0 : i32
    return %c0_i32, %arg0, %c0_i32_0 : i32, i32, i32
  }
  func.func @transform_1(%arg0: i32) -> (i32, i32, i32) {
    %c0_i32 = arith.constant 0 : i32
    %c0_i32_0 = arith.constant 0 : i32
    %c0_i32_1 = arith.constant 0 : i32
    return %c0_i32, %arg0, %c0_i32_0 : i32, i32, i32
  }
  func.func @transform_2(%arg0: i32) -> (i32, i32) {
    %c0_i32 = arith.constant 0 : i32
    %c0_i32_0 = arith.constant 0 : i32
    return %arg0, %c0_i32 : i32, i32
  }
}

</mosaic_0001>

<llo_original>
// kernel: tpu_custom_call.1
$region0: #{tpu_custom_call.1}
  #allocation0 [shape = 'u32[]', space=smem, size = 0x4, offset = 0x4, fixed_abs, tag = 'smem constant byte address 0x4 - core index']
  #allocation1 [shape = 'u32[144,128]{1,0:T(1,128)}', space=vmem, size = 0x12000, scoped, tag = 'internal scratch']
  %s0 = inlined_call_operand.hbm [shape: f32[5,1,128], index: 0, kind: input, shape index: {}]
  %s1 = inlined_call_operand.hbm [shape: f32[5,1,128], index: 1, kind: input, shape index: {}]
  %s2 = inlined_call_operand.hbm [shape: f32[1,128], index: 2, kind: output, shape index: {}]
  %s3 = sld [smem:[#allocation0]]
  $region26: #{tpu_custom_call.1} parent=0
    _
  %s5 = ssub.s32 1, %s3
  %s6 = scalar_select 0, %s5, %s3
  $region1: #{tpu_custom_call.1} parent=0
    #allocation2 [shape = 'u8[2560]{0}', space=vmem, size = 0xc00, scoped, tag = 'input window, operand 0, single buffered']
    #allocation3 [shape = 's32[1]{0}', space=sflag, size = 0x4, scoped, tag = 'scoped memory for tpu_custom_call.1']
    #allocation4 [shape = 's32[1]{0}', space=sflag, size = 0x4, scoped, tag = 'scoped memory for tpu_custom_call.1']
    #allocation5 [shape = 'u8[2560]{0}', space=vmem, size = 0xc00, scoped, tag = 'input window, operand 1, single buffered']
    #allocation6 [shape = 's32[1]{0}', space=sflag, size = 0x4, scoped, tag = 'scoped memory for tpu_custom_call.1']
    #allocation7 [shape = 'u8[512]{0}', space=vmem, size = 0x400, scoped, tag = 'output window, operand 0, single buffered']
    %7 = vsyncpa [#allocation3], 0
    %8 = vsyncpa [#allocation6], 0
    %9 = vsyncpa [#allocation4], 0
    // Predicated region
    $region2: #{tpu_custom_call.1} parent=1 // pred_check
      _
    $region3: #{tpu_custom_call.1} parent=1 // pred_check_branch
      %11 = sbr.rel (0) target = $region5
    $region4: #{tpu_custom_call.1} parent=1 // pred_region
      %s13 = ssub.s32 80, 80
      %14 = vsyncadd [#allocation3], %s13
      %s15 = sshll.u32 [#allocation2], 4
      %s16 = int_to_ptr.vmem [resolvable:$true] %s15
      %21 = dma.hbm_to_vmem [thread:$0]  %s0, 80, %s16, [#allocation3], 16, 16, 1
    $region5: #{tpu_custom_call.1} parent=1 // pred_fallthru
      _
    // Predicated region
    $region6: #{tpu_custom_call.1} parent=1 // pred_check
      _
    $region7: #{tpu_custom_call.1} parent=1 // pred_check_branch
      %23 = sbr.rel (0) target = $region9
    $region8: #{tpu_custom_call.1} parent=1 // pred_region
      %s25 = ssub.s32 80, 80
      %26 = vsyncadd [#allocation6], %s25
      %s27 = sshll.u32 [#allocation5], 4
      %s28 = int_to_ptr.vmem [resolvable:$true] %s27
      %33 = dma.hbm_to_vmem [thread:$0]  %s1, 80, %s28, [#allocation6], 16, 16, 1
    $region9: #{tpu_custom_call.1} parent=1 // pred_fallthru
      _
    // Predicated region
    $region10: #{tpu_custom_call.1} parent=1 // pred_check
      _
    $region11: #{tpu_custom_call.1} parent=1 // pred_check_branch
      %35 = sbr.rel (0) target = $region13
    $region12: #{tpu_custom_call.1} parent=1 // pred_region
      %36 = dma.done [#allocation3], 80
    $region13: #{tpu_custom_call.1} parent=1 // pred_fallthru
      _
    // Predicated region
    $region14: #{tpu_custom_call.1} parent=1 // pred_check
      _
    $region15: #{tpu_custom_call.1} parent=1 // pred_check_branch
      %38 = sbr.rel (0) target = $region17
    $region16: #{tpu_custom_call.1} parent=1 // pred_region
      %39 = dma.done [#allocation6], 80
    $region17: #{tpu_custom_call.1} parent=1 // pred_fallthru
      _
    %v40 = vld [vmem:[#allocation2] sm:$0x1]
    %s41 = scalar_lea.vmem [#allocation2], 1
    %v42 = vld [vmem:[%s41] sm:$0x1]
    %s43 = scalar_lea.vmem [#allocation2], 2
    %v44 = vld [vmem:[%s43] sm:$0x1]
    %s45 = scalar_lea.vmem [#allocation2], 3
    %v46 = vld [vmem:[%s45] sm:$0x1]
    %s47 = scalar_lea.vmem [#allocation2], 4
    %v48 = vld [vmem:[%s47] sm:$0x1]
    %v49 = vld [vmem:[#allocation5] sm:$0x1]
    %s50 = scalar_lea.vmem [#allocation5], 1
    %v51 = vld [vmem:[%s50] sm:$0x1]
    %s52 = scalar_lea.vmem [#allocation5], 2
    %v53 = vld [vmem:[%s52] sm:$0x1]
    %s54 = scalar_lea.vmem [#allocation5], 3
    %v55 = vld [vmem:[%s54] sm:$0x1]
    %s56 = scalar_lea.vmem [#allocation5], 4
    %v57 = vld [vmem:[%s56] sm:$0x1]
    %v58 = vand.u32 2147483647, %v48
    %vm59 = vcmp.le.f32.partialorder %v58, 0.7853982
    %vm60 = vcmp.lt.s32.totalorder %v48, 0
    %v61 = vand.u32 %v48, 2139095040
    %v62 = vshrl.u32 %v61, 23
    %v63 = vsub.s32 %v62, 127
    %v64 = vand.u32 2147483647, %v48
    %v65 = vand.u32 %v64, 8388607
    %v66 = vor.u32 %v65, 8388608
    %v67 = vsub.s32 0, %v66
    %v68 = vadd.s32 %v63, 1
    %vm69 = vcmp.gt.s32.totalorder %v68, 0
    %v70 = vsel %vm69, %v68, 0
    %v71 = vshrl.u32 %v70, 5
    %v72 = vand.u32 %v70, 31
    %v73 = vsub.s32 32, %v72
    %v74 = vshrl.u32 683565275, %v73
    %v75 = vshll.u32 683565275, %v72
    %v76 = vshrl.u32 2475754826, %v73
    %v77 = vor.u32 %v75, %v76
    %v78 = vshll.u32 2475754826, %v72
    %v79 = vshrl.u32 2131351028, %v73
    %v80 = vor.u32 %v78, %v79
    %v81 = vshll.u32 2131351028, %v72
    %v82 = vshrl.u32 2102212464, %v73
    %v83 = vor.u32 %v81, %v82
    %v84 = vshll.u32 2102212464, %v72
    %v85 = vshrl.u32 920167782, %v73
    %v86 = vor.u32 %v84, %v85
    %v87 = vshll.u32 920167782, %v72
    %v88 = vshrl.u32 1326507024, %v73
    %v89 = vor.u32 %v87, %v88
    %vm90 = vcmp.lt.s32.totalorder %v71, 1
    %vm91 = vcmp.lt.s32.totalorder %v71, 2
    %vm92 = vcmp.lt.s32.totalorder %v71, 3
    %vm93 = vcmp.lt.s32.totalorder %v71, 4
    %v94 = vsel %vm90, %v74, %v77
    %v95 = vsel %vm93, %v83, 2102212464
    %v96 = vsel %vm92, %v80, %v95
    %v97 = vsel %vm91, %v94, %v96
    %v98 = vsel %vm90, %v77, %v80
    %v99 = vsel %vm93, %v86, 920167782
    %v100 = vsel %vm92, %v83, %v99
    %v101 = vsel %vm91, %v98, %v100
    %v102 = vsel %vm90, %v80, %v83
    %v103 = vsel %vm93, %v89, 1326507024
    %v104 = vsel %vm92, %v86, %v103
    %v105 = vsel %vm91, %v102, %v104
    %v106 = vshll.u32 %v66, 8
    %v107 = vmul.u32.u64.compose %v106, %v105
    %v108 = vextract.low.u32 %v107
    %v109 = vextract.high.u32 %v107
    %v110 = vmul.u32.u64.compose %v106, %v101
    %v111 = vextract.low.u32 %v110
    %v112 = vextract.high.u32 %v110
    %v113 = vmul.u32 %v106, %v97
    %v114 = vadd.s32 %v109, %v111
    %vm115 = vc.u32 %v109, %v111
    %v116 = vadd.s32 %v112, 1
    %v117 = vsel %vm115, %v116, %v112
    %v118 = vadd.s32 %v113, %v117
    %v119 = vadd.s32 %v118, 536870912
    %v120 = vshrl.u32 %v119, 30
    %v121 = vshll.u32 %v120, 30
    %v122 = vsub.s32 %v118, %v121
    %vm123 = vcmp.lt.s32.totalorder %v122, 0
    %v124 = vsub.s32 0, %v122
    %v125 = vsel %vm123, %v124, %v122
    %v126 = vclz %v125
    %v127 = vsub.s32 %v126, 2
    %vm128 = vcmp.gt.s32.totalorder 0, %v127
    %v129 = vsel %vm128, 0, %v127
    %v130 = vsub.s32 32, %v129
    %v131 = vshll.u32 %v122, %v129
    %v132 = vshrl.u32 %v114, %v130
    %v133 = vor.u32 %v131, %v132
    %v134 = vsub.s32 4294967266, %v129
    %v135 = vadd.s32 %v134, 127
    %v136 = vshll.u32 %v135, 23
    %v137 = vor.u32 4788187, %v136
    %v138 = vand.u32 2147483647, %v137
    %v140 = vcvt.s32.f32 %v133
    %v141 = vmul.f32 %v140, %v138
    %v142 = vxor.u32 %v141, 2147483648
    %v143 = vsel %vm60, %v142, %v141
    %v144 = vsub.s32 4, %v120
    %v145 = vsel %vm60, %v144, %v120
    %v146 = vsel %vm59, %v48, %v143
    %v147 = vsel %vm59, 0, %v145
    %v148 = vcosq.f32.pop %v146
    %v149 = vsinq.f32.pop %v146
    %vm150 = vweird.f32 %v48
    %v151 = vand.u32 %v147, 3
    %vm152 = vcmp.lt.s32.totalorder %v151, 2
    %vm153 = vcmp.eq.s32.totalorder %v151, 0
    %v154 = vxor.u32 %v149, 2147483648
    %v155 = vsel %vm153, %v148, %v154
    %vm156 = vcmp.eq.s32.totalorder %v151, 2
    %v157 = vxor.u32 %v148, 2147483648
    %v158 = vsel %vm156, %v157, %v149
    %v159 = vsel %vm152, %v155, %v158
    %v160 = vsel %vm150, nan, %v159
    %v161 = vand.u32 2147483647, %v48
    %vm162 = vcmp.le.f32.partialorder %v161, 0.7853982
    %vm163 = vcmp.lt.s32.totalorder %v48, 0
    %v164 = vand.u32 %v48, 2139095040
    %v165 = vshrl.u32 %v164, 23
    %v166 = vsub.s32 %v165, 127
    %v167 = vand.u32 2147483647, %v48
    %v168 = vand.u32 %v167, 8388607
    %v169 = vor.u32 %v168, 8388608
    %v170 = vsub.s32 0, %v169
    %v171 = vadd.s32 %v166, 1
    %vm172 = vcmp.gt.s32.totalorder %v171, 0
    %v173 = vsel %vm172, %v171, 0
    %v174 = vshrl.u32 %v173, 5
    %v175 = vand.u32 %v173, 31
    %v176 = vsub.s32 32, %v175
    %v177 = vshrl.u32 683565275, %v176
    %v178 = vshll.u32 683565275, %v175
    %v179 = vshrl.u32 2475754826, %v176
    %v180 = vor.u32 %v178, %v179
    %v181 = vshll.u32 2475754826, %v175
    %v182 = vshrl.u32 2131351028, %v176
    %v183 = vor.u32 %v181, %v182
    %v184 = vshll.u32 2131351028, %v175
    %v185 = vshrl.u32 2102212464, %v176
    %v186 = vor.u32 %v184, %v185
    %v187 = vshll.u32 2102212464, %v175
    %v188 = vshrl.u32 920167782, %v176
    %v189 = vor.u32 %v187, %v188
    %v190 = vshll.u32 920167782, %v175
    %v191 = vshrl.u32 1326507024, %v176
    %v192 = vor.u32 %v190, %v191
    %vm193 = vcmp.lt.s32.totalorder %v174, 1
    %vm194 = vcmp.lt.s32.totalorder %v174, 2
    %vm195 = vcmp.lt.s32.totalorder %v174, 3
    %vm196 = vcmp.lt.s32.totalorder %v174, 4
    %v197 = vsel %vm193, %v177, %v180
    %v198 = vsel %vm196, %v186, 2102212464
    %v199 = vsel %vm195, %v183, %v198
    %v200 = vsel %vm194, %v197, %v199
    %v201 = vsel %vm193, %v180, %v183
    %v202 = vsel %vm196, %v189, 920167782
    %v203 = vsel %vm195, %v186, %v202
    %v204 = vsel %vm194, %v201, %v203
    %v205 = vsel %vm193, %v183, %v186
    %v206 = vsel %vm196, %v192, 1326507024
    %v207 = vsel %vm195, %v189, %v206
    %v208 = vsel %vm194, %v205, %v207
    %v209 = vshll.u32 %v169, 8
    %v210 = vmul.u32.u64.compose %v209, %v208
    %v211 = vextract.low.u32 %v210
    %v212 = vextract.high.u32 %v210
    %v213 = vmul.u32.u64.compose %v209, %v204
    %v214 = vextract.low.u32 %v213
    %v215 = vextract.high.u32 %v213
    %v216 = vmul.u32 %v209, %v200
    %v217 = vadd.s32 %v212, %v214
    %vm218 = vc.u32 %v212, %v214
    %v219 = vadd.s32 %v215, 1
    %v220 = vsel %vm218, %v219, %v215
    %v221 = vadd.s32 %v216, %v220
    %v222 = vadd.s32 %v221, 536870912
    %v223 = vshrl.u32 %v222, 30
    %v224 = vshll.u32 %v223, 30
    %v225 = vsub.s32 %v221, %v224
    %vm226 = vcmp.lt.s32.totalorder %v225, 0
    %v227 = vsub.s32 0, %v225
    %v228 = vsel %vm226, %v227, %v225
    %v229 = vclz %v228
    %v230 = vsub.s32 %v229, 2
    %vm231 = vcmp.gt.s32.totalorder 0, %v230
    %v232 = vsel %vm231, 0, %v230
    %v233 = vsub.s32 32, %v232
    %v234 = vshll.u32 %v225, %v232
    %v235 = vshrl.u32 %v217, %v233
    %v236 = vor.u32 %v234, %v235
    %v237 = vsub.s32 4294967266, %v232
    %v238 = vadd.s32 %v237, 127
    %v239 = vshll.u32 %v238, 23
    %v240 = vor.u32 4788187, %v239
    %v241 = vand.u32 2147483647, %v240
    %v243 = vcvt.s32.f32 %v236
    %v244 = vmul.f32 %v243, %v241
    %v245 = vxor.u32 %v244, 2147483648
    %v246 = vsel %vm163, %v245, %v244
    %v247 = vsub.s32 4, %v223
    %v248 = vsel %vm163, %v247, %v223
    %v249 = vsel %vm162, %v48, %v246
    %v250 = vsel %vm162, 0, %v248
    %v251 = vcosq.f32.pop %v249
    %v252 = vsinq.f32.pop %v249
    %vm253 = vweird.f32 %v48
    %v254 = vadd.s32 %v250, 3
    %v255 = vand.u32 %v254, 3
    %vm256 = vcmp.lt.s32.totalorder %v255, 2
    %vm257 = vcmp.eq.s32.totalorder %v255, 0
    %v258 = vxor.u32 %v252, 2147483648
    %v259 = vsel %vm257, %v251, %v258
    %vm260 = vcmp.eq.s32.totalorder %v255, 2
    %v261 = vxor.u32 %v251, 2147483648
    %v262 = vsel %vm260, %v261, %v252
    %v263 = vsel %vm256, %v259, %v262
    %v264 = vsel %vm253, nan, %v263
    %v265 = vmul.f32 %v44, 0.5
    %v266 = vmul.f32 %v46, 0.5
    %v267 = vmul.f32 %v265, -1.0
    %v268 = vmul.f32 %v266, -1.0
    %v269 = vmul.f32 %v267, %v160
    %v270 = vadd.f32 %v40, %v269
    %v271 = vmul.f32 %v268, %v264
    %v272 = vsub.f32 %v270, %v271
    %v273 = vmul.f32 %v267, %v264
    %v274 = vadd.f32 %v42, %v273
    %v275 = vmul.f32 %v268, %v160
    %v276 = vadd.f32 %v274, %v275
    %v277 = vmul.f32 %v265, %v160
    %v278 = vadd.f32 %v40, %v277
    %v279 = vsub.f32 %v278, %v271
    %v280 = vmul.f32 %v265, %v264
    %v281 = vadd.f32 %v42, %v280
    %v282 = vadd.f32 %v281, %v275
    %v283 = vmul.f32 %v266, %v264
    %v284 = vsub.f32 %v278, %v283
    %v285 = vmul.f32 %v266, %v160
    %v286 = vadd.f32 %v281, %v285
    %v287 = vsub.f32 %v270, %v283
    %v288 = vadd.f32 %v274, %v285
    %v289 = vand.u32 2147483647, %v57
    %vm290 = vcmp.le.f32.partialorder %v289, 0.7853982
    %vm291 = vcmp.lt.s32.totalorder %v57, 0
    %v292 = vand.u32 %v57, 2139095040
    %v293 = vshrl.u32 %v292, 23
    %v294 = vsub.s32 %v293, 127
    %v295 = vand.u32 2147483647, %v57
    %v296 = vand.u32 %v295, 8388607
    %v297 = vor.u32 %v296, 8388608
    %v298 = vsub.s32 0, %v297
    %v299 = vadd.s32 %v294, 1
    %vm300 = vcmp.gt.s32.totalorder %v299, 0
    %v301 = vsel %vm300, %v299, 0
    %v302 = vshrl.u32 %v301, 5
    %v303 = vand.u32 %v301, 31
    %v304 = vsub.s32 32, %v303
    %v305 = vshrl.u32 683565275, %v304
    %v306 = vshll.u32 683565275, %v303
    %v307 = vshrl.u32 2475754826, %v304
    %v308 = vor.u32 %v306, %v307
    %v309 = vshll.u32 2475754826, %v303
    %v310 = vshrl.u32 2131351028, %v304
    %v311 = vor.u32 %v309, %v310
    %v312 = vshll.u32 2131351028, %v303
    %v313 = vshrl.u32 2102212464, %v304
    %v314 = vor.u32 %v312, %v313
    %v315 = vshll.u32 2102212464, %v303
    %v316 = vshrl.u32 920167782, %v304
    %v317 = vor.u32 %v315, %v316
    %v318 = vshll.u32 920167782, %v303
    %v319 = vshrl.u32 1326507024, %v304
    %v320 = vor.u32 %v318, %v319
    %vm321 = vcmp.lt.s32.totalorder %v302, 1
    %vm322 = vcmp.lt.s32.totalorder %v302, 2
    %vm323 = vcmp.lt.s32.totalorder %v302, 3
    %vm324 = vcmp.lt.s32.totalorder %v302, 4
    %v325 = vsel %vm321, %v305, %v308
    %v326 = vsel %vm324, %v314, 2102212464
    %v327 = vsel %vm323, %v311, %v326
    %v328 = vsel %vm322, %v325, %v327
    %v329 = vsel %vm321, %v308, %v311
    %v330 = vsel %vm324, %v317, 920167782
    %v331 = vsel %vm323, %v314, %v330
    %v332 = vsel %vm322, %v329, %v331
    %v333 = vsel %vm321, %v311, %v314
    %v334 = vsel %vm324, %v320, 1326507024
    %v335 = vsel %vm323, %v317, %v334
    %v336 = vsel %vm322, %v333, %v335
    %v337 = vshll.u32 %v297, 8
    %v338 = vmul.u32.u64.compose %v337, %v336
    %v339 = vextract.low.u32 %v338
    %v340 = vextract.high.u32 %v338
    %v341 = vmul.u32.u64.compose %v337, %v332
    %v342 = vextract.low.u32 %v341
    %v343 = vextract.high.u32 %v341
    %v344 = vmul.u32 %v337, %v328
    %v345 = vadd.s32 %v340, %v342
    %vm346 = vc.u32 %v340, %v342
    %v347 = vadd.s32 %v343, 1
    %v348 = vsel %vm346, %v347, %v343
    %v349 = vadd.s32 %v344, %v348
    %v350 = vadd.s32 %v349, 536870912
    %v351 = vshrl.u32 %v350, 30
    %v352 = vshll.u32 %v351, 30
    %v353 = vsub.s32 %v349, %v352
    %vm354 = vcmp.lt.s32.totalorder %v353, 0
    %v355 = vsub.s32 0, %v353
    %v356 = vsel %vm354, %v355, %v353
    %v357 = vclz %v356
    %v358 = vsub.s32 %v357, 2
    %vm359 = vcmp.gt.s32.totalorder 0, %v358
    %v360 = vsel %vm359, 0, %v358
    %v361 = vsub.s32 32, %v360
    %v362 = vshll.u32 %v353, %v360
    %v363 = vshrl.u32 %v345, %v361
    %v364 = vor.u32 %v362, %v363
    %v365 = vsub.s32 4294967266, %v360
    %v366 = vadd.s32 %v365, 127
    %v367 = vshll.u32 %v366, 23
    %v368 = vor.u32 4788187, %v367
    %v369 = vand.u32 2147483647, %v368
    %v371 = vcvt.s32.f32 %v364
    %v372 = vmul.f32 %v371, %v369
    %v373 = vxor.u32 %v372, 2147483648
    %v374 = vsel %vm291, %v373, %v372
    %v375 = vsub.s32 4, %v351
    %v376 = vsel %vm291, %v375, %v351
    %v377 = vsel %vm290, %v57, %v374
    %v378 = vsel %vm290, 0, %v376
    %v379 = vcosq.f32.pop %v377
    %v380 = vsinq.f32.pop %v377
    %vm381 = vweird.f32 %v57
    %v382 = vand.u32 %v378, 3
    %vm383 = vcmp.lt.s32.totalorder %v382, 2
    %vm384 = vcmp.eq.s32.totalorder %v382, 0
    %v385 = vxor.u32 %v380, 2147483648
    %v386 = vsel %vm384, %v379, %v385
    %vm387 = vcmp.eq.s32.totalorder %v382, 2
    %v388 = vxor.u32 %v379, 2147483648
    %v389 = vsel %vm387, %v388, %v380
    %v390 = vsel %vm383, %v386, %v389
    %v391 = vsel %vm381, nan, %v390
    %v392 = vand.u32 2147483647, %v57
    %vm393 = vcmp.le.f32.partialorder %v392, 0.7853982
    %vm394 = vcmp.lt.s32.totalorder %v57, 0
    %v395 = vand.u32 %v57, 2139095040
    %v396 = vshrl.u32 %v395, 23
    %v397 = vsub.s32 %v396, 127
    %v398 = vand.u32 2147483647, %v57
    %v399 = vand.u32 %v398, 8388607
    %v400 = vor.u32 %v399, 8388608
    %v401 = vsub.s32 0, %v400
    %v402 = vadd.s32 %v397, 1
    %vm403 = vcmp.gt.s32.totalorder %v402, 0
    %v404 = vsel %vm403, %v402, 0
    %v405 = vshrl.u32 %v404, 5
    %v406 = vand.u32 %v404, 31
    %v407 = vsub.s32 32, %v406
    %v408 = vshrl.u32 683565275, %v407
    %v409 = vshll.u32 683565275, %v406
    %v410 = vshrl.u32 2475754826, %v407
    %v411 = vor.u32 %v409, %v410
    %v412 = vshll.u32 2475754826, %v406
    %v413 = vshrl.u32 2131351028, %v407
    %v414 = vor.u32 %v412, %v413
    %v415 = vshll.u32 2131351028, %v406
    %v416 = vshrl.u32 2102212464, %v407
    %v417 = vor.u32 %v415, %v416
    %v418 = vshll.u32 2102212464, %v406
    %v419 = vshrl.u32 920167782, %v407
    %v420 = vor.u32 %v418, %v419
    %v421 = vshll.u32 920167782, %v406
    %v422 = vshrl.u32 1326507024, %v407
    %v423 = vor.u32 %v421, %v422
    %vm424 = vcmp.lt.s32.totalorder %v405, 1
    %vm425 = vcmp.lt.s32.totalorder %v405, 2
    %vm426 = vcmp.lt.s32.totalorder %v405, 3
    %vm427 = vcmp.lt.s32.totalorder %v405, 4
    %v428 = vsel %vm424, %v408, %v411
    %v429 = vsel %vm427, %v417, 2102212464
    %v430 = vsel %vm426, %v414, %v429
    %v431 = vsel %vm425, %v428, %v430
    %v432 = vsel %vm424, %v411, %v414
    %v433 = vsel %vm427, %v420, 920167782
    %v434 = vsel %vm426, %v417, %v433
    %v435 = vsel %vm425, %v432, %v434
    %v436 = vsel %vm424, %v414, %v417
    %v437 = vsel %vm427, %v423, 1326507024
    %v438 = vsel %vm426, %v420, %v437
    %v439 = vsel %vm425, %v436, %v438
    %v440 = vshll.u32 %v400, 8
    %v441 = vmul.u32.u64.compose %v440, %v439
    %v442 = vextract.low.u32 %v441
    %v443 = vextract.high.u32 %v441
    %v444 = vmul.u32.u64.compose %v440, %v435
    %v445 = vextract.low.u32 %v444
    %v446 = vextract.high.u32 %v444
    %v447 = vmul.u32 %v440, %v431
    %v448 = vadd.s32 %v443, %v445
    %vm449 = vc.u32 %v443, %v445
    %v450 = vadd.s32 %v446, 1
    %v451 = vsel %vm449, %v450, %v446
    %v452 = vadd.s32 %v447, %v451
    %v453 = vadd.s32 %v452, 536870912
    %v454 = vshrl.u32 %v453, 30
    %v455 = vshll.u32 %v454, 30
    %v456 = vsub.s32 %v452, %v455
    %vm457 = vcmp.lt.s32.totalorder %v456, 0
    %v458 = vsub.s32 0, %v456
    %v459 = vsel %vm457, %v458, %v456
    %v460 = vclz %v459
    %v461 = vsub.s32 %v460, 2
    %vm462 = vcmp.gt.s32.totalorder 0, %v461
    %v463 = vsel %vm462, 0, %v461
    %v464 = vsub.s32 32, %v463
    %v465 = vshll.u32 %v456, %v463
    %v466 = vshrl.u32 %v448, %v464
    %v467 = vor.u32 %v465, %v466
    %v468 = vsub.s32 4294967266, %v463
    %v469 = vadd.s32 %v468, 127
    %v470 = vshll.u32 %v469, 23
    %v471 = vor.u32 4788187, %v470
    %v472 = vand.u32 2147483647, %v471
    %v474 = vcvt.s32.f32 %v467
    %v475 = vmul.f32 %v474, %v472
    %v476 = vxor.u32 %v475, 2147483648
    %v477 = vsel %vm394, %v476, %v475
    %v478 = vsub.s32 4, %v454
    %v479 = vsel %vm394, %v478, %v454
    %v480 = vsel %vm393, %v57, %v477
    %v481 = vsel %vm393, 0, %v479
    %v482 = vcosq.f32.pop %v480
    %v483 = vsinq.f32.pop %v480
    %vm484 = vweird.f32 %v57
    %v485 = vadd.s32 %v481, 3
    %v486 = vand.u32 %v485, 3
    %vm487 = vcmp.lt.s32.totalorder %v486, 2
    %vm488 = vcmp.eq.s32.totalorder %v486, 0
    %v489 = vxor.u32 %v483, 2147483648
    %v490 = vsel %vm488, %v482, %v489
    %vm491 = vcmp.eq.s32.totalorder %v486, 2
    %v492 = vxor.u32 %v482, 2147483648
    %v493 = vsel %vm491, %v492, %v483
    %v494 = vsel %vm487, %v490, %v493
    %v495 = vsel %vm484, nan, %v494
    %v496 = vmul.f32 %v53, 0.5
    %v497 = vmul.f32 %v55, 0.5
    %v498 = vmul.f32 %v496, -1.0
    %v499 = vmul.f32 %v497, -1.0
    %v500 = vmul.f32 %v498, %v391
    %v501 = vadd.f32 %v49, %v500
    %v502 = vmul.f32 %v499, %v495
    %v503 = vsub.f32 %v501, %v502
    %v504 = vmul.f32 %v498, %v495
    %v505 = vadd.f32 %v51, %v504
    %v506 = vmul.f32 %v499, %v391
    %v507 = vadd.f32 %v505, %v506
    %v508 = vmul.f32 %v496, %v391
    %v509 = vadd.f32 %v49, %v508
    %v510 = vsub.f32 %v509, %v502
    %v511 = vmul.f32 %v496, %v495
    %v512 = vadd.f32 %v51, %v511
    %v513 = vadd.f32 %v512, %v506
    %v514 = vmul.f32 %v497, %v495
    %v515 = vsub.f32 %v509, %v514
    %v516 = vmul.f32 %v497, %v391
    %v517 = vadd.f32 %v512, %v516
    %v518 = vsub.f32 %v501, %v514
    %v519 = vadd.f32 %v505, %v516
    %v520 = vsub.f32 %v510, %v503
    %v521 = vsub.f32 %v513, %v507
    %v522 = vmul.f32 %v520, %v507
    %v523 = vmul.f32 %v521, %v503
    %v524 = vsub.f32 %v522, %v523
    %v525 = vsub.f32 %v515, %v510
    %v526 = vsub.f32 %v517, %v513
    %v527 = vmul.f32 %v525, %v513
    %v528 = vmul.f32 %v526, %v510
    %v529 = vsub.f32 %v527, %v528
    %v530 = vsub.f32 %v518, %v515
    %v531 = vsub.f32 %v519, %v517
    %v532 = vmul.f32 %v530, %v517
    %v533 = vmul.f32 %v531, %v515
    %v534 = vsub.f32 %v532, %v533
    %v535 = vsub.f32 %v503, %v518
    %v536 = vsub.f32 %v507, %v519
    %v537 = vmul.f32 %v535, %v519
    %v538 = vmul.f32 %v536, %v518
    %v539 = vsub.f32 %v537, %v538
    %v540 = vsub.f32 %v279, %v272
    %v541 = vsub.f32 %v282, %v276
    %v542 = vmul.f32 %v540, %v276
    %v543 = vmul.f32 %v541, %v272
    %v544 = vsub.f32 %v542, %v543
    %v545 = vsub.f32 %v284, %v279
    %v546 = vsub.f32 %v286, %v282
    %v547 = vmul.f32 %v545, %v282
    %v548 = vmul.f32 %v546, %v279
    %v549 = vsub.f32 %v547, %v548
    %v550 = vsub.f32 %v287, %v284
    %v551 = vsub.f32 %v288, %v286
    %v552 = vmul.f32 %v550, %v286
    %v553 = vmul.f32 %v551, %v284
    %v554 = vsub.f32 %v552, %v553
    %v555 = vsub.f32 %v272, %v287
    %v556 = vsub.f32 %v276, %v288
    %v557 = vmul.f32 %v555, %v288
    %v558 = vmul.f32 %v556, %v287
    %v559 = vsub.f32 %v557, %v558
    %v560 = vmul.f32 %v520, %v276
    %v561 = vmul.f32 %v521, %v272
    %v562 = vsub.f32 %v560, %v561
    %v563 = vsub.f32 %v562, %v524
    %v564 = vmul.f32 %v520, %v541
    %v565 = vmul.f32 %v521, %v540
    %v566 = vsub.f32 %v564, %v565
    %v567 = vand.u32 2147483647, %v566
    %vm568 = vcmp.lt.f32.partialorder %v567, 1e-12
    %v569 = vsel %vm568, 1e-12, %v566
    %v570 = vsub.f32 0.0, %v563
    %v571 = vrcp.pop %v569
    %v572 = vmul.f32 %v570, %v571
    %vm573 = vcmp.gt.f32.partialorder %v566, 1e-12
    %v574 = vmax.f32 %v572, 0.0
    %v575 = vsel %vm573, %v574, 0.0
    %vm576 = vcmp.lt.f32.partialorder %v566, -1e-12
    %v577 = vmin.f32 %v572, 1.0
    %v578 = vsel %vm576, %v577, 1.0
    %vm579 = vcmp.gt.f32.partialorder %v567, 1e-12
    %vm580 = vcmp.ge.f32.partialorder %v563, 0.0
    %vm581 = vmor %vm579, %vm580
    %v582 = vmul.f32 %v525, %v276
    %v583 = vmul.f32 %v526, %v272
    %v584 = vsub.f32 %v582, %v583
    %v585 = vsub.f32 %v584, %v529
    %v586 = vmul.f32 %v525, %v541
    %v587 = vmul.f32 %v526, %v540
    %v588 = vsub.f32 %v586, %v587
    %v589 = vand.u32 2147483647, %v588
    %vm590 = vcmp.lt.f32.partialorder %v589, 1e-12
    %v591 = vsel %vm590, 1e-12, %v588
    %v592 = vsub.f32 0.0, %v585
    %v593 = vrcp.pop %v591
    %v594 = vmul.f32 %v592, %v593
    %vm595 = vcmp.gt.f32.partialorder %v588, 1e-12
    %v596 = vmax.f32 %v575, %v594
    %v597 = vsel %vm595, %v596, %v575
    %vm598 = vcmp.lt.f32.partialorder %v588, -1e-12
    %v599 = vmin.f32 %v578, %v594
    %v600 = vsel %vm598, %v599, %v578
    %vm601 = vcmp.gt.f32.partialorder %v589, 1e-12
    %vm602 = vcmp.ge.f32.partialorder %v585, 0.0
    %vm603 = vmor %vm601, %vm602
    %vm604 = vmand %vm581, %vm603
    %v605 = vmul.f32 %v530, %v276
    %v606 = vmul.f32 %v531, %v272
    %v607 = vsub.f32 %v605, %v606
    %v608 = vsub.f32 %v607, %v534
    %v609 = vmul.f32 %v530, %v541
    %v610 = vmul.f32 %v531, %v540
    %v611 = vsub.f32 %v609, %v610
    %v612 = vand.u32 2147483647, %v611
    %vm613 = vcmp.lt.f32.partialorder %v612, 1e-12
    %v614 = vsel %vm613, 1e-12, %v611
    %v615 = vsub.f32 0.0, %v608
    %v616 = vrcp.pop %v614
    %v617 = vmul.f32 %v615, %v616
    %vm618 = vcmp.gt.f32.partialorder %v611, 1e-12
    %v619 = vmax.f32 %v597, %v617
    %v620 = vsel %vm618, %v619, %v597
    %vm621 = vcmp.lt.f32.partialorder %v611, -1e-12
    %v622 = vmin.f32 %v600, %v617
    %v623 = vsel %vm621, %v622, %v600
    %vm624 = vcmp.gt.f32.partialorder %v612, 1e-12
    %vm625 = vcmp.ge.f32.partialorder %v608, 0.0
    %vm626 = vmor %vm624, %vm625
    %vm627 = vmand %vm604, %vm626
    %v628 = vmul.f32 %v535, %v276
    %v629 = vmul.f32 %v536, %v272
    %v630 = vsub.f32 %v628, %v629
    %v631 = vsub.f32 %v630, %v539
    %v632 = vmul.f32 %v535, %v541
    %v633 = vmul.f32 %v536, %v540
    %v634 = vsub.f32 %v632, %v633
    %v635 = vand.u32 2147483647, %v634
    %vm636 = vcmp.lt.f32.partialorder %v635, 1e-12
    %v637 = vsel %vm636, 1e-12, %v634
    %v638 = vsub.f32 0.0, %v631
    %v639 = vrcp.pop %v637
    %v640 = vmul.f32 %v638, %v639
    %vm641 = vcmp.gt.f32.partialorder %v634, 1e-12
    %v642 = vmax.f32 %v620, %v640
    %v643 = vsel %vm641, %v642, %v620
    %vm644 = vcmp.lt.f32.partialorder %v634, -1e-12
    %v645 = vmin.f32 %v623, %v640
    %v646 = vsel %vm644, %v645, %v623
    %vm647 = vcmp.gt.f32.partialorder %v635, 1e-12
    %vm648 = vcmp.ge.f32.partialorder %v631, 0.0
    %vm649 = vmor %vm647, %vm648
    %vm650 = vmand %vm627, %vm649
    %vm651 = vcmp.gt.f32.partialorder %v646, %v643
    %vm652 = vmand %vm650, %vm651
    %v653 = vmul.f32 %v643, %v540
    %v654 = vadd.f32 %v272, %v653
    %v655 = vmul.f32 %v643, %v541
    %v656 = vadd.f32 %v276, %v655
    %v657 = vmul.f32 %v646, %v540
    %v658 = vadd.f32 %v272, %v657
    %v659 = vmul.f32 %v646, %v541
    %v660 = vadd.f32 %v276, %v659
    %v661 = vmul.f32 %v654, %v660
    %v662 = vmul.f32 %v658, %v656
    %v663 = vsub.f32 %v661, %v662
    %v664 = vmul.f32 %v663, 0.5
    %v665 = vsel %vm652, %v664, 0.0
    %v666 = vadd.f32 %v665, 0.0
    %v667 = vmul.f32 %v520, %v282
    %v668 = vmul.f32 %v521, %v279
    %v669 = vsub.f32 %v667, %v668
    %v670 = vsub.f32 %v669, %v524
    %v671 = vmul.f32 %v520, %v546
    %v672 = vmul.f32 %v521, %v545
    %v673 = vsub.f32 %v671, %v672
    %v674 = vand.u32 2147483647, %v673
    %vm675 = vcmp.lt.f32.partialorder %v674, 1e-12
    %v676 = vsel %vm675, 1e-12, %v673
    %v677 = vsub.f32 0.0, %v670
    %v678 = vrcp.pop %v676
    %v679 = vmul.f32 %v677, %v678
    %vm680 = vcmp.gt.f32.partialorder %v673, 1e-12
    %v681 = vmax.f32 %v679, 0.0
    %v682 = vsel %vm680, %v681, 0.0
    %vm683 = vcmp.lt.f32.partialorder %v673, -1e-12
    %v684 = vmin.f32 %v679, 1.0
    %v685 = vsel %vm683, %v684, 1.0
    %vm686 = vcmp.gt.f32.partialorder %v674, 1e-12
    %vm687 = vcmp.ge.f32.partialorder %v670, 0.0
    %vm688 = vmor %vm686, %vm687
    %v689 = vmul.f32 %v525, %v282
    %v690 = vmul.f32 %v526, %v279
    %v691 = vsub.f32 %v689, %v690
    %v692 = vsub.f32 %v691, %v529
    %v693 = vmul.f32 %v525, %v546
    %v694 = vmul.f32 %v526, %v545
    %v695 = vsub.f32 %v693, %v694
    %v696 = vand.u32 2147483647, %v695
    %vm697 = vcmp.lt.f32.partialorder %v696, 1e-12
    %v698 = vsel %vm697, 1e-12, %v695
    %v699 = vsub.f32 0.0, %v692
    %v700 = vrcp.pop %v698
    %v701 = vmul.f32 %v699, %v700
    %vm702 = vcmp.gt.f32.partialorder %v695, 1e-12
    %v703 = vmax.f32 %v682, %v701
    %v704 = vsel %vm702, %v703, %v682
    %vm705 = vcmp.lt.f32.partialorder %v695, -1e-12
    %v706 = vmin.f32 %v685, %v701
    %v707 = vsel %vm705, %v706, %v685
    %vm708 = vcmp.gt.f32.partialorder %v696, 1e-12
    %vm709 = vcmp.ge.f32.partialorder %v692, 0.0
    %vm710 = vmor %vm708, %vm709
    %vm711 = vmand %vm688, %vm710
    %v712 = vmul.f32 %v530, %v282
    %v713 = vmul.f32 %v531, %v279
    %v714 = vsub.f32 %v712, %v713
    %v715 = vsub.f32 %v714, %v534
    %v716 = vmul.f32 %v530, %v546
    %v717 = vmul.f32 %v531, %v545
    %v718 = vsub.f32 %v716, %v717
    %v719 = vand.u32 2147483647, %v718
    %vm720 = vcmp.lt.f32.partialorder %v719, 1e-12
    %v721 = vsel %vm720, 1e-12, %v718
    %v722 = vsub.f32 0.0, %v715
    %v723 = vrcp.pop %v721
    %v724 = vmul.f32 %v722, %v723
    %vm725 = vcmp.gt.f32.partialorder %v718, 1e-12
    %v726 = vmax.f32 %v704, %v724
    %v727 = vsel %vm725, %v726, %v704
    %vm728 = vcmp.lt.f32.partialorder %v718, -1e-12
    %v729 = vmin.f32 %v707, %v724
    %v730 = vsel %vm728, %v729, %v707
    %vm731 = vcmp.gt.f32.partialorder %v719, 1e-12
    %vm732 = vcmp.ge.f32.partialorder %v715, 0.0
    %vm733 = vmor %vm731, %vm732
    %vm734 = vmand %vm711, %vm733
    %v735 = vmul.f32 %v535, %v282
    %v736 = vmul.f32 %v536, %v279
    %v737 = vsub.f32 %v735, %v736
    %v738 = vsub.f32 %v737, %v539
    %v739 = vmul.f32 %v535, %v546
    %v740 = vmul.f32 %v536, %v545
    %v741 = vsub.f32 %v739, %v740
    %v742 = vand.u32 2147483647, %v741
    %vm743 = vcmp.lt.f32.partialorder %v742, 1e-12
    %v744 = vsel %vm743, 1e-12, %v741
    %v745 = vsub.f32 0.0, %v738
    %v746 = vrcp.pop %v744
    %v747 = vmul.f32 %v745, %v746
    %vm748 = vcmp.gt.f32.partialorder %v741, 1e-12
    %v749 = vmax.f32 %v727, %v747
    %v750 = vsel %vm748, %v749, %v727
    %vm751 = vcmp.lt.f32.partialorder %v741, -1e-12
    %v752 = vmin.f32 %v730, %v747
    %v753 = vsel %vm751, %v752, %v730
    %vm754 = vcmp.gt.f32.partialorder %v742, 1e-12
    %vm755 = vcmp.ge.f32.partialorder %v738, 0.0
    %vm756 = vmor %vm754, %vm755
    %vm757 = vmand %vm734, %vm756
    %vm758 = vcmp.gt.f32.partialorder %v753, %v750
    %vm759 = vmand %vm757, %vm758
    %v760 = vmul.f32 %v750, %v545
    %v761 = vadd.f32 %v279, %v760
    %v762 = vmul.f32 %v750, %v546
    %v763 = vadd.f32 %v282, %v762
    %v764 = vmul.f32 %v753, %v545
    %v765 = vadd.f32 %v279, %v764
    %v766 = vmul.f32 %v753, %v546
    %v767 = vadd.f32 %v282, %v766
    %v768 = vmul.f32 %v761, %v767
    %v769 = vmul.f32 %v765, %v763
    %v770 = vsub.f32 %v768, %v769
    %v771 = vmul.f32 %v770, 0.5
    %v772 = vsel %vm759, %v771, 0.0
    %v773 = vadd.f32 %v666, %v772
    %v774 = vmul.f32 %v520, %v286
    %v775 = vmul.f32 %v521, %v284
    %v776 = vsub.f32 %v774, %v775
    %v777 = vsub.f32 %v776, %v524
    %v778 = vmul.f32 %v520, %v551
    %v779 = vmul.f32 %v521, %v550
    %v780 = vsub.f32 %v778, %v779
    %v781 = vand.u32 2147483647, %v780
    %vm782 = vcmp.lt.f32.partialorder %v781, 1e-12
    %v783 = vsel %vm782, 1e-12, %v780
    %v784 = vsub.f32 0.0, %v777
    %v785 = vrcp.pop %v783
    %v786 = vmul.f32 %v784, %v785
    %vm787 = vcmp.gt.f32.partialorder %v780, 1e-12
    %v788 = vmax.f32 %v786, 0.0
    %v789 = vsel %vm787, %v788, 0.0
    %vm790 = vcmp.lt.f32.partialorder %v780, -1e-12
    %v791 = vmin.f32 %v786, 1.0
    %v792 = vsel %vm790, %v791, 1.0
    %vm793 = vcmp.gt.f32.partialorder %v781, 1e-12
    %vm794 = vcmp.ge.f32.partialorder %v777, 0.0
    %vm795 = vmor %vm793, %vm794
    %v796 = vmul.f32 %v525, %v286
    %v797 = vmul.f32 %v526, %v284
    %v798 = vsub.f32 %v796, %v797
    %v799 = vsub.f32 %v798, %v529
    %v800 = vmul.f32 %v525, %v551
    %v801 = vmul.f32 %v526, %v550
    %v802 = vsub.f32 %v800, %v801
    %v803 = vand.u32 2147483647, %v802
    %vm804 = vcmp.lt.f32.partialorder %v803, 1e-12
    %v805 = vsel %vm804, 1e-12, %v802
    %v806 = vsub.f32 0.0, %v799
    %v807 = vrcp.pop %v805
    %v808 = vmul.f32 %v806, %v807
    %vm809 = vcmp.gt.f32.partialorder %v802, 1e-12
    %v810 = vmax.f32 %v789, %v808
    %v811 = vsel %vm809, %v810, %v789
    %vm812 = vcmp.lt.f32.partialorder %v802, -1e-12
    %v813 = vmin.f32 %v792, %v808
    %v814 = vsel %vm812, %v813, %v792
    %vm815 = vcmp.gt.f32.partialorder %v803, 1e-12
    %vm816 = vcmp.ge.f32.partialorder %v799, 0.0
    %vm817 = vmor %vm815, %vm816
    %vm818 = vmand %vm795, %vm817
    %v819 = vmul.f32 %v530, %v286
    %v820 = vmul.f32 %v531, %v284
    %v821 = vsub.f32 %v819, %v820
    %v822 = vsub.f32 %v821, %v534
    %v823 = vmul.f32 %v530, %v551
    %v824 = vmul.f32 %v531, %v550
    %v825 = vsub.f32 %v823, %v824
    %v826 = vand.u32 2147483647, %v825
    %vm827 = vcmp.lt.f32.partialorder %v826, 1e-12
    %v828 = vsel %vm827, 1e-12, %v825
    %v829 = vsub.f32 0.0, %v822
    %v830 = vrcp.pop %v828
    %v831 = vmul.f32 %v829, %v830
    %vm832 = vcmp.gt.f32.partialorder %v825, 1e-12
    %v833 = vmax.f32 %v811, %v831
    %v834 = vsel %vm832, %v833, %v811
    %vm835 = vcmp.lt.f32.partialorder %v825, -1e-12
    %v836 = vmin.f32 %v814, %v831
    %v837 = vsel %vm835, %v836, %v814
    %vm838 = vcmp.gt.f32.partialorder %v826, 1e-12
    %vm839 = vcmp.ge.f32.partialorder %v822, 0.0
    %vm840 = vmor %vm838, %vm839
    %vm841 = vmand %vm818, %vm840
    %v842 = vmul.f32 %v535, %v286
    %v843 = vmul.f32 %v536, %v284
    %v844 = vsub.f32 %v842, %v843
    %v845 = vsub.f32 %v844, %v539
    %v846 = vmul.f32 %v535, %v551
    %v847 = vmul.f32 %v536, %v550
    %v848 = vsub.f32 %v846, %v847
    %v849 = vand.u32 2147483647, %v848
    %vm850 = vcmp.lt.f32.partialorder %v849, 1e-12
    %v851 = vsel %vm850, 1e-12, %v848
    %v852 = vsub.f32 0.0, %v845
    %v853 = vrcp.pop %v851
    %v854 = vmul.f32 %v852, %v853
    %vm855 = vcmp.gt.f32.partialorder %v848, 1e-12
    %v856 = vmax.f32 %v834, %v854
    %v857 = vsel %vm855, %v856, %v834
    %vm858 = vcmp.lt.f32.partialorder %v848, -1e-12
    %v859 = vmin.f32 %v837, %v854
    %v860 = vsel %vm858, %v859, %v837
    %vm861 = vcmp.gt.f32.partialorder %v849, 1e-12
    %vm862 = vcmp.ge.f32.partialorder %v845, 0.0
    %vm863 = vmor %vm861, %vm862
    %vm864 = vmand %vm841, %vm863
    %vm865 = vcmp.gt.f32.partialorder %v860, %v857
    %vm866 = vmand %vm864, %vm865
    %v867 = vmul.f32 %v857, %v550
    %v868 = vadd.f32 %v284, %v867
    %v869 = vmul.f32 %v857, %v551
    %v870 = vadd.f32 %v286, %v869
    %v871 = vmul.f32 %v860, %v550
    %v872 = vadd.f32 %v284, %v871
    %v873 = vmul.f32 %v860, %v551
    %v874 = vadd.f32 %v286, %v873
    %v875 = vmul.f32 %v868, %v874
    %v876 = vmul.f32 %v872, %v870
    %v877 = vsub.f32 %v875, %v876
    %v878 = vmul.f32 %v877, 0.5
    %v879 = vsel %vm866, %v878, 0.0
    %v880 = vadd.f32 %v773, %v879
    %v881 = vmul.f32 %v520, %v288
    %v882 = vmul.f32 %v521, %v287
    %v883 = vsub.f32 %v881, %v882
    %v884 = vsub.f32 %v883, %v524
    %v885 = vmul.f32 %v520, %v556
    %v886 = vmul.f32 %v521, %v555
    %v887 = vsub.f32 %v885, %v886
    %v888 = vand.u32 2147483647, %v887
    %vm889 = vcmp.lt.f32.partialorder %v888, 1e-12
    %v890 = vsel %vm889, 1e-12, %v887
    %v891 = vsub.f32 0.0, %v884
    %v892 = vrcp.pop %v890
    %v893 = vmul.f32 %v891, %v892
    %vm894 = vcmp.gt.f32.partialorder %v887, 1e-12
    %v895 = vmax.f32 %v893, 0.0
    %v896 = vsel %vm894, %v895, 0.0
    %vm897 = vcmp.lt.f32.partialorder %v887, -1e-12
    %v898 = vmin.f32 %v893, 1.0
    %v899 = vsel %vm897, %v898, 1.0
    %vm900 = vcmp.gt.f32.partialorder %v888, 1e-12
    %vm901 = vcmp.ge.f32.partialorder %v884, 0.0
    %vm902 = vmor %vm900, %vm901
    %v903 = vmul.f32 %v525, %v288
    %v904 = vmul.f32 %v526, %v287
    %v905 = vsub.f32 %v903, %v904
    %v906 = vsub.f32 %v905, %v529
    %v907 = vmul.f32 %v525, %v556
    %v908 = vmul.f32 %v526, %v555
    %v909 = vsub.f32 %v907, %v908
    %v910 = vand.u32 2147483647, %v909
    %vm911 = vcmp.lt.f32.partialorder %v910, 1e-12
    %v912 = vsel %vm911, 1e-12, %v909
    %v913 = vsub.f32 0.0, %v906
    %v914 = vrcp.pop %v912
    %v915 = vmul.f32 %v913, %v914
    %vm916 = vcmp.gt.f32.partialorder %v909, 1e-12
    %v917 = vmax.f32 %v896, %v915
    %v918 = vsel %vm916, %v917, %v896
    %vm919 = vcmp.lt.f32.partialorder %v909, -1e-12
    %v920 = vmin.f32 %v899, %v915
    %v921 = vsel %vm919, %v920, %v899
    %vm922 = vcmp.gt.f32.partialorder %v910, 1e-12
    %vm923 = vcmp.ge.f32.partialorder %v906, 0.0
    %vm924 = vmor %vm922, %vm923
    %vm925 = vmand %vm902, %vm924
    %v926 = vmul.f32 %v530, %v288
    %v927 = vmul.f32 %v531, %v287
    %v928 = vsub.f32 %v926, %v927
    %v929 = vsub.f32 %v928, %v534
    %v930 = vmul.f32 %v530, %v556
    %v931 = vmul.f32 %v531, %v555
    %v932 = vsub.f32 %v930, %v931
    %v933 = vand.u32 2147483647, %v932
    %vm934 = vcmp.lt.f32.partialorder %v933, 1e-12
    %v935 = vsel %vm934, 1e-12, %v932
    %v936 = vsub.f32 0.0, %v929
    %v937 = vrcp.pop %v935
    %v938 = vmul.f32 %v936, %v937
    %vm939 = vcmp.gt.f32.partialorder %v932, 1e-12
    %v940 = vmax.f32 %v918, %v938
    %v941 = vsel %vm939, %v940, %v918
    %vm942 = vcmp.lt.f32.partialorder %v932, -1e-12
    %v943 = vmin.f32 %v921, %v938
    %v944 = vsel %vm942, %v943, %v921
    %vm945 = vcmp.gt.f32.partialorder %v933, 1e-12
    %vm946 = vcmp.ge.f32.partialorder %v929, 0.0
    %vm947 = vmor %vm945, %vm946
    %vm948 = vmand %vm925, %vm947
    %v949 = vmul.f32 %v535, %v288
    %v950 = vmul.f32 %v536, %v287
    %v951 = vsub.f32 %v949, %v950
    %v952 = vsub.f32 %v951, %v539
    %v953 = vmul.f32 %v535, %v556
    %v954 = vmul.f32 %v536, %v555
    %v955 = vsub.f32 %v953, %v954
    %v956 = vand.u32 2147483647, %v955
    %vm957 = vcmp.lt.f32.partialorder %v956, 1e-12
    %v958 = vsel %vm957, 1e-12, %v955
    %v959 = vsub.f32 0.0, %v952
    %v960 = vrcp.pop %v958
    %v961 = vmul.f32 %v959, %v960
    %vm962 = vcmp.gt.f32.partialorder %v955, 1e-12
    %v963 = vmax.f32 %v941, %v961
    %v964 = vsel %vm962, %v963, %v941
    %vm965 = vcmp.lt.f32.partialorder %v955, -1e-12
    %v966 = vmin.f32 %v944, %v961
    %v967 = vsel %vm965, %v966, %v944
    %vm968 = vcmp.gt.f32.partialorder %v956, 1e-12
    %vm969 = vcmp.ge.f32.partialorder %v952, 0.0
    %vm970 = vmor %vm968, %vm969
    %vm971 = vmand %vm948, %vm970
    %vm972 = vcmp.gt.f32.partialorder %v967, %v964
    %vm973 = vmand %vm971, %vm972
    %v974 = vmul.f32 %v964, %v555
    %v975 = vadd.f32 %v287, %v974
    %v976 = vmul.f32 %v964, %v556
    %v977 = vadd.f32 %v288, %v976
    %v978 = vmul.f32 %v967, %v555
    %v979 = vadd.f32 %v287, %v978
    %v980 = vmul.f32 %v967, %v556
    %v981 = vadd.f32 %v288, %v980
    %v982 = vmul.f32 %v975, %v981
    %v983 = vmul.f32 %v979, %v977
    %v984 = vsub.f32 %v982, %v983
    %v985 = vmul.f32 %v984, 0.5
    %v986 = vsel %vm973, %v985, 0.0
    %v987 = vadd.f32 %v880, %v986
    %v988 = vmul.f32 %v540, %v507
    %v989 = vmul.f32 %v541, %v503
    %v990 = vsub.f32 %v988, %v989
    %v991 = vsub.f32 %v990, %v544
    %v992 = vsub.f32 %v991, 1e-06
    %v993 = vsub.f32 %v565, %v564
    %v994 = vand.u32 2147483647, %v993
    %vm995 = vcmp.lt.f32.partialorder %v994, 1e-12
    %v996 = vsel %vm995, 1e-12, %v993
    %v997 = vsub.f32 0.0, %v992
    %v998 = vrcp.pop %v996
    %v999 = vmul.f32 %v997, %v998
    %vm1000 = vcmp.gt.f32.partialorder %v993, 1e-12
    %v1001 = vmax.f32 %v999, 0.0
    %v1002 = vsel %vm1000, %v1001, 0.0
    %vm1003 = vcmp.lt.f32.partialorder %v993, -1e-12
    %v1004 = vmin.f32 %v999, 1.0
    %v1005 = vsel %vm1003, %v1004, 1.0
    %vm1006 = vcmp.gt.f32.partialorder %v994, 1e-12
    %vm1007 = vcmp.ge.f32.partialorder %v992, 0.0
    %vm1008 = vmor %vm1006, %vm1007
    %v1009 = vmul.f32 %v545, %v507
    %v1010 = vmul.f32 %v546, %v503
    %v1011 = vsub.f32 %v1009, %v1010
    %v1012 = vsub.f32 %v1011, %v549
    %v1013 = vsub.f32 %v1012, 1e-06
    %v1014 = vsub.f32 %v672, %v671
    %v1015 = vand.u32 2147483647, %v1014
    %vm1016 = vcmp.lt.f32.partialorder %v1015, 1e-12
    %v1017 = vsel %vm1016, 1e-12, %v1014
    %v1018 = vsub.f32 0.0, %v1013
    %v1019 = vrcp.pop %v1017
    %v1020 = vmul.f32 %v1018, %v1019
    %vm1021 = vcmp.gt.f32.partialorder %v1014, 1e-12
    %v1022 = vmax.f32 %v1002, %v1020
    %v1023 = vsel %vm1021, %v1022, %v1002
    %vm1024 = vcmp.lt.f32.partialorder %v1014, -1e-12
    %v1025 = vmin.f32 %v1005, %v1020
    %v1026 = vsel %vm1024, %v1025, %v1005
    %vm1027 = vcmp.gt.f32.partialorder %v1015, 1e-12
    %vm1028 = vcmp.ge.f32.partialorder %v1013, 0.0
    %vm1029 = vmor %vm1027, %vm1028
    %vm1030 = vmand %vm1008, %vm1029
    %v1031 = vmul.f32 %v550, %v507
    %v1032 = vmul.f32 %v551, %v503
    %v1033 = vsub.f32 %v1031, %v1032
    %v1034 = vsub.f32 %v1033, %v554
    %v1035 = vsub.f32 %v1034, 1e-06
    %v1036 = vsub.f32 %v779, %v778
    %v1037 = vand.u32 2147483647, %v1036
    %vm1038 = vcmp.lt.f32.partialorder %v1037, 1e-12
    %v1039 = vsel %vm1038, 1e-12, %v1036
    %v1040 = vsub.f32 0.0, %v1035
    %v1041 = vrcp.pop %v1039
    %v1042 = vmul.f32 %v1040, %v1041
    %vm1043 = vcmp.gt.f32.partialorder %v1036, 1e-12
    %v1044 = vmax.f32 %v1023, %v1042
    %v1045 = vsel %vm1043, %v1044, %v1023
    %vm1046 = vcmp.lt.f32.partialorder %v1036, -1e-12
    %v1047 = vmin.f32 %v1026, %v1042
    %v1048 = vsel %vm1046, %v1047, %v1026
    %vm1049 = vcmp.gt.f32.partialorder %v1037, 1e-12
    %vm1050 = vcmp.ge.f32.partialorder %v1035, 0.0
    %vm1051 = vmor %vm1049, %vm1050
    %vm1052 = vmand %vm1030, %vm1051
    %v1053 = vmul.f32 %v555, %v507
    %v1054 = vmul.f32 %v556, %v503
    %v1055 = vsub.f32 %v1053, %v1054
    %v1056 = vsub.f32 %v1055, %v559
    %v1057 = vsub.f32 %v1056, 1e-06
    %v1058 = vsub.f32 %v886, %v885
    %v1059 = vand.u32 2147483647, %v1058
    %vm1060 = vcmp.lt.f32.partialorder %v1059, 1e-12
    %v1061 = vsel %vm1060, 1e-12, %v1058
    %v1062 = vsub.f32 0.0, %v1057
    %v1063 = vrcp.pop %v1061
    %v1064 = vmul.f32 %v1062, %v1063
    %vm1065 = vcmp.gt.f32.partialorder %v1058, 1e-12
    %v1066 = vmax.f32 %v1045, %v1064
    %v1067 = vsel %vm1065, %v1066, %v1045
    %vm1068 = vcmp.lt.f32.partialorder %v1058, -1e-12
    %v1069 = vmin.f32 %v1048, %v1064
    %v1070 = vsel %vm1068, %v1069, %v1048
    %vm1071 = vcmp.gt.f32.partialorder %v1059, 1e-12
    %vm1072 = vcmp.ge.f32.partialorder %v1057, 0.0
    %vm1073 = vmor %vm1071, %vm1072
    %vm1074 = vmand %vm1052, %vm1073
    %vm1075 = vcmp.gt.f32.partialorder %v1070, %v1067
    %vm1076 = vmand %vm1074, %vm1075
    %v1077 = vmul.f32 %v1067, %v520
    %v1078 = vadd.f32 %v503, %v1077
    %v1079 = vmul.f32 %v1067, %v521
    %v1080 = vadd.f32 %v507, %v1079
    %v1081 = vmul.f32 %v1070, %v520
    %v1082 = vadd.f32 %v503, %v1081
    %v1083 = vmul.f32 %v1070, %v521
    %v1084 = vadd.f32 %v507, %v1083
    %v1085 = vmul.f32 %v1078, %v1084
    %v1086 = vmul.f32 %v1082, %v1080
    %v1087 = vsub.f32 %v1085, %v1086
    %v1088 = vmul.f32 %v1087, 0.5
    %v1089 = vsel %vm1076, %v1088, 0.0
    %v1090 = vadd.f32 %v987, %v1089
    %v1091 = vmul.f32 %v540, %v513
    %v1092 = vmul.f32 %v541, %v510
    %v1093 = vsub.f32 %v1091, %v1092
    %v1094 = vsub.f32 %v1093, %v544
    %v1095 = vsub.f32 %v1094, 1e-06
    %v1096 = vsub.f32 %v587, %v586
    %v1097 = vand.u32 2147483647, %v1096
    %vm1098 = vcmp.lt.f32.partialorder %v1097, 1e-12
    %v1099 = vsel %vm1098, 1e-12, %v1096
    %v1100 = vsub.f32 0.0, %v1095
    %v1101 = vrcp.pop %v1099
    %v1102 = vmul.f32 %v1100, %v1101
    %vm1103 = vcmp.gt.f32.partialorder %v1096, 1e-12
    %v1104 = vmax.f32 %v1102, 0.0
    %v1105 = vsel %vm1103, %v1104, 0.0
    %vm1106 = vcmp.lt.f32.partialorder %v1096, -1e-12
    %v1107 = vmin.f32 %v1102, 1.0
    %v1108 = vsel %vm1106, %v1107, 1.0
    %vm1109 = vcmp.gt.f32.partialorder %v1097, 1e-12
    %vm1110 = vcmp.ge.f32.partialorder %v1095, 0.0
    %vm1111 = vmor %vm1109, %vm1110
    %v1112 = vmul.f32 %v545, %v513
    %v1113 = vmul.f32 %v546, %v510
    %v1114 = vsub.f32 %v1112, %v1113
    %v1115 = vsub.f32 %v1114, %v549
    %v1116 = vsub.f32 %v1115, 1e-06
    %v1117 = vsub.f32 %v694, %v693
    %v1118 = vand.u32 2147483647, %v1117
    %vm1119 = vcmp.lt.f32.partialorder %v1118, 1e-12
    %v1120 = vsel %vm1119, 1e-12, %v1117
    %v1121 = vsub.f32 0.0, %v1116
    %v1122 = vrcp.pop %v1120
    %v1123 = vmul.f32 %v1121, %v1122
    %vm1124 = vcmp.gt.f32.partialorder %v1117, 1e-12
    %v1125 = vmax.f32 %v1105, %v1123
    %v1126 = vsel %vm1124, %v1125, %v1105
    %vm1127 = vcmp.lt.f32.partialorder %v1117, -1e-12
    %v1128 = vmin.f32 %v1108, %v1123
    %v1129 = vsel %vm1127, %v1128, %v1108
    %vm1130 = vcmp.gt.f32.partialorder %v1118, 1e-12
    %vm1131 = vcmp.ge.f32.partialorder %v1116, 0.0
    %vm1132 = vmor %vm1130, %vm1131
    %vm1133 = vmand %vm1111, %vm1132
    %v1134 = vmul.f32 %v550, %v513
    %v1135 = vmul.f32 %v551, %v510
    %v1136 = vsub.f32 %v1134, %v1135
    %v1137 = vsub.f32 %v1136, %v554
    %v1138 = vsub.f32 %v1137, 1e-06
    %v1139 = vsub.f32 %v801, %v800
    %v1140 = vand.u32 2147483647, %v1139
    %vm1141 = vcmp.lt.f32.partialorder %v1140, 1e-12
    %v1142 = vsel %vm1141, 1e-12, %v1139
    %v1143 = vsub.f32 0.0, %v1138
    %v1144 = vrcp.pop %v1142
    %v1145 = vmul.f32 %v1143, %v1144
    %vm1146 = vcmp.gt.f32.partialorder %v1139, 1e-12
    %v1147 = vmax.f32 %v1126, %v1145
    %v1148 = vsel %vm1146, %v1147, %v1126
    %vm1149 = vcmp.lt.f32.partialorder %v1139, -1e-12
    %v1150 = vmin.f32 %v1129, %v1145
    %v1151 = vsel %vm1149, %v1150, %v1129
    %vm1152 = vcmp.gt.f32.partialorder %v1140, 1e-12
    %vm1153 = vcmp.ge.f32.partialorder %v1138, 0.0
    %vm1154 = vmor %vm1152, %vm1153
    %vm1155 = vmand %vm1133, %vm1154
    %v1156 = vmul.f32 %v555, %v513
    %v1157 = vmul.f32 %v556, %v510
    %v1158 = vsub.f32 %v1156, %v1157
    %v1159 = vsub.f32 %v1158, %v559
    %v1160 = vsub.f32 %v1159, 1e-06
    %v1161 = vsub.f32 %v908, %v907
    %v1162 = vand.u32 2147483647, %v1161
    %vm1163 = vcmp.lt.f32.partialorder %v1162, 1e-12
    %v1164 = vsel %vm1163, 1e-12, %v1161
    %v1165 = vsub.f32 0.0, %v1160
    %v1166 = vrcp.pop %v1164
    %v1167 = vmul.f32 %v1165, %v1166
    %vm1168 = vcmp.gt.f32.partialorder %v1161, 1e-12
    %v1169 = vmax.f32 %v1148, %v1167
    %v1170 = vsel %vm1168, %v1169, %v1148
    %vm1171 = vcmp.lt.f32.partialorder %v1161, -1e-12
    %v1172 = vmin.f32 %v1151, %v1167
    %v1173 = vsel %vm1171, %v1172, %v1151
    %vm1174 = vcmp.gt.f32.partialorder %v1162, 1e-12
    %vm1175 = vcmp.ge.f32.partialorder %v1160, 0.0
    %vm1176 = vmor %vm1174, %vm1175
    %vm1177 = vmand %vm1155, %vm1176
    %vm1178 = vcmp.gt.f32.partialorder %v1173, %v1170
    %vm1179 = vmand %vm1177, %vm1178
    %v1180 = vmul.f32 %v1170, %v525
    %v1181 = vadd.f32 %v510, %v1180
    %v1182 = vmul.f32 %v1170, %v526
    %v1183 = vadd.f32 %v513, %v1182
    %v1184 = vmul.f32 %v1173, %v525
    %v1185 = vadd.f32 %v510, %v1184
    %v1186 = vmul.f32 %v1173, %v526
    %v1187 = vadd.f32 %v513, %v1186
    %v1188 = vmul.f32 %v1181, %v1187
    %v1189 = vmul.f32 %v1185, %v1183
    %v1190 = vsub.f32 %v1188, %v1189
    %v1191 = vmul.f32 %v1190, 0.5
    %v1192 = vsel %vm1179, %v1191, 0.0
    %v1193 = vadd.f32 %v1090, %v1192
    %v1194 = vmul.f32 %v540, %v517
    %v1195 = vmul.f32 %v541, %v515
    %v1196 = vsub.f32 %v1194, %v1195
    %v1197 = vsub.f32 %v1196, %v544
    %v1198 = vsub.f32 %v1197, 1e-06
    %v1199 = vsub.f32 %v610, %v609
    %v1200 = vand.u32 2147483647, %v1199
    %vm1201 = vcmp.lt.f32.partialorder %v1200, 1e-12
    %v1202 = vsel %vm1201, 1e-12, %v1199
    %v1203 = vsub.f32 0.0, %v1198
    %v1204 = vrcp.pop %v1202
    %v1205 = vmul.f32 %v1203, %v1204
    %vm1206 = vcmp.gt.f32.partialorder %v1199, 1e-12
    %v1207 = vmax.f32 %v1205, 0.0
    %v1208 = vsel %vm1206, %v1207, 0.0
    %vm1209 = vcmp.lt.f32.partialorder %v1199, -1e-12
    %v1210 = vmin.f32 %v1205, 1.0
    %v1211 = vsel %vm1209, %v1210, 1.0
    %vm1212 = vcmp.gt.f32.partialorder %v1200, 1e-12
    %vm1213 = vcmp.ge.f32.partialorder %v1198, 0.0
    %vm1214 = vmor %vm1212, %vm1213
    %v1215 = vmul.f32 %v545, %v517
    %v1216 = vmul.f32 %v546, %v515
    %v1217 = vsub.f32 %v1215, %v1216
    %v1218 = vsub.f32 %v1217, %v549
    %v1219 = vsub.f32 %v1218, 1e-06
    %v1220 = vsub.f32 %v717, %v716
    %v1221 = vand.u32 2147483647, %v1220
    %vm1222 = vcmp.lt.f32.partialorder %v1221, 1e-12
    %v1223 = vsel %vm1222, 1e-12, %v1220
    %v1224 = vsub.f32 0.0, %v1219
    %v1225 = vrcp.pop %v1223
    %v1226 = vmul.f32 %v1224, %v1225
    %vm1227 = vcmp.gt.f32.partialorder %v1220, 1e-12
    %v1228 = vmax.f32 %v1208, %v1226
    %v1229 = vsel %vm1227, %v1228, %v1208
    %vm1230 = vcmp.lt.f32.partialorder %v1220, -1e-12
    %v1231 = vmin.f32 %v1211, %v1226
    %v1232 = vsel %vm1230, %v1231, %v1211
    %vm1233 = vcmp.gt.f32.partialorder %v1221, 1e-12
    %vm1234 = vcmp.ge.f32.partialorder %v1219, 0.0
    %vm1235 = vmor %vm1233, %vm1234
    %vm1236 = vmand %vm1214, %vm1235
    %v1237 = vmul.f32 %v550, %v517
    %v1238 = vmul.f32 %v551, %v515
    %v1239 = vsub.f32 %v1237, %v1238
    %v1240 = vsub.f32 %v1239, %v554
    %v1241 = vsub.f32 %v1240, 1e-06
    %v1242 = vsub.f32 %v824, %v823
    %v1243 = vand.u32 2147483647, %v1242
    %vm1244 = vcmp.lt.f32.partialorder %v1243, 1e-12
    %v1245 = vsel %vm1244, 1e-12, %v1242
    %v1246 = vsub.f32 0.0, %v1241
    %v1247 = vrcp.pop %v1245
    %v1248 = vmul.f32 %v1246, %v1247
    %vm1249 = vcmp.gt.f32.partialorder %v1242, 1e-12
    %v1250 = vmax.f32 %v1229, %v1248
    %v1251 = vsel %vm1249, %v1250, %v1229
    %vm1252 = vcmp.lt.f32.partialorder %v1242, -1e-12
    %v1253 = vmin.f32 %v1232, %v1248
    %v1254 = vsel %vm1252, %v1253, %v1232
    %vm1255 = vcmp.gt.f32.partialorder %v1243, 1e-12
    %vm1256 = vcmp.ge.f32.partialorder %v1241, 0.0
    %vm1257 = vmor %vm1255, %vm1256
    %vm1258 = vmand %vm1236, %vm1257
    %v1259 = vmul.f32 %v555, %v517
    %v1260 = vmul.f32 %v556, %v515
    %v1261 = vsub.f32 %v1259, %v1260
    %v1262 = vsub.f32 %v1261, %v559
    %v1263 = vsub.f32 %v1262, 1e-06
    %v1264 = vsub.f32 %v931, %v930
    %v1265 = vand.u32 2147483647, %v1264
    %vm1266 = vcmp.lt.f32.partialorder %v1265, 1e-12
    %v1267 = vsel %vm1266, 1e-12, %v1264
    %v1268 = vsub.f32 0.0, %v1263
    %v1269 = vrcp.pop %v1267
    %v1270 = vmul.f32 %v1268, %v1269
    %vm1271 = vcmp.gt.f32.partialorder %v1264, 1e-12
    %v1272 = vmax.f32 %v1251, %v1270
    %v1273 = vsel %vm1271, %v1272, %v1251
    %vm1274 = vcmp.lt.f32.partialorder %v1264, -1e-12
    %v1275 = vmin.f32 %v1254, %v1270
    %v1276 = vsel %vm1274, %v1275, %v1254
    %vm1277 = vcmp.gt.f32.partialorder %v1265, 1e-12
    %vm1278 = vcmp.ge.f32.partialorder %v1263, 0.0
    %vm1279 = vmor %vm1277, %vm1278
    %vm1280 = vmand %vm1258, %vm1279
    %vm1281 = vcmp.gt.f32.partialorder %v1276, %v1273
    %vm1282 = vmand %vm1280, %vm1281
    %v1283 = vmul.f32 %v1273, %v530
    %v1284 = vadd.f32 %v515, %v1283
    %v1285 = vmul.f32 %v1273, %v531
    %v1286 = vadd.f32 %v517, %v1285
    %v1287 = vmul.f32 %v1276, %v530
    %v1288 = vadd.f32 %v515, %v1287
    %v1289 = vmul.f32 %v1276, %v531
    %v1290 = vadd.f32 %v517, %v1289
    %v1291 = vmul.f32 %v1284, %v1290
    %v1292 = vmul.f32 %v1288, %v1286
    %v1293 = vsub.f32 %v1291, %v1292
    %v1294 = vmul.f32 %v1293, 0.5
    %v1295 = vsel %vm1282, %v1294, 0.0
    %v1296 = vadd.f32 %v1193, %v1295
    %v1297 = vmul.f32 %v540, %v519
    %v1298 = vmul.f32 %v541, %v518
    %v1299 = vsub.f32 %v1297, %v1298
    %v1300 = vsub.f32 %v1299, %v544
    %v1301 = vsub.f32 %v1300, 1e-06
    %v1302 = vsub.f32 %v633, %v632
    %v1303 = vand.u32 2147483647, %v1302
    %vm1304 = vcmp.lt.f32.partialorder %v1303, 1e-12
    %v1305 = vsel %vm1304, 1e-12, %v1302
    %v1306 = vsub.f32 0.0, %v1301
    %v1307 = vrcp.pop %v1305
    %v1308 = vmul.f32 %v1306, %v1307
    %vm1309 = vcmp.gt.f32.partialorder %v1302, 1e-12
    %v1310 = vmax.f32 %v1308, 0.0
    %v1311 = vsel %vm1309, %v1310, 0.0
    %vm1312 = vcmp.lt.f32.partialorder %v1302, -1e-12
    %v1313 = vmin.f32 %v1308, 1.0
    %v1314 = vsel %vm1312, %v1313, 1.0
    %vm1315 = vcmp.gt.f32.partialorder %v1303, 1e-12
    %vm1316 = vcmp.ge.f32.partialorder %v1301, 0.0
    %vm1317 = vmor %vm1315, %vm1316
    %v1318 = vmul.f32 %v545, %v519
    %v1319 = vmul.f32 %v546, %v518
    %v1320 = vsub.f32 %v1318, %v1319
    %v1321 = vsub.f32 %v1320, %v549
    %v1322 = vsub.f32 %v1321, 1e-06
    %v1323 = vsub.f32 %v740, %v739
    %v1324 = vand.u32 2147483647, %v1323
    %vm1325 = vcmp.lt.f32.partialorder %v1324, 1e-12
    %v1326 = vsel %vm1325, 1e-12, %v1323
    %v1327 = vsub.f32 0.0, %v1322
    %v1328 = vrcp.pop %v1326
    %v1329 = vmul.f32 %v1327, %v1328
    %vm1330 = vcmp.gt.f32.partialorder %v1323, 1e-12
    %v1331 = vmax.f32 %v1311, %v1329
    %v1332 = vsel %vm1330, %v1331, %v1311
    %vm1333 = vcmp.lt.f32.partialorder %v1323, -1e-12
    %v1334 = vmin.f32 %v1314, %v1329
    %v1335 = vsel %vm1333, %v1334, %v1314
    %vm1336 = vcmp.gt.f32.partialorder %v1324, 1e-12
    %vm1337 = vcmp.ge.f32.partialorder %v1322, 0.0
    %vm1338 = vmor %vm1336, %vm1337
    %vm1339 = vmand %vm1317, %vm1338
    %v1340 = vmul.f32 %v550, %v519
    %v1341 = vmul.f32 %v551, %v518
    %v1342 = vsub.f32 %v1340, %v1341
    %v1343 = vsub.f32 %v1342, %v554
    %v1344 = vsub.f32 %v1343, 1e-06
    %v1345 = vsub.f32 %v847, %v846
    %v1346 = vand.u32 2147483647, %v1345
    %vm1347 = vcmp.lt.f32.partialorder %v1346, 1e-12
    %v1348 = vsel %vm1347, 1e-12, %v1345
    %v1349 = vsub.f32 0.0, %v1344
    %v1350 = vrcp.pop %v1348
    %v1351 = vmul.f32 %v1349, %v1350
    %vm1352 = vcmp.gt.f32.partialorder %v1345, 1e-12
    %v1353 = vmax.f32 %v1332, %v1351
    %v1354 = vsel %vm1352, %v1353, %v1332
    %vm1355 = vcmp.lt.f32.partialorder %v1345, -1e-12
    %v1356 = vmin.f32 %v1335, %v1351
    %v1357 = vsel %vm1355, %v1356, %v1335
    %vm1358 = vcmp.gt.f32.partialorder %v1346, 1e-12
    %vm1359 = vcmp.ge.f32.partialorder %v1344, 0.0
    %vm1360 = vmor %vm1358, %vm1359
    %vm1361 = vmand %vm1339, %vm1360
    %v1362 = vmul.f32 %v555, %v519
    %v1363 = vmul.f32 %v556, %v518
    %v1364 = vsub.f32 %v1362, %v1363
    %v1365 = vsub.f32 %v1364, %v559
    %v1366 = vsub.f32 %v1365, 1e-06
    %v1367 = vsub.f32 %v954, %v953
    %v1368 = vand.u32 2147483647, %v1367
    %vm1369 = vcmp.lt.f32.partialorder %v1368, 1e-12
    %v1370 = vsel %vm1369, 1e-12, %v1367
    %v1371 = vsub.f32 0.0, %v1366
    %v1372 = vrcp.pop %v1370
    %v1373 = vmul.f32 %v1371, %v1372
    %vm1374 = vcmp.gt.f32.partialorder %v1367, 1e-12
    %v1375 = vmax.f32 %v1354, %v1373
    %v1376 = vsel %vm1374, %v1375, %v1354
    %vm1377 = vcmp.lt.f32.partialorder %v1367, -1e-12
    %v1378 = vmin.f32 %v1357, %v1373
    %v1379 = vsel %vm1377, %v1378, %v1357
    %vm1380 = vcmp.gt.f32.partialorder %v1368, 1e-12
    %vm1381 = vcmp.ge.f32.partialorder %v1366, 0.0
    %vm1382 = vmor %vm1380, %vm1381
    %vm1383 = vmand %vm1361, %vm1382
    %vm1384 = vcmp.gt.f32.partialorder %v1379, %v1376
    %vm1385 = vmand %vm1383, %vm1384
    %v1386 = vmul.f32 %v1376, %v535
    %v1387 = vadd.f32 %v518, %v1386
    %v1388 = vmul.f32 %v1376, %v536
    %v1389 = vadd.f32 %v519, %v1388
    %v1390 = vmul.f32 %v1379, %v535
    %v1391 = vadd.f32 %v518, %v1390
    %v1392 = vmul.f32 %v1379, %v536
    %v1393 = vadd.f32 %v519, %v1392
    %v1394 = vmul.f32 %v1387, %v1393
    %v1395 = vmul.f32 %v1391, %v1389
    %v1396 = vsub.f32 %v1394, %v1395
    %v1397 = vmul.f32 %v1396, 0.5
    %v1398 = vsel %vm1385, %v1397, 0.0
    %v1399 = vadd.f32 %v1296, %v1398
    %v1400 = vmax.f32 %v1399, 0.0
    %v1401 = vmul.f32 %v44, %v46
    %v1402 = vmul.f32 %v53, %v55
    %v1403 = vadd.f32 %v1401, %v1402
    %v1404 = vsub.f32 %v1403, %v1400
    %v1405 = vmax.f32 %v1404, 1e-12
    %v1406 = vrcp.pop %v1405
    %v1407 = vmul.f32 %v1400, %v1406
    %v1408 = vmax.f32 %v1407, 1e-06
    %v1409 = vlog2.pop %v1408
    %v1410 = vmul.f32 %v1409, 0.6931472
    %v1411 = vsub.f32 0.0, %v1410
    %1412 = vst [vmem:[#allocation7] sm:$0x1] %v1411
    // Predicated region
    $region18: #{tpu_custom_call.1} parent=1 // pred_check
      _
    $region19: #{tpu_custom_call.1} parent=1 // pred_check_branch
      %1414 = sbr.rel (0) target = $region21
    $region20: #{tpu_custom_call.1} parent=1 // pred_region
      %s1416 = ssub.s32 16, 16
      %1417 = vsyncadd [#allocation4], %s1416
      %s1419 = sshll.u32 [#allocation7], 4
      %s1420 = int_to_ptr.vmem [resolvable:$true] %s1419
      %1422 = dma.vmem_to_hbm [thread:$0]  %s1420, 16, %s2, [#allocation4]
    $region21: #{tpu_custom_call.1} parent=1 // pred_fallthru
      _
    // Predicated region
    $region22: #{tpu_custom_call.1} parent=1 // pred_check
      _
    $region23: #{tpu_custom_call.1} parent=1 // pred_check_branch
      %1424 = sbr.rel (0) target = $region25
    $region24: #{tpu_custom_call.1} parent=1 // pred_region
      %1425 = dma.done [#allocation4], 16
    $region25: #{tpu_custom_call.1} parent=1 // pred_fallthru
      _
    %1426 = vsyncpa [#allocation3], 1
    %1427 = vsyncpa [#allocation6], 1
    %1428 = vsyncpa [#allocation4], 1

</llo_original>
